<compile_context>
chip_gen: v7x
topology: tpu7x:2x2x1
jax: 0.10.0
libtpu: 0.0.40
codegen_flags: <defaults>
</compile_context>

<pallas_src>
import functools
import numpy as np
import jax
import jax.numpy as jnp
from jax.experimental import pallas as pl
from jax.experimental.pallas import tpu as pltpu

K = 4
C_IN = 4
C_PAD = 8                      # channel dim padded 4 -> 8 (zero weight rows)
N_FEAT = 4 * K
DIMS_CONV = [(4, 64), (64, 128), (128, 512), (512, 1024)]
DIMS_FC = [(1024, 512), (512, 256), (256, N_FEAT)]

# Per-generation tuning: points per grid step, VMEM limit, bf16 elementwise.
_TUNE = {
    5: dict(points=4096, vmem_mib=80, bf16_act=False),   # v5e: MXU-bound, no bf16 VPU
    6: dict(points=2048, vmem_mib=64, bf16_act=True),     # v6e
    7: dict(points=2048, vmem_mib=48, bf16_act=True),     # v7x: 64 MiB physical VMEM
}


def _round_up(a, m):
    return (a + m - 1) // m * m


def _chip_generation():
    """Classify the TPU: 5 = v5e-like, 6 = v6e (default), 7 = v7x."""
    try:
        kind = jax.devices()[0].device_kind.lower()
    except Exception:
        return 6
    if "v7" in kind or "7x" in kind:
        return 7
    if "v5e" in kind or "v5 lite" in kind or "v5litepod" in kind:
        return 5
    return 6


def _conv_max_kernel(x_ref, w1, b1, w2, b2, w3, b3, w4, gmax_ref, *, bf16_act):
    """Point-wise conv stack (BN folded) + running max over point chunks.

    x_ref:    (Bt, 8, Nt) f32  -- channels on sublanes, points on lanes.
    gmax_ref: (1, Bt, 1024) f32 output block, resident across the point axis;
              holds the max over points of the RAW layer-4 matmul (bias + ReLU
              are hoisted past the max into the FC kernel -- exact).
    """
    j = pl.program_id(1)
    act_dt = jnp.bfloat16 if bf16_act else jnp.float32

    @pl.when(j == 0)
    def _init():
        gmax_ref[...] = jnp.full(gmax_ref.shape, -jnp.inf, dtype=jnp.float32)

    x = x_ref[...]                                    # (Bt, 8, Nt)
    bt, _, nt = x.shape

    # NCHW -> channels-last folded into the kernel: per-sample aligned (8, Nt)
    # -> (Nt, 8) transposes ride the otherwise idle XLU slot.
    cols = [x[b].T for b in range(bt)]                # each (Nt, 8)
    xf = cols[0] if bt == 1 else jnp.concatenate(cols, axis=0)  # (Bt*Nt, 8)

    def mm_bf16(a, w_ref, b_ref):
        # bf16 MXU operands, f32 accumulate; bias add in f32.
        return jnp.dot(a.astype(jnp.bfloat16), w_ref[...],
                       preferred_element_type=jnp.float32) + b_ref[...]

    def relu(v):
        # On v6e/v7x the ReLU runs on packed bf16 (half the vreg ops and no
        # separate cast); on v5e (no bf16 VPU) it stays in f32.
        return jnp.maximum(v.astype(act_dt), 0)

    # Layer 1 stays f32 (K=8 contraction is MXU-trivial either way).
    h = relu(jnp.dot(xf, w1[...], preferred_element_type=jnp.float32) + b1[...])
    h = relu(mm_bf16(h, w2, b2))                      # (Bt*Nt, 128)
    h = relu(mm_bf16(h, w3, b3))                      # (Bt*Nt, 512)
    # Layer 4: raw matmul only -- bias + ReLU are applied after the max.
    h4 = jnp.dot(h.astype(jnp.bfloat16), w4[...],
                 preferred_element_type=jnp.float32)  # (Bt*Nt, 1024) f32

    cmax = jnp.max(h4.reshape(bt, nt, h4.shape[-1]), axis=1)    # (Bt, 1024)
    gmax_ref[...] = jnp.maximum(gmax_ref[...], cmax[None])


def _fc_tail_kernel(g_ref, b4, wf1, bf1, wf2, bf2, wf3, bf3, iden, alpha, o_ref):
    """fc1 -> PReLU -> fc2 -> PReLU -> fc3 -> + eye(k), once over all B rows."""
    # Hoisted layer-4 epilogue: bias + ReLU commute exactly with the point max.
    g = jnp.maximum(g_ref[...] + b4[...], 0.0)        # (B, 1024)
    a = alpha[...]                                    # (1, 1) PReLU slope

    def prelu(v):
        return jnp.where(v > 0, v, a * v)

    def mm(v, w_ref, b_ref):
        return jnp.dot(v.astype(jnp.bfloat16), w_ref[...],
                       preferred_element_type=jnp.float32) + b_ref[...]

    # TODO(synk): train-mode dropout (p=0.1) not modeled; inference identity.
    z = prelu(mm(g, wf1, bf1))                        # (B, 512)
    z = prelu(mm(z, wf2, bf2))                        # (B, 256)
    o_ref[...] = mm(z, wf3, bf3) + iden[...]          # (B, 16)


def input_transform_forward(x_nchw, params):
    (w1, b1, w2, b2, w3, b3, w4, b4,
     wf1, bf1, wf2, bf2, wf3, bf3, iden, alpha) = params
    B, C, N, W = x_nchw.shape
    assert C == C_IN and W == 1

    gen = _chip_generation()
    cfg = _TUNE[gen]
    pts, bf16_act = cfg["points"], cfg["bf16_act"]
    vmem_bytes = cfg["vmem_mib"] * 1024 * 1024

    if gen == 7:
        # v7x: keep >= 2 batch blocks so the "parallel" axis feeds both
        # TensorCores.  TODO(synk): if B == 1 the second core idles (would
        # need a cross-core max combine over the point axis).
        Bt = min(8, max(1, B // 2))
    else:
        Bt = min(B, 8)
    # Nt: lane-dense (multiple of 128), no larger than the padded point count.
    Nt = max(128, min(_round_up(N, 128), (pts // Bt) // 128 * 128))
    B_pad = _round_up(B, Bt)
    N_pad = _round_up(N, Nt)
    nB = B_pad // Bt

    # Keep NCHW channel/point order (no wrapper transpose): (B, 4, N) with
    # points on lanes.  Pad channels 4->8 (matched by zero rows in w1) and pad
    # batch / points with edge values (duplicated points never change the max;
    # padded batch rows are sliced off).
    x = x_nchw[:, :, :, 0]
    x = jnp.pad(x, ((0, B_pad - B), (0, C_PAD - C_IN), (0, N_pad - N)),
                mode="edge")
    w1p = jnp.pad(w1.astype(jnp.float32), ((0, C_PAD - C_IN), (0, 0)))

    conv_params = [w1p, b1, w2, b2, w3, b3, w4]
    in_specs = [pl.BlockSpec((Bt, C_PAD, Nt), lambda i, j: (i, 0, j))]
    # Grid-invariant weights/biases: full block, single-buffered (all 2-D).
    in_specs += [pl.BlockSpec(p.shape, lambda i, j: (0, 0),
                              pipeline_mode=pl.Buffered(1))
                 for p in conv_params]
    # 3-D gmax output so its last two block dims always equal the full array
    # dims (valid for any Bt, incl. Bt=1) and the store is lane-dense (1024).
    out_specs = pl.BlockSpec((1, Bt, 1024), lambda i, j: (i, 0, 0))

    gmax = pl.pallas_call(
        functools.partial(_conv_max_kernel, bf16_act=bf16_act),
        out_shape=jax.ShapeDtypeStruct((nB, Bt, 1024), jnp.float32),
        grid_spec=pltpu.PrefetchScalarGridSpec(
            num_scalar_prefetch=0,
            grid=(nB, N_pad // Nt),
            in_specs=in_specs,
            out_specs=out_specs,
        ),
        compiler_params=pltpu.CompilerParams(
            # Batch blocks shard across TensorCores; the point-chunk axis is a
            # running-max reduction and must stay "arbitrary".
            dimension_semantics=("parallel", "arbitrary"),
            vmem_limit_bytes=vmem_bytes,
        ),
    )(x, *conv_params)

    g = gmax.reshape(B_pad, 1024)[:B]                 # (B, 1024) raw layer-4 max

    out = pl.pallas_call(
        _fc_tail_kernel,
        out_shape=jax.ShapeDtypeStruct((B, N_FEAT), jnp.float32),
    )(g, b4, wf1, bf1, wf2, bf2, wf3, bf3, iden, alpha)
    return out.reshape(B, 4, K)


def make_params(key):
    keys = jax.random.split(key, 32)
    ki = iter(keys)

    def xavier(k, shape):
        fan_in, fan_out = shape
        lim = float(np.sqrt(6.0 / (fan_in + fan_out)))
        return jax.random.uniform(k, shape, jnp.float32, -lim, lim)

    def fold_bn(Wm, b, gamma, beta, mean, var, eps=1e-5):
        scale = gamma / jnp.sqrt(var + eps)
        return Wm * scale[None, :], ((b - mean) * scale + beta)[None, :]

    flat = []
    # Conv(1x1, xavier) + BatchNorm (inference) folded into one affine map.
    for li, (cin, cout) in enumerate(DIMS_CONV):
        Wm = xavier(next(ki), (cin, cout))
        b = jax.random.uniform(next(ki), (cout,), jnp.float32, -0.05, 0.05)
        gamma = jax.random.uniform(next(ki), (cout,), jnp.float32, 0.8, 1.2)
        beta = jax.random.uniform(next(ki), (cout,), jnp.float32, -0.1, 0.1)
        mean = jax.random.uniform(next(ki), (cout,), jnp.float32, -0.1, 0.1)
        var = jax.random.uniform(next(ki), (cout,), jnp.float32, 0.5, 1.5)
        Wf, bf = fold_bn(Wm, b, gamma, beta, mean, var)
        wdtype = jnp.float32 if li == 0 else jnp.bfloat16   # layer 1 stays f32
        flat += [Wf.astype(wdtype), bf]
    # Linear layers (PyTorch default uniform(-1/sqrt(fan_in), 1/sqrt(fan_in)))
    for (din, dout) in DIMS_FC:
        lim = float(1.0 / np.sqrt(din))
        Wm = jax.random.uniform(next(ki), (din, dout), jnp.float32, -lim, lim)
        b = jax.random.uniform(next(ki), (1, dout), jnp.float32, -lim, lim)
        flat += [Wm.astype(jnp.bfloat16), b]
    iden = jnp.eye(K, dtype=jnp.float32).reshape(1, N_FEAT)
    alpha = jnp.full((1, 1), 0.1, dtype=jnp.float32)        # PReLU(init=0.1)
    flat += [iden, alpha]
    return flat


def reference_forward(x_nchw, flat):
    # Pure-JAX reference mirroring the kernel's precision choices (bf16 MXU
    # operands, f32 accumulate / elementwise).
    (w1, b1, w2, b2, w3, b3, w4, b4,
     wf1, bf1, wf2, bf2, wf3, bf3, iden, alpha) = flat
    x = jnp.transpose(x_nchw[:, :, :, 0], (0, 2, 1))        # (B, N, 4)

    def mm(a, w, b):
        return jnp.dot(a.astype(w.dtype), w,
                       preferred_element_type=jnp.float32) + b

    h = jnp.maximum(mm(x, w1, b1), 0.0)
    h = jnp.maximum(mm(h, w2, b2), 0.0)
    h = jnp.maximum(mm(h, w3, b3), 0.0)
    h = jnp.maximum(mm(h, w4, b4), 0.0)
    g = jnp.max(h, axis=1)                                   # (B, 1024)
    a = alpha[0, 0]
    prelu = lambda v: jnp.where(v > 0, v, a * v)
    z = prelu(mm(g, wf1, bf1))
    z = prelu(mm(z, wf2, bf2))
    z = mm(z, wf3, bf3) + iden
    return z.reshape(-1, 4, K)


if __name__ == "__main__":
    key = jax.random.PRNGKey(0)
    kx, kp = jax.random.split(key)
    B, N = 2, 128
    x = jax.random.normal(kx, (B, C_IN, N, 1), dtype=jnp.float32)
    params = make_params(kp)

    out = input_transform_forward(x, params)
    out = jax.block_until_ready(out)
    assert out.shape == (B, 4, K)

    ref = reference_forward(x, params)
    np.testing.assert_allclose(np.asarray(out), np.asarray(ref),
                               rtol=1e-2, atol=1e-2)
    print("KERNEL_OK")
</pallas_src>

<mosaic_0001>
module attributes {stable_mosaic.version = 11 : i64} {
  func.func @_conv_max_kernel(%arg0: i32, %arg1: i32, %arg2: memref<2x8x128xf32, #tpu.memory_space<vmem>>, %arg3: memref<8x64xf32, #tpu.memory_space<vmem>>, %arg4: memref<1x64xf32, #tpu.memory_space<vmem>>, %arg5: memref<64x128xbf16, #tpu.memory_space<vmem>>, %arg6: memref<1x128xf32, #tpu.memory_space<vmem>>, %arg7: memref<128x512xbf16, #tpu.memory_space<vmem>>, %arg8: memref<1x512xf32, #tpu.memory_space<vmem>>, %arg9: memref<512x1024xbf16, #tpu.memory_space<vmem>>, %arg10: memref<1x2x1024xf32, #tpu.memory_space<vmem>>) attributes {dimension_semantics = [#tpu.dimension_semantics<parallel>, #tpu.dimension_semantics<arbitrary>], iteration_bounds = array<i64: 1, 1>, scalar_prefetch = 0 : i64, scratch_operands = 0 : i64, tpu.core_type = #tpu.core_type<tc>, window_params = [{transform_indices = @transform_0, window_bounds = array<i64: 2, 8, 128>}, {pipeline_mode = #tpu.pipeline_mode<synchronous>, transform_indices = @transform_1, window_bounds = array<i64: 8, 64>}, {pipeline_mode = #tpu.pipeline_mode<synchronous>, transform_indices = @transform_2, window_bounds = array<i64: 1, 64>}, {pipeline_mode = #tpu.pipeline_mode<synchronous>, transform_indices = @transform_3, window_bounds = array<i64: 64, 128>}, {pipeline_mode = #tpu.pipeline_mode<synchronous>, transform_indices = @transform_4, window_bounds = array<i64: 1, 128>}, {pipeline_mode = #tpu.pipeline_mode<synchronous>, transform_indices = @transform_5, window_bounds = array<i64: 128, 512>}, {pipeline_mode = #tpu.pipeline_mode<synchronous>, transform_indices = @transform_6, window_bounds = array<i64: 1, 512>}, {pipeline_mode = #tpu.pipeline_mode<synchronous>, transform_indices = @transform_7, window_bounds = array<i64: 512, 1024>}, {transform_indices = @transform_8, window_bounds = array<i64: 1, 2, 1024>}]} {
    %c0_i32 = arith.constant 0 : i32
    %0 = arith.cmpi eq, %arg1, %c0_i32 : i32
    %1 = arith.extui %0 : i1 to i32
    %c0_i32_0 = arith.constant 0 : i32
    %2 = arith.cmpi ne, %1, %c0_i32_0 : i32
    scf.if %2 {
      %cst_30 = arith.constant 0xFF800000 : f32
      %43 = vector.broadcast %cst_30 : f32 to vector<1x2x1024xf32>
      %c0_31 = arith.constant 0 : index
      %c0_32 = arith.constant 0 : index
      %c0_33 = arith.constant 0 : index
      %44 = vector.load %arg10[%c0_31, %c0_32, %c0_33] : memref<1x2x1024xf32, #tpu.memory_space<vmem>>, vector<1x2x1024xf32>
      tpu.vector_store %arg10[%c0_31, %c0_32, %c0_33], %43 {strides = array<i32>} : memref<1x2x1024xf32, #tpu.memory_space<vmem>>, vector<1x2x1024xf32>,
    } else {
    }
    %c0 = arith.constant 0 : index
    %c0_1 = arith.constant 0 : index
    %c0_2 = arith.constant 0 : index
    %3 = vector.load %arg2[%c0, %c0_1, %c0_2] : memref<2x8x128xf32, #tpu.memory_space<vmem>>, vector<2x8x128xf32>
    %4 = vector.extract_strided_slice %3 {offsets = [0, 0, 0], sizes = [1, 8, 128], strides = [1, 1, 1]} : vector<2x8x128xf32> to vector<1x8x128xf32>
    %5 = vector.shape_cast %4 : vector<1x8x128xf32> to vector<8x128xf32>
    %6 = tpu.transpose %5, [1, 0] : vector<8x128xf32> -> vector<128x8xf32>
    %7 = vector.extract_strided_slice %3 {offsets = [1, 0, 0], sizes = [1, 8, 128], strides = [1, 1, 1]} : vector<2x8x128xf32> to vector<1x8x128xf32>
    %8 = vector.shape_cast %7 : vector<1x8x128xf32> to vector<8x128xf32>
    %9 = tpu.transpose %8, [1, 0] : vector<8x128xf32> -> vector<128x8xf32>
    %10 = tpu.concatenate %6, %9 in 0 : vector<128x8xf32>, vector<128x8xf32> -> vector<256x8xf32>
    %c0_3 = arith.constant 0 : index
    %c0_4 = arith.constant 0 : index
    %11 = vector.load %arg3[%c0_3, %c0_4] : memref<8x64xf32, #tpu.memory_space<vmem>>, vector<8x64xf32>
    %cst = arith.constant dense<0.000000e+00> : vector<256x64xf32>
    %12 = tpu.matmul %10, %11, %cst {dimension_numbers = #tpu.dot_dimension_numbers<[1], [0], [0], [1], [0, 0, 1, 1], [], []>} : vector<256x8xf32>, vector<8x64xf32>, vector<256x64xf32> -> vector<256x64xf32>
    %c0_5 = arith.constant 0 : index
    %c0_6 = arith.constant 0 : index
    %13 = vector.load %arg4[%c0_5, %c0_6] : memref<1x64xf32, #tpu.memory_space<vmem>>, vector<1x64xf32>
    %14 = vector.broadcast %13 : vector<1x64xf32> to vector<256x64xf32>
    %15 = arith.addf %12, %14 : vector<256x64xf32>
    %16 = arith.truncf %15 : vector<256x64xf32> to vector<256x64xbf16>
    %cst_7 = arith.constant 0.000000e+00 : bf16
    %17 = vector.broadcast %cst_7 : bf16 to vector<256x64xbf16>
    %18 = arith.maximumf %16, %17 : vector<256x64xbf16>
    %c0_8 = arith.constant 0 : index
    %c0_9 = arith.constant 0 : index
    %19 = vector.load %arg5[%c0_8, %c0_9] : memref<64x128xbf16, #tpu.memory_space<vmem>>, vector<64x128xbf16>
    %cst_10 = arith.constant dense<0.000000e+00> : vector<256x128xf32>
    %20 = tpu.matmul %18, %19, %cst_10 {dimension_numbers = #tpu.dot_dimension_numbers<[1], [0], [0], [1], [0, 0, 1, 1], [], []>} : vector<256x64xbf16>, vector<64x128xbf16>, vector<256x128xf32> -> vector<256x128xf32>
    %c0_11 = arith.constant 0 : index
    %c0_12 = arith.constant 0 : index
    %21 = vector.load %arg6[%c0_11, %c0_12] : memref<1x128xf32, #tpu.memory_space<vmem>>, vector<1x128xf32>
    %22 = vector.broadcast %21 : vector<1x128xf32> to vector<256x128xf32>
    %23 = arith.addf %20, %22 : vector<256x128xf32>
    %24 = arith.truncf %23 : vector<256x128xf32> to vector<256x128xbf16>
    %cst_13 = arith.constant 0.000000e+00 : bf16
    %25 = vector.broadcast %cst_13 : bf16 to vector<256x128xbf16>
    %26 = arith.maximumf %24, %25 : vector<256x128xbf16>
    %c0_14 = arith.constant 0 : index
    %c0_15 = arith.constant 0 : index
    %27 = vector.load %arg7[%c0_14, %c0_15] : memref<128x512xbf16, #tpu.memory_space<vmem>>, vector<128x512xbf16>
    %cst_16 = arith.constant dense<0.000000e+00> : vector<256x512xf32>
    %28 = tpu.matmul %26, %27, %cst_16 {dimension_numbers = #tpu.dot_dimension_numbers<[1], [0], [0], [1], [0, 0, 1, 1], [], []>} : vector<256x128xbf16>, vector<128x512xbf16>, vector<256x512xf32> -> vector<256x512xf32>
    %c0_17 = arith.constant 0 : index
    %c0_18 = arith.constant 0 : index
    %29 = vector.load %arg8[%c0_17, %c0_18] : memref<1x512xf32, #tpu.memory_space<vmem>>, vector<1x512xf32>
    %30 = vector.broadcast %29 : vector<1x512xf32> to vector<256x512xf32>
    %31 = arith.addf %28, %30 : vector<256x512xf32>
    %32 = arith.truncf %31 : vector<256x512xf32> to vector<256x512xbf16>
    %cst_19 = arith.constant 0.000000e+00 : bf16
    %33 = vector.broadcast %cst_19 : bf16 to vector<256x512xbf16>
    %34 = arith.maximumf %32, %33 : vector<256x512xbf16>
    %c0_20 = arith.constant 0 : index
    %c0_21 = arith.constant 0 : index
    %35 = vector.load %arg9[%c0_20, %c0_21] : memref<512x1024xbf16, #tpu.memory_space<vmem>>, vector<512x1024xbf16>
    %cst_22 = arith.constant dense<0.000000e+00> : vector<256x1024xf32>
    %36 = tpu.matmul %34, %35, %cst_22 {dimension_numbers = #tpu.dot_dimension_numbers<[1], [0], [0], [1], [0, 0, 1, 1], [], []>} : vector<256x512xbf16>, vector<512x1024xbf16>, vector<256x1024xf32> -> vector<256x1024xf32>
    %37 = vector.shape_cast %36 : vector<256x1024xf32> to vector<2x128x1024xf32>
    %cst_23 = arith.constant dense<0xFF800000> : vector<2x1024xf32>
    %38 = vector.multi_reduction <maximumf>, %37, %cst_23 [1] : vector<2x128x1024xf32> to vector<2x1024xf32>
    %c0_24 = arith.constant 0 : index
    %c0_25 = arith.constant 0 : index
    %c0_26 = arith.constant 0 : index
    %39 = vector.load %arg10[%c0_24, %c0_25, %c0_26] : memref<1x2x1024xf32, #tpu.memory_space<vmem>>, vector<1x2x1024xf32>
    %40 = vector.shape_cast %38 : vector<2x1024xf32> to vector<1x2x1024xf32>
    %41 = arith.maximumf %39, %40 : vector<1x2x1024xf32>
    %c0_27 = arith.constant 0 : index
    %c0_28 = arith.constant 0 : index
    %c0_29 = arith.constant 0 : index
    %42 = vector.load %arg10[%c0_27, %c0_28, %c0_29] : memref<1x2x1024xf32, #tpu.memory_space<vmem>>, vector<1x2x1024xf32>
    tpu.vector_store %arg10[%c0_27, %c0_28, %c0_29], %41 {strides = array<i32>} : memref<1x2x1024xf32, #tpu.memory_space<vmem>>, vector<1x2x1024xf32>,
    return
  }
  func.func @transform_0(%arg0: i32, %arg1: i32) -> (i32, i32, i32) {
    %c0_i32 = arith.constant 0 : i32
    %c0_i32_0 = arith.constant 0 : i32
    return %arg0, %c0_i32, %arg1 : i32, i32, i32
  }
  func.func @transform_1(%arg0: i32, %arg1: i32) -> (i32, i32) {
    %c0_i32 = arith.constant 0 : i32
    %c0_i32_0 = arith.constant 0 : i32
    %c0_i32_1 = arith.constant 0 : i32
    return %c0_i32, %c0_i32_0 : i32, i32
  }
  func.func @transform_2(%arg0: i32, %arg1: i32) -> (i32, i32) {
    %c0_i32 = arith.constant 0 : i32
    %c0_i32_0 = arith.constant 0 : i32
    %c0_i32_1 = arith.constant 0 : i32
    return %c0_i32, %c0_i32_0 : i32, i32
  }
  func.func @transform_3(%arg0: i32, %arg1: i32) -> (i32, i32) {
    %c0_i32 = arith.constant 0 : i32
    %c0_i32_0 = arith.constant 0 : i32
    %c0_i32_1 = arith.constant 0 : i32
    return %c0_i32, %c0_i32_0 : i32, i32
  }
  func.func @transform_4(%arg0: i32, %arg1: i32) -> (i32, i32) {
    %c0_i32 = arith.constant 0 : i32
    %c0_i32_0 = arith.constant 0 : i32
    %c0_i32_1 = arith.constant 0 : i32
    return %c0_i32, %c0_i32_0 : i32, i32
  }
  func.func @transform_5(%arg0: i32, %arg1: i32) -> (i32, i32) {
    %c0_i32 = arith.constant 0 : i32
    %c0_i32_0 = arith.constant 0 : i32
    %c0_i32_1 = arith.constant 0 : i32
    return %c0_i32, %c0_i32_0 : i32, i32
  }
  func.func @transform_6(%arg0: i32, %arg1: i32) -> (i32, i32) {
    %c0_i32 = arith.constant 0 : i32
    %c0_i32_0 = arith.constant 0 : i32
    %c0_i32_1 = arith.constant 0 : i32
    return %c0_i32, %c0_i32_0 : i32, i32
  }
  func.func @transform_7(%arg0: i32, %arg1: i32) -> (i32, i32) {
    %c0_i32 = arith.constant 0 : i32
    %c0_i32_0 = arith.constant 0 : i32
    %c0_i32_1 = arith.constant 0 : i32
    return %c0_i32, %c0_i32_0 : i32, i32
  }
  func.func @transform_8(%arg0: i32, %arg1: i32) -> (i32, i32, i32) {
    %c0_i32 = arith.constant 0 : i32
    %c0_i32_0 = arith.constant 0 : i32
    %c0_i32_1 = arith.constant 0 : i32
    return %arg0, %c0_i32, %c0_i32_0 : i32, i32, i32
  }
}

</mosaic_0001>

<llo_original>
// kernel: tpu_custom_call.1
$region0: #{tpu_custom_call.1}
  #allocation0 [shape = 'u32[]', space=smem, size = 0x4, offset = 0x4, fixed_abs, tag = 'smem constant byte address 0x4 - core index']
  #allocation1 [shape = 'u32[144,128]{1,0:T(1,128)}', space=vmem, size = 0x12000, scoped, tag = 'internal scratch']
  %s0 = inlined_call_operand.hbm [shape: f32[2,8,128], index: 0, kind: input, shape index: {}]
  %s1 = inlined_call_operand.hbm [shape: f32[8,64], index: 1, kind: input, shape index: {}]
  %s2 = inlined_call_operand.hbm [shape: f32[1,64], index: 2, kind: input, shape index: {}]
  %s3 = inlined_call_operand.hbm [shape: bf16[64,128], index: 3, kind: input, shape index: {}]
  %s4 = inlined_call_operand.hbm [shape: f32[1,128], index: 4, kind: input, shape index: {}]
  %s5 = inlined_call_operand.hbm [shape: bf16[128,512], index: 5, kind: input, shape index: {}]
  %s6 = inlined_call_operand.hbm [shape: f32[1,512], index: 6, kind: input, shape index: {}]
  %s7 = inlined_call_operand.hbm [shape: bf16[512,1024], index: 7, kind: input, shape index: {}]
  %s8 = inlined_call_operand.hbm [shape: f32[1,2,1024], index: 8, kind: output, shape index: {}]
  %s9 = sld [smem:[#allocation0]]
  $region78: #{tpu_custom_call.1} parent=0
    _
  %s11 = ssub.s32 1, %s9
  %s12 = scalar_select 0, %s11, %s9
  $region1: #{tpu_custom_call.1} parent=0
    #allocation2 [shape = 'u8[8192]{0}', space=vmem, size = 0x2000, scoped, tag = 'input window, operand 0, single buffered']
    #allocation3 [shape = 's32[1]{0}', space=sflag, size = 0x4, scoped, tag = 'scoped memory for tpu_custom_call.1']
    #allocation4 [shape = 's32[1]{0}', space=sflag, size = 0x4, scoped, tag = 'scoped memory for tpu_custom_call.1']
    #allocation5 [shape = 'u8[4096]{0}', space=vmem, size = 0x1000, scoped, tag = 'input window, operand 1, single buffered']
    #allocation6 [shape = 's32[1]{0}', space=sflag, size = 0x4, scoped, tag = 'scoped memory for tpu_custom_call.1']
    #allocation7 [shape = 'u8[512]{0}', space=vmem, size = 0x400, scoped, tag = 'input window, operand 2, single buffered']
    #allocation8 [shape = 'u8[16384]{0}', space=vmem, size = 0x4000, scoped, tag = 'input window, operand 3, single buffered']
    #allocation9 [shape = 's32[1]{0}', space=sflag, size = 0x4, scoped, tag = 'scoped memory for tpu_custom_call.1']
    #allocation10 [shape = 'u8[512]{0}', space=vmem, size = 0x400, scoped, tag = 'input window, operand 4, single buffered']
    #allocation11 [shape = 'u8[131072]{0}', space=vmem, size = 0x20000, scoped, tag = 'input window, operand 5, single buffered']
    #allocation12 [shape = 's32[1]{0}', space=sflag, size = 0x4, scoped, tag = 'scoped memory for tpu_custom_call.1']
    #allocation13 [shape = 'u8[2048]{0}', space=vmem, size = 0x800, scoped, tag = 'input window, operand 6, single buffered']
    #allocation14 [shape = 'u8[1048576]{0}', space=vmem, size = 0x100000, scoped, tag = 'input window, operand 7, single buffered']
    #allocation15 [shape = 's32[1]{0}', space=sflag, size = 0x4, scoped, tag = 'scoped memory for tpu_custom_call.1']
    #allocation16 [shape = 'u8[8192]{0}', space=vmem, size = 0x2000, scoped, tag = 'output window, operand 0, single buffered']
    %13 = vsyncpa [#allocation3], 0
    %14 = vsyncpa [#allocation6], 0
    %15 = vsyncpa [#allocation9], 0
    %16 = vsyncpa [#allocation12], 0
    %17 = vsyncpa [#allocation15], 0
    %18 = vsyncpa [#allocation4], 0
    // Predicated region
    $region2: #{tpu_custom_call.1} parent=1 // pred_check
      _
    $region3: #{tpu_custom_call.1} parent=1 // pred_check_branch
      %20 = sbr.rel (0) target = $region5
    $region4: #{tpu_custom_call.1} parent=1 // pred_region
      %s22 = ssub.s32 256, 256
      %23 = vsyncadd [#allocation3], %s22
      %s24 = sshll.u32 [#allocation2], 4
      %s25 = int_to_ptr.vmem [resolvable:$true] %s24
      %30 = dma.hbm_to_vmem [thread:$0]  %s0, 256, %s25, [#allocation3], 128, 128, 8
    $region5: #{tpu_custom_call.1} parent=1 // pred_fallthru
      _
    // Predicated region
    $region6: #{tpu_custom_call.1} parent=1 // pred_check
      _
    $region7: #{tpu_custom_call.1} parent=1 // pred_check_branch
      %32 = sbr.rel (0) target = $region9
    $region8: #{tpu_custom_call.1} parent=1 // pred_region
      %s34 = ssub.s32 128, 128
      %35 = vsyncadd [#allocation6], %s34
      %s37 = sshll.u32 [#allocation5], 4
      %s38 = int_to_ptr.vmem [resolvable:$true] %s37
      %40 = dma.hbm_to_vmem [thread:$0]  %s1, 128, %s38, [#allocation6]
    $region9: #{tpu_custom_call.1} parent=1 // pred_fallthru
      _
    // Predicated region
    $region10: #{tpu_custom_call.1} parent=1 // pred_check
      _
    $region11: #{tpu_custom_call.1} parent=1 // pred_check_branch
      %42 = sbr.rel (0) target = $region13
    $region12: #{tpu_custom_call.1} parent=1 // pred_region
      %s44 = ssub.s32 16, 16
      %45 = vsyncadd [#allocation6], %s44
      %s47 = sshll.u32 [#allocation7], 4
      %s48 = int_to_ptr.vmem [resolvable:$true] %s47
      %50 = dma.hbm_to_vmem [thread:$0]  %s2, 16, %s48, [#allocation6]
    $region13: #{tpu_custom_call.1} parent=1 // pred_fallthru
      _
    // Predicated region
    $region14: #{tpu_custom_call.1} parent=1 // pred_check
      _
    $region15: #{tpu_custom_call.1} parent=1 // pred_check_branch
      %52 = sbr.rel (0) target = $region17
    $region16: #{tpu_custom_call.1} parent=1 // pred_region
      %s54 = ssub.s32 512, 512
      %55 = vsyncadd [#allocation9], %s54
      %s56 = sshll.u32 [#allocation8], 4
      %s57 = int_to_ptr.vmem [resolvable:$true] %s56
      %62 = dma.hbm_to_vmem [thread:$0]  %s3, 512, %s57, [#allocation9], 64, 64, 4
    $region17: #{tpu_custom_call.1} parent=1 // pred_fallthru
      _
    // Predicated region
    $region18: #{tpu_custom_call.1} parent=1 // pred_check
      _
    $region19: #{tpu_custom_call.1} parent=1 // pred_check_branch
      %64 = sbr.rel (0) target = $region21
    $region20: #{tpu_custom_call.1} parent=1 // pred_region
      %s66 = ssub.s32 16, 16
      %67 = vsyncadd [#allocation9], %s66
      %s69 = sshll.u32 [#allocation10], 4
      %s70 = int_to_ptr.vmem [resolvable:$true] %s69
      %72 = dma.hbm_to_vmem [thread:$0]  %s4, 16, %s70, [#allocation9]
    $region21: #{tpu_custom_call.1} parent=1 // pred_fallthru
      _
    // Predicated region
    $region22: #{tpu_custom_call.1} parent=1 // pred_check
      _
    $region23: #{tpu_custom_call.1} parent=1 // pred_check_branch
      %74 = sbr.rel (0) target = $region25
    $region24: #{tpu_custom_call.1} parent=1 // pred_region
      %s76 = ssub.s32 4096, 4096
      %77 = vsyncadd [#allocation12], %s76
      %s78 = sshll.u32 [#allocation11], 4
      %s79 = int_to_ptr.vmem [resolvable:$true] %s78
      %84 = dma.hbm_to_vmem [thread:$0]  %s5, 4096, %s79, [#allocation12], 256, 256, 16
    $region25: #{tpu_custom_call.1} parent=1 // pred_fallthru
      _
    // Predicated region
    $region26: #{tpu_custom_call.1} parent=1 // pred_check
      _
    $region27: #{tpu_custom_call.1} parent=1 // pred_check_branch
      %86 = sbr.rel (0) target = $region29
    $region28: #{tpu_custom_call.1} parent=1 // pred_region
      %s88 = ssub.s32 64, 64
      %89 = vsyncadd [#allocation12], %s88
      %s91 = sshll.u32 [#allocation13], 4
      %s92 = int_to_ptr.vmem [resolvable:$true] %s91
      %94 = dma.hbm_to_vmem [thread:$0]  %s6, 64, %s92, [#allocation12]
    $region29: #{tpu_custom_call.1} parent=1 // pred_fallthru
      _
    // Predicated region
    $region30: #{tpu_custom_call.1} parent=1 // pred_check
      _
    $region31: #{tpu_custom_call.1} parent=1 // pred_check_branch
      %96 = sbr.rel (0) target = $region33
    $region32: #{tpu_custom_call.1} parent=1 // pred_region
      %s98 = ssub.s32 32768, 32768
      %99 = vsyncadd [#allocation15], %s98
      %s100 = sshll.u32 [#allocation14], 4
      %s101 = int_to_ptr.vmem [resolvable:$true] %s100
      %106 = dma.hbm_to_vmem [thread:$0]  %s7, 32768, %s101, [#allocation15], 512, 512, 32
    $region33: #{tpu_custom_call.1} parent=1 // pred_fallthru
      _
    // Predicated region
    $region34: #{tpu_custom_call.1} parent=1 // pred_check
      _
    $region35: #{tpu_custom_call.1} parent=1 // pred_check_branch
      %108 = sbr.rel (0) target = $region37
    $region36: #{tpu_custom_call.1} parent=1 // pred_region
      %109 = dma.done [#allocation3], 256
    $region37: #{tpu_custom_call.1} parent=1 // pred_fallthru
      _
    // Predicated region
    $region38: #{tpu_custom_call.1} parent=1 // pred_check
      _
    $region39: #{tpu_custom_call.1} parent=1 // pred_check_branch
      %111 = sbr.rel (0) target = $region41
    $region40: #{tpu_custom_call.1} parent=1 // pred_region
      %112 = dma.done [#allocation6], 128
    $region41: #{tpu_custom_call.1} parent=1 // pred_fallthru
      _
    // Predicated region
    $region42: #{tpu_custom_call.1} parent=1 // pred_check
      _
    $region43: #{tpu_custom_call.1} parent=1 // pred_check_branch
      %114 = sbr.rel (0) target = $region45
    $region44: #{tpu_custom_call.1} parent=1 // pred_region
      %115 = dma.done [#allocation6], 16
    $region45: #{tpu_custom_call.1} parent=1 // pred_fallthru
      _
    // Predicated region
    $region46: #{tpu_custom_call.1} parent=1 // pred_check
      _
    $region47: #{tpu_custom_call.1} parent=1 // pred_check_branch
      %117 = sbr.rel (0) target = $region49
    $region48: #{tpu_custom_call.1} parent=1 // pred_region
      %118 = dma.done [#allocation9], 512
    $region49: #{tpu_custom_call.1} parent=1 // pred_fallthru
      _
    // Predicated region
    $region50: #{tpu_custom_call.1} parent=1 // pred_check
      _
    $region51: #{tpu_custom_call.1} parent=1 // pred_check_branch
      %120 = sbr.rel (0) target = $region53
    $region52: #{tpu_custom_call.1} parent=1 // pred_region
      %121 = dma.done [#allocation9], 16
    $region53: #{tpu_custom_call.1} parent=1 // pred_fallthru
      _
    // Predicated region
    $region54: #{tpu_custom_call.1} parent=1 // pred_check
      _
    $region55: #{tpu_custom_call.1} parent=1 // pred_check_branch
      %123 = sbr.rel (0) target = $region57
    $region56: #{tpu_custom_call.1} parent=1 // pred_region
      %124 = dma.done [#allocation12], 4096
    $region57: #{tpu_custom_call.1} parent=1 // pred_fallthru
      _
    // Predicated region
    $region58: #{tpu_custom_call.1} parent=1 // pred_check
      _
    $region59: #{tpu_custom_call.1} parent=1 // pred_check_branch
      %126 = sbr.rel (0) target = $region61
    $region60: #{tpu_custom_call.1} parent=1 // pred_region
      %127 = dma.done [#allocation12], 64
    $region61: #{tpu_custom_call.1} parent=1 // pred_fallthru
      _
    // Predicated region
    $region62: #{tpu_custom_call.1} parent=1 // pred_check
      _
    $region63: #{tpu_custom_call.1} parent=1 // pred_check_branch
      %129 = sbr.rel (0) target = $region65
    $region64: #{tpu_custom_call.1} parent=1 // pred_region
      %130 = dma.done [#allocation15], 32768
    $region65: #{tpu_custom_call.1} parent=1 // pred_fallthru
      _
    %p132 = scmp.eq.s32.totalorder 0, 0
    // Predicated region
    $region66: #{tpu_custom_call.1} parent=1 // pred_check
      %p133 = pneg %p132
    $region67: #{tpu_custom_call.1} parent=1 // pred_check_branch
      %135 = sbr.rel (%p133) target = $region69
    $region68: #{tpu_custom_call.1} parent=1 // pred_region
      %136 = vst [vmem:[#allocation16] sm:$0xff] -inf
      %137 = vst [vmem:[#allocation16 + $0x8] sm:$0xff] -inf
    $region69: #{tpu_custom_call.1} parent=1 // pred_fallthru
      _
    %v138 = vld [vmem:[#allocation2] sm:$0xff]
    %v139 = vld [vmem:[#allocation2 + $0x8] sm:$0xff]
    %140 = vxpose.xlu0.b32.start [1/16] %v138, 128
    %141 = vxpose.xlu0.b32.cont [2/16] 0.0, 128
    %142 = vxpose.xlu0.b32.cont [3/16] 0.0, 128
    %143 = vxpose.xlu0.b32.cont [4/16] 0.0, 128
    %144 = vxpose.xlu0.b32.cont [5/16] 0.0, 128
    %145 = vxpose.xlu0.b32.cont [6/16] 0.0, 128
    %146 = vxpose.xlu0.b32.cont [7/16] 0.0, 128
    %147 = vxpose.xlu0.b32.cont [8/16] 0.0, 128
    %148 = vxpose.xlu0.b32.cont [9/16] 0.0, 128
    %149 = vxpose.xlu0.b32.cont [10/16] 0.0, 128
    %150 = vxpose.xlu0.b32.cont [11/16] 0.0, 128
    %151 = vxpose.xlu0.b32.cont [12/16] 0.0, 128
    %152 = vxpose.xlu0.b32.cont [13/16] 0.0, 128
    %153 = vxpose.xlu0.b32.cont [14/16] 0.0, 128
    %154 = vxpose.xlu0.b32.cont [15/16] 0.0, 128
    %155 = vxpose.xlu0.b32.end [16/16] 0.0, 128
    %v156 = vpop.trf.xlu0
    %v157 = vpop.trf.xlu0
    %v158 = vpop.trf.xlu0
    %v159 = vpop.trf.xlu0
    %v160 = vpop.trf.xlu0
    %v161 = vpop.trf.xlu0
    %v162 = vpop.trf.xlu0
    %v163 = vpop.trf.xlu0
    %v164 = vpop.trf.xlu0
    %v165 = vpop.trf.xlu0
    %v166 = vpop.trf.xlu0
    %v167 = vpop.trf.xlu0
    %v168 = vpop.trf.xlu0
    %v169 = vpop.trf.xlu0
    %v170 = vpop.trf.xlu0
    %v171 = vpop.trf.xlu0
    %172 = vxpose.xlu0.b32.start [1/16] %v139, 128
    %173 = vxpose.xlu0.b32.cont [2/16] 0.0, 128
    %174 = vxpose.xlu0.b32.cont [3/16] 0.0, 128
    %175 = vxpose.xlu0.b32.cont [4/16] 0.0, 128
    %176 = vxpose.xlu0.b32.cont [5/16] 0.0, 128
    %177 = vxpose.xlu0.b32.cont [6/16] 0.0, 128
    %178 = vxpose.xlu0.b32.cont [7/16] 0.0, 128
    %179 = vxpose.xlu0.b32.cont [8/16] 0.0, 128
    %180 = vxpose.xlu0.b32.cont [9/16] 0.0, 128
    %181 = vxpose.xlu0.b32.cont [10/16] 0.0, 128
    %182 = vxpose.xlu0.b32.cont [11/16] 0.0, 128
    %183 = vxpose.xlu0.b32.cont [12/16] 0.0, 128
    %184 = vxpose.xlu0.b32.cont [13/16] 0.0, 128
    %185 = vxpose.xlu0.b32.cont [14/16] 0.0, 128
    %186 = vxpose.xlu0.b32.cont [15/16] 0.0, 128
    %187 = vxpose.xlu0.b32.end [16/16] 0.0, 128
    %v188 = vpop.trf.xlu0
    %v189 = vpop.trf.xlu0
    %v190 = vpop.trf.xlu0
    %v191 = vpop.trf.xlu0
    %v192 = vpop.trf.xlu0
    %v193 = vpop.trf.xlu0
    %v194 = vpop.trf.xlu0
    %v195 = vpop.trf.xlu0
    %v196 = vpop.trf.xlu0
    %v197 = vpop.trf.xlu0
    %v198 = vpop.trf.xlu0
    %v199 = vpop.trf.xlu0
    %v200 = vpop.trf.xlu0
    %v201 = vpop.trf.xlu0
    %v202 = vpop.trf.xlu0
    %v203 = vpop.trf.xlu0
    %v204 = vld [vmem:[#allocation5] sm:$0xff]
    %v205 = vld [vmem:[#allocation7] sm:$0x1]
    %v207 = vlaneseq
    %v208 = vshrl.u32 %v207, 7
    %v209 = vsub.s32 0, %v208
    %v210 = vrot.slane %v205, %v209
    %vm212 = vcmask 64512
    %v214 = vsel %vm212, %v156, 0
    %v217 = vsel %vm212, %v157, 0
    %v220 = vsel %vm212, %v158, 0
    %v223 = vsel %vm212, %v159, 0
    %v226 = vsel %vm212, %v160, 0
    %v229 = vsel %vm212, %v161, 0
    %v232 = vsel %vm212, %v162, 0
    %v235 = vsel %vm212, %v163, 0
    %v238 = vsel %vm212, %v164, 0
    %v241 = vsel %vm212, %v165, 0
    %v244 = vsel %vm212, %v166, 0
    %v247 = vsel %vm212, %v167, 0
    %v250 = vsel %vm212, %v168, 0
    %v253 = vsel %vm212, %v169, 0
    %v256 = vsel %vm212, %v170, 0
    %v259 = vsel %vm212, %v171, 0
    %v262 = vsel %vm212, %v188, 0
    %v265 = vsel %vm212, %v189, 0
    %v268 = vsel %vm212, %v190, 0
    %v271 = vsel %vm212, %v191, 0
    %v274 = vsel %vm212, %v192, 0
    %v277 = vsel %vm212, %v193, 0
    %v280 = vsel %vm212, %v194, 0
    %v283 = vsel %vm212, %v195, 0
    %v286 = vsel %vm212, %v196, 0
    %v289 = vsel %vm212, %v197, 0
    %v292 = vsel %vm212, %v198, 0
    %v295 = vsel %vm212, %v199, 0
    %v298 = vsel %vm212, %v200, 0
    %v301 = vsel %vm212, %v201, 0
    %v304 = vsel %vm212, %v202, 0
    %v307 = vsel %vm212, %v203, 0
    %309 = vmatprep.subr.mxu0 0.0
    %310 = vmatpush1.msra.mxu0 %v204
    %311 = vmatprep.subr.mxu0 0.0
    %312 = vmatpush1.msra.mxu0 0.0
    %313 = vmatprep.subr.mxu0 0.0
    %314 = vmatpush1.msra.mxu0 0.0
    %315 = vmatprep.subr.mxu0 0.0
    %316 = vmatpush1.msra.mxu0 0.0
    %317 = vmatprep.subr.mxu0 0.0
    %318 = vmatpush1.msra.mxu0 0.0
    %319 = vmatprep.subr.mxu0 0.0
    %320 = vmatpush1.msra.mxu0 0.0
    %321 = vmatprep.subr.mxu0 0.0
    %322 = vmatpush1.msra.mxu0 0.0
    %323 = vmatprep.subr.mxu0 0.0
    %324 = vmatpush1.msra.mxu0 0.0
    %325 = vmatprep.subr.mxu0 0.0
    %326 = vmatpush1.msra.mxu0 0.0
    %327 = vmatprep.subr.mxu0 0.0
    %328 = vmatpush1.msra.mxu0 0.0
    %329 = vmatprep.subr.mxu0 0.0
    %330 = vmatpush1.msra.mxu0 0.0
    %331 = vmatprep.subr.mxu0 0.0
    %332 = vmatpush1.msra.mxu0 0.0
    %333 = vmatprep.subr.mxu0 0.0
    %334 = vmatpush1.msra.mxu0 0.0
    %335 = vmatprep.subr.mxu0 0.0
    %336 = vmatpush1.msra.mxu0 0.0
    %337 = vmatprep.subr.mxu0 0.0
    %338 = vmatpush1.msra.mxu0 0.0
    %339 = vmatprep.subr.mxu0 0.0
    %340 = vmatpush1.msra.mxu0 0.0
    %341 = vmatprep.subr.mxu0 0.0
    %342 = vmatpush1.msra.mxu0 0.0
    %343 = vmatprep.subr.mxu0 0.0
    %344 = vmatpush1.msra.mxu0 0.0
    %345 = vmatprep.subr.mxu0 0.0
    %346 = vmatpush1.msra.mxu0 0.0
    %347 = vmatprep.subr.mxu0 0.0
    %348 = vmatpush1.msra.mxu0 0.0
    %349 = vmatprep.subr.mxu0 0.0
    %350 = vmatpush1.msra.mxu0 0.0
    %351 = vmatprep.subr.mxu0 0.0
    %352 = vmatpush1.msra.mxu0 0.0
    %353 = vmatprep.subr.mxu0 0.0
    %354 = vmatpush1.msra.mxu0 0.0
    %355 = vmatprep.subr.mxu0 0.0
    %356 = vmatpush1.msra.mxu0 0.0
    %357 = vmatprep.subr.mxu0 0.0
    %358 = vmatpush1.msra.mxu0 0.0
    %359 = vmatprep.subr.mxu0 0.0
    %360 = vmatpush1.msra.mxu0 0.0
    %361 = vmatprep.subr.mxu0 0.0
    %362 = vmatpush1.msra.mxu0 0.0
    %363 = vmatprep.subr.mxu0 0.0
    %364 = vmatpush1.msra.mxu0 0.0
    %365 = vmatprep.subr.mxu0 0.0
    %366 = vmatpush1.msra.mxu0 0.0
    %367 = vmatprep.subr.mxu0 0.0
    %368 = vmatpush1.msra.mxu0 0.0
    %369 = vmatprep.subr.mxu0 0.0
    %370 = vmatpush1.msra.mxu0 0.0
    %371 = vmatprep.subr.mxu0 0.0
    %372 = vmatpush1.msra.mxu0 0.0
    %373 = vmatprep.mubr.f32.mxu0 0.0
    %374 = vmatmul.mubr.f32.gmra.mrb[0].mxu0 %v214
    %v375 = vpop.f32.mrb[0].mxu0
    %v376 = vadd.f32 %v210, %v375
    %v377 = vpop.f32.mrb[0].mxu0
    %378 = vmatprep.mubr.f32.mxu0 0.0
    %379 = vmatmul.mubr.f32.gmra.mrb[0].mxu0 %v217
    %v380 = vpop.f32.mrb[0].mxu0
    %v381 = vadd.f32 %v210, %v380
    %v382 = vpop.f32.mrb[0].mxu0
    %383 = vmatprep.mubr.f32.mxu0 0.0
    %384 = vmatmul.mubr.f32.gmra.mrb[0].mxu0 %v220
    %v385 = vpop.f32.mrb[0].mxu0
    %v386 = vadd.f32 %v210, %v385
    %v387 = vpop.f32.mrb[0].mxu0
    %388 = vmatprep.mubr.f32.mxu0 0.0
    %389 = vmatmul.mubr.f32.gmra.mrb[0].mxu0 %v223
    %v390 = vpop.f32.mrb[0].mxu0
    %v391 = vadd.f32 %v210, %v390
    %v392 = vpop.f32.mrb[0].mxu0
    %393 = vmatprep.mubr.f32.mxu0 0.0
    %394 = vmatmul.mubr.f32.gmra.mrb[0].mxu0 %v226
    %v395 = vpop.f32.mrb[0].mxu0
    %v396 = vadd.f32 %v210, %v395
    %v397 = vpop.f32.mrb[0].mxu0
    %398 = vmatprep.mubr.f32.mxu0 0.0
    %399 = vmatmul.mubr.f32.gmra.mrb[0].mxu0 %v229
    %v400 = vpop.f32.mrb[0].mxu0
    %v401 = vadd.f32 %v210, %v400
    %v402 = vpop.f32.mrb[0].mxu0
    %403 = vmatprep.mubr.f32.mxu0 0.0
    %404 = vmatmul.mubr.f32.gmra.mrb[0].mxu0 %v232
    %v405 = vpop.f32.mrb[0].mxu0
    %v406 = vadd.f32 %v210, %v405
    %v407 = vpop.f32.mrb[0].mxu0
    %408 = vmatprep.mubr.f32.mxu0 0.0
    %409 = vmatmul.mubr.f32.gmra.mrb[0].mxu0 %v235
    %v410 = vpop.f32.mrb[0].mxu0
    %v411 = vadd.f32 %v210, %v410
    %v412 = vpop.f32.mrb[0].mxu0
    %413 = vmatprep.mubr.f32.mxu0 0.0
    %414 = vmatmul.mubr.f32.gmra.mrb[0].mxu0 %v238
    %v415 = vpop.f32.mrb[0].mxu0
    %v416 = vadd.f32 %v210, %v415
    %v417 = vpop.f32.mrb[0].mxu0
    %418 = vmatprep.mubr.f32.mxu0 0.0
    %419 = vmatmul.mubr.f32.gmra.mrb[0].mxu0 %v241
    %v420 = vpop.f32.mrb[0].mxu0
    %v421 = vadd.f32 %v210, %v420
    %v422 = vpop.f32.mrb[0].mxu0
    %423 = vmatprep.mubr.f32.mxu0 0.0
    %424 = vmatmul.mubr.f32.gmra.mrb[0].mxu0 %v244
    %v425 = vpop.f32.mrb[0].mxu0
    %v426 = vadd.f32 %v210, %v425
    %v427 = vpop.f32.mrb[0].mxu0
    %428 = vmatprep.mubr.f32.mxu0 0.0
    %429 = vmatmul.mubr.f32.gmra.mrb[0].mxu0 %v247
    %v430 = vpop.f32.mrb[0].mxu0
    %v431 = vadd.f32 %v210, %v430
    %v432 = vpop.f32.mrb[0].mxu0
    %433 = vmatprep.mubr.f32.mxu0 0.0
    %434 = vmatmul.mubr.f32.gmra.mrb[0].mxu0 %v250
    %v435 = vpop.f32.mrb[0].mxu0
    %v436 = vadd.f32 %v210, %v435
    %v437 = vpop.f32.mrb[0].mxu0
    %438 = vmatprep.mubr.f32.mxu0 0.0
    %439 = vmatmul.mubr.f32.gmra.mrb[0].mxu0 %v253
    %v440 = vpop.f32.mrb[0].mxu0
    %v441 = vadd.f32 %v210, %v440
    %v442 = vpop.f32.mrb[0].mxu0
    %443 = vmatprep.mubr.f32.mxu0 0.0
    %444 = vmatmul.mubr.f32.gmra.mrb[0].mxu0 %v256
    %v445 = vpop.f32.mrb[0].mxu0
    %v446 = vadd.f32 %v210, %v445
    %v447 = vpop.f32.mrb[0].mxu0
    %448 = vmatprep.mubr.f32.mxu0 0.0
    %449 = vmatmul.mubr.f32.gmra.mrb[0].mxu0 %v259
    %v450 = vpop.f32.mrb[0].mxu0
    %v451 = vadd.f32 %v210, %v450
    %v452 = vpop.f32.mrb[0].mxu0
    %453 = vmatprep.mubr.f32.mxu0 0.0
    %454 = vmatmul.mubr.f32.gmra.mrb[0].mxu0 %v262
    %v455 = vpop.f32.mrb[0].mxu0
    %v456 = vadd.f32 %v210, %v455
    %v457 = vpop.f32.mrb[0].mxu0
    %458 = vmatprep.mubr.f32.mxu0 0.0
    %459 = vmatmul.mubr.f32.gmra.mrb[0].mxu0 %v265
    %v460 = vpop.f32.mrb[0].mxu0
    %v461 = vadd.f32 %v210, %v460
    %v462 = vpop.f32.mrb[0].mxu0
    %463 = vmatprep.mubr.f32.mxu0 0.0
    %464 = vmatmul.mubr.f32.gmra.mrb[0].mxu0 %v268
    %v465 = vpop.f32.mrb[0].mxu0
    %v466 = vadd.f32 %v210, %v465
    %v467 = vpop.f32.mrb[0].mxu0
    %468 = vmatprep.mubr.f32.mxu0 0.0
    %469 = vmatmul.mubr.f32.gmra.mrb[0].mxu0 %v271
    %v470 = vpop.f32.mrb[0].mxu0
    %v471 = vadd.f32 %v210, %v470
    %v472 = vpop.f32.mrb[0].mxu0
    %473 = vmatprep.mubr.f32.mxu0 0.0
    %474 = vmatmul.mubr.f32.gmra.mrb[0].mxu0 %v274
    %v475 = vpop.f32.mrb[0].mxu0
    %v476 = vadd.f32 %v210, %v475
    %v477 = vpop.f32.mrb[0].mxu0
    %478 = vmatprep.mubr.f32.mxu0 0.0
    %479 = vmatmul.mubr.f32.gmra.mrb[0].mxu0 %v277
    %v480 = vpop.f32.mrb[0].mxu0
    %v481 = vadd.f32 %v210, %v480
    %v482 = vpop.f32.mrb[0].mxu0
    %483 = vmatprep.mubr.f32.mxu0 0.0
    %484 = vmatmul.mubr.f32.gmra.mrb[0].mxu0 %v280
    %v485 = vpop.f32.mrb[0].mxu0
    %v486 = vadd.f32 %v210, %v485
    %v487 = vpop.f32.mrb[0].mxu0
    %488 = vmatprep.mubr.f32.mxu0 0.0
    %489 = vmatmul.mubr.f32.gmra.mrb[0].mxu0 %v283
    %v490 = vpop.f32.mrb[0].mxu0
    %v491 = vadd.f32 %v210, %v490
    %v492 = vpop.f32.mrb[0].mxu0
    %493 = vmatprep.mubr.f32.mxu0 0.0
    %494 = vmatmul.mubr.f32.gmra.mrb[0].mxu0 %v286
    %v495 = vpop.f32.mrb[0].mxu0
    %v496 = vadd.f32 %v210, %v495
    %v497 = vpop.f32.mrb[0].mxu0
    %498 = vmatprep.mubr.f32.mxu0 0.0
    %499 = vmatmul.mubr.f32.gmra.mrb[0].mxu0 %v289
    %v500 = vpop.f32.mrb[0].mxu0
    %v501 = vadd.f32 %v210, %v500
    %v502 = vpop.f32.mrb[0].mxu0
    %503 = vmatprep.mubr.f32.mxu0 0.0
    %504 = vmatmul.mubr.f32.gmra.mrb[0].mxu0 %v292
    %v505 = vpop.f32.mrb[0].mxu0
    %v506 = vadd.f32 %v210, %v505
    %v507 = vpop.f32.mrb[0].mxu0
    %508 = vmatprep.mubr.f32.mxu0 0.0
    %509 = vmatmul.mubr.f32.gmra.mrb[0].mxu0 %v295
    %v510 = vpop.f32.mrb[0].mxu0
    %v511 = vadd.f32 %v210, %v510
    %v512 = vpop.f32.mrb[0].mxu0
    %513 = vmatprep.mubr.f32.mxu0 0.0
    %514 = vmatmul.mubr.f32.gmra.mrb[0].mxu0 %v298
    %v515 = vpop.f32.mrb[0].mxu0
    %v516 = vadd.f32 %v210, %v515
    %v517 = vpop.f32.mrb[0].mxu0
    %518 = vmatprep.mubr.f32.mxu0 0.0
    %519 = vmatmul.mubr.f32.gmra.mrb[0].mxu0 %v301
    %v520 = vpop.f32.mrb[0].mxu0
    %v521 = vadd.f32 %v210, %v520
    %v522 = vpop.f32.mrb[0].mxu0
    %523 = vmatprep.mubr.f32.mxu0 0.0
    %524 = vmatmul.mubr.f32.gmra.mrb[0].mxu0 %v304
    %v525 = vpop.f32.mrb[0].mxu0
    %v526 = vadd.f32 %v210, %v525
    %v527 = vpop.f32.mrb[0].mxu0
    %528 = vmatprep.mubr.f32.mxu0 0.0
    %529 = vmatmul.mubr.f32.gmra.mrb[0].mxu0 %v307
    %v530 = vpop.f32.mrb[0].mxu0
    %v531 = vadd.f32 %v210, %v530
    %v532 = vpop.f32.mrb[0].mxu0
    %533 = vdwg.mxu0
    %v534 = vpack.c.bf16 %v381, %v376
    %v535 = vpack.c.bf16 %v391, %v386
    %v536 = vpack.c.bf16 %v401, %v396
    %v537 = vpack.c.bf16 %v411, %v406
    %v538 = vpack.c.bf16 %v421, %v416
    %v539 = vpack.c.bf16 %v431, %v426
    %v540 = vpack.c.bf16 %v441, %v436
    %v541 = vpack.c.bf16 %v451, %v446
    %v542 = vpack.c.bf16 %v461, %v456
    %v543 = vpack.c.bf16 %v471, %v466
    %v544 = vpack.c.bf16 %v481, %v476
    %v545 = vpack.c.bf16 %v491, %v486
    %v546 = vpack.c.bf16 %v501, %v496
    %v547 = vpack.c.bf16 %v511, %v506
    %v548 = vpack.c.bf16 %v521, %v516
    %v549 = vpack.c.bf16 %v531, %v526
    %v550 = vmax.bf16 %v534, 0
    %v551 = vmax.bf16 %v535, 0
    %v552 = vmax.bf16 %v536, 0
    %v553 = vmax.bf16 %v537, 0
    %v554 = vmax.bf16 %v538, 0
    %v555 = vmax.bf16 %v539, 0
    %v556 = vmax.bf16 %v540, 0
    %v557 = vmax.bf16 %v541, 0
    %v558 = vmax.bf16 %v542, 0
    %v559 = vmax.bf16 %v543, 0
    %v560 = vmax.bf16 %v544, 0
    %v561 = vmax.bf16 %v545, 0
    %v562 = vmax.bf16 %v546, 0
    %v563 = vmax.bf16 %v547, 0
    %v564 = vmax.bf16 %v548, 0
    %v565 = vmax.bf16 %v549, 0
    %v566 = vld [vmem:[#allocation8] sm:$0xf]
    %v567 = vld [vmem:[#allocation8 + $0x4] sm:$0xf]
    %v568 = vld [vmem:[#allocation8 + $0x8] sm:$0xf]
    %v569 = vld [vmem:[#allocation8 + $0xc] sm:$0xf]
    %v570 = vld [vmem:[#allocation8 + $0x10] sm:$0xf]
    %v571 = vld [vmem:[#allocation8 + $0x14] sm:$0xf]
    %v572 = vld [vmem:[#allocation8 + $0x18] sm:$0xf]
    %v573 = vld [vmem:[#allocation8 + $0x1c] sm:$0xf]
    %v574 = vld [vmem:[#allocation10] sm:$0x1]
    %v576 = vlaneseq
    %v577 = vshrl.u32 %v576, 7
    %v578 = vsub.s32 0, %v577
    %v579 = vrot.slane %v574, %v578
    %v589 = vunpack.c.l.b16 %v566
    %v590 = vunpack.c.l.b16 %v567
    %v591 = vunpack.c.l.b16 %v568
    %v592 = vunpack.c.l.b16 %v569
    %v593 = vunpack.c.l.b16 %v570
    %v594 = vunpack.c.l.b16 %v571
    %v595 = vunpack.c.l.b16 %v572
    %v596 = vunpack.c.l.b16 %v573
    %v597 = vpack.c.b16 %v590, %v589
    %v598 = vpack.c.b16 %v592, %v591
    %v599 = vpack.c.b16 %v594, %v593
    %v600 = vpack.c.b16 %v596, %v595
    %vm605 = vcmask 523264
    %v607 = vsel %vm605, %v550, 0
    %v610 = vsel %vm605, %v551, 0
    %v613 = vsel %vm605, %v552, 0
    %v616 = vsel %vm605, %v553, 0
    %v619 = vsel %vm605, %v554, 0
    %v622 = vsel %vm605, %v555, 0
    %v625 = vsel %vm605, %v556, 0
    %v628 = vsel %vm605, %v557, 0
    %v631 = vsel %vm605, %v558, 0
    %v634 = vsel %vm605, %v559, 0
    %v637 = vsel %vm605, %v560, 0
    %v640 = vsel %vm605, %v561, 0
    %v643 = vsel %vm605, %v562, 0
    %v646 = vsel %vm605, %v563, 0
    %v649 = vsel %vm605, %v564, 0
    %v652 = vsel %vm605, %v565, 0
    %654 = vmatprep.subr.bf16.mxu0 0
    %655 = vmatpush1.bf16.msra.mxu0 %v597
    %656 = vmatprep.subr.bf16.mxu0 0
    %657 = vmatpush1.bf16.msra.mxu0 %v598
    %658 = vmatprep.subr.bf16.mxu0 0
    %659 = vmatpush1.bf16.msra.mxu0 %v599
    %660 = vmatprep.subr.bf16.mxu0 0
    %661 = vmatpush1.bf16.msra.mxu0 %v600
    %662 = vmatprep.subr.bf16.mxu0 0
    %663 = vmatpush1.bf16.msra.mxu0 0
    %664 = vmatprep.subr.bf16.mxu0 0
    %665 = vmatpush1.bf16.msra.mxu0 0
    %666 = vmatprep.subr.bf16.mxu0 0
    %667 = vmatpush1.bf16.msra.mxu0 0
    %668 = vmatprep.subr.bf16.mxu0 0
    %669 = vmatpush1.bf16.msra.mxu0 0
    %670 = vmatprep.subr.bf16.mxu0 0
    %671 = vmatpush1.bf16.msra.mxu0 0
    %672 = vmatprep.subr.bf16.mxu0 0
    %673 = vmatpush1.bf16.msra.mxu0 0
    %674 = vmatprep.subr.bf16.mxu0 0
    %675 = vmatpush1.bf16.msra.mxu0 0
    %676 = vmatprep.subr.bf16.mxu0 0
    %677 = vmatpush1.bf16.msra.mxu0 0
    %678 = vmatprep.subr.bf16.mxu0 0
    %679 = vmatpush1.bf16.msra.mxu0 0
    %680 = vmatprep.subr.bf16.mxu0 0
    %681 = vmatpush1.bf16.msra.mxu0 0
    %682 = vmatprep.subr.bf16.mxu0 0
    %683 = vmatpush1.bf16.msra.mxu0 0
    %684 = vmatprep.subr.bf16.mxu0 0
    %685 = vmatpush1.bf16.msra.mxu0 0
    %686 = vmatprep.mubr.bf16.mxu0 0
    %687 = vmatmul.mubr.bf16.gmra.mrb[0].mxu0 %v607
    %v688 = vpop.f32.mrb[0].mxu0
    %v689 = vadd.f32 %v579, %v688
    %v690 = vpop.f32.mrb[0].mxu0
    %v691 = vpop.f32.mrb[0].mxu0
    %v692 = vadd.f32 %v579, %v691
    %v693 = vpop.f32.mrb[0].mxu0
    %694 = vmatprep.mubr.bf16.mxu0 0
    %695 = vmatmul.mubr.bf16.gmra.mrb[0].mxu0 %v610
    %v696 = vpop.f32.mrb[0].mxu0
    %v697 = vadd.f32 %v579, %v696
    %v698 = vpop.f32.mrb[0].mxu0
    %v699 = vpop.f32.mrb[0].mxu0
    %v700 = vadd.f32 %v579, %v699
    %v701 = vpop.f32.mrb[0].mxu0
    %702 = vmatprep.mubr.bf16.mxu0 0
    %703 = vmatmul.mubr.bf16.gmra.mrb[0].mxu0 %v613
    %v704 = vpop.f32.mrb[0].mxu0
    %v705 = vadd.f32 %v579, %v704
    %v706 = vpop.f32.mrb[0].mxu0
    %v707 = vpop.f32.mrb[0].mxu0
    %v708 = vadd.f32 %v579, %v707
    %v709 = vpop.f32.mrb[0].mxu0
    %710 = vmatprep.mubr.bf16.mxu0 0
    %711 = vmatmul.mubr.bf16.gmra.mrb[0].mxu0 %v616
    %v712 = vpop.f32.mrb[0].mxu0
    %v713 = vadd.f32 %v579, %v712
    %v714 = vpop.f32.mrb[0].mxu0
    %v715 = vpop.f32.mrb[0].mxu0
    %v716 = vadd.f32 %v579, %v715
    %v717 = vpop.f32.mrb[0].mxu0
    %718 = vmatprep.mubr.bf16.mxu0 0
    %719 = vmatmul.mubr.bf16.gmra.mrb[0].mxu0 %v619
    %v720 = vpop.f32.mrb[0].mxu0
    %v721 = vadd.f32 %v579, %v720
    %v722 = vpop.f32.mrb[0].mxu0
    %v723 = vpop.f32.mrb[0].mxu0
    %v724 = vadd.f32 %v579, %v723
    %v725 = vpop.f32.mrb[0].mxu0
    %726 = vmatprep.mubr.bf16.mxu0 0
    %727 = vmatmul.mubr.bf16.gmra.mrb[0].mxu0 %v622
    %v728 = vpop.f32.mrb[0].mxu0
    %v729 = vadd.f32 %v579, %v728
    %v730 = vpop.f32.mrb[0].mxu0
    %v731 = vpop.f32.mrb[0].mxu0
    %v732 = vadd.f32 %v579, %v731
    %v733 = vpop.f32.mrb[0].mxu0
    %734 = vmatprep.mubr.bf16.mxu0 0
    %735 = vmatmul.mubr.bf16.gmra.mrb[0].mxu0 %v625
    %v736 = vpop.f32.mrb[0].mxu0
    %v737 = vadd.f32 %v579, %v736
    %v738 = vpop.f32.mrb[0].mxu0
    %v739 = vpop.f32.mrb[0].mxu0
    %v740 = vadd.f32 %v579, %v739
    %v741 = vpop.f32.mrb[0].mxu0
    %742 = vmatprep.mubr.bf16.mxu0 0
    %743 = vmatmul.mubr.bf16.gmra.mrb[0].mxu0 %v628
    %v744 = vpop.f32.mrb[0].mxu0
    %v745 = vadd.f32 %v579, %v744
    %v746 = vpop.f32.mrb[0].mxu0
    %v747 = vpop.f32.mrb[0].mxu0
    %v748 = vadd.f32 %v579, %v747
    %v749 = vpop.f32.mrb[0].mxu0
    %750 = vmatprep.mubr.bf16.mxu0 0
    %751 = vmatmul.mubr.bf16.gmra.mrb[0].mxu0 %v631
    %v752 = vpop.f32.mrb[0].mxu0
    %v753 = vadd.f32 %v579, %v752
    %v754 = vpop.f32.mrb[0].mxu0
    %v755 = vpop.f32.mrb[0].mxu0
    %v756 = vadd.f32 %v579, %v755
    %v757 = vpop.f32.mrb[0].mxu0
    %758 = vmatprep.mubr.bf16.mxu0 0
    %759 = vmatmul.mubr.bf16.gmra.mrb[0].mxu0 %v634
    %v760 = vpop.f32.mrb[0].mxu0
    %v761 = vadd.f32 %v579, %v760
    %v762 = vpop.f32.mrb[0].mxu0
    %v763 = vpop.f32.mrb[0].mxu0
    %v764 = vadd.f32 %v579, %v763
    %v765 = vpop.f32.mrb[0].mxu0
    %766 = vmatprep.mubr.bf16.mxu0 0
    %767 = vmatmul.mubr.bf16.gmra.mrb[0].mxu0 %v637
    %v768 = vpop.f32.mrb[0].mxu0
    %v769 = vadd.f32 %v579, %v768
    %v770 = vpop.f32.mrb[0].mxu0
    %v771 = vpop.f32.mrb[0].mxu0
    %v772 = vadd.f32 %v579, %v771
    %v773 = vpop.f32.mrb[0].mxu0
    %774 = vmatprep.mubr.bf16.mxu0 0
    %775 = vmatmul.mubr.bf16.gmra.mrb[0].mxu0 %v640
    %v776 = vpop.f32.mrb[0].mxu0
    %v777 = vadd.f32 %v579, %v776
    %v778 = vpop.f32.mrb[0].mxu0
    %v779 = vpop.f32.mrb[0].mxu0
    %v780 = vadd.f32 %v579, %v779
    %v781 = vpop.f32.mrb[0].mxu0
    %782 = vmatprep.mubr.bf16.mxu0 0
    %783 = vmatmul.mubr.bf16.gmra.mrb[0].mxu0 %v643
    %v784 = vpop.f32.mrb[0].mxu0
    %v785 = vadd.f32 %v579, %v784
    %v786 = vpop.f32.mrb[0].mxu0
    %v787 = vpop.f32.mrb[0].mxu0
    %v788 = vadd.f32 %v579, %v787
    %v789 = vpop.f32.mrb[0].mxu0
    %790 = vmatprep.mubr.bf16.mxu0 0
    %791 = vmatmul.mubr.bf16.gmra.mrb[0].mxu0 %v646
    %v792 = vpop.f32.mrb[0].mxu0
    %v793 = vadd.f32 %v579, %v792
    %v794 = vpop.f32.mrb[0].mxu0
    %v795 = vpop.f32.mrb[0].mxu0
    %v796 = vadd.f32 %v579, %v795
    %v797 = vpop.f32.mrb[0].mxu0
    %798 = vmatprep.mubr.bf16.mxu0 0
    %799 = vmatmul.mubr.bf16.gmra.mrb[0].mxu0 %v649
    %v800 = vpop.f32.mrb[0].mxu0
    %v801 = vadd.f32 %v579, %v800
    %v802 = vpop.f32.mrb[0].mxu0
    %v803 = vpop.f32.mrb[0].mxu0
    %v804 = vadd.f32 %v579, %v803
    %v805 = vpop.f32.mrb[0].mxu0
    %806 = vmatprep.mubr.bf16.mxu0 0
    %807 = vmatmul.mubr.bf16.gmra.mrb[0].mxu0 %v652
    %v808 = vpop.f32.mrb[0].mxu0
    %v809 = vadd.f32 %v579, %v808
    %v810 = vpop.f32.mrb[0].mxu0
    %v811 = vpop.f32.mrb[0].mxu0
    %v812 = vadd.f32 %v579, %v811
    %v813 = vpop.f32.mrb[0].mxu0
    %814 = vdwg.mxu0
    %v815 = vpack.c.bf16 %v692, %v689
    %v816 = vpack.c.bf16 %v700, %v697
    %v817 = vpack.c.bf16 %v708, %v705
    %v818 = vpack.c.bf16 %v716, %v713
    %v819 = vpack.c.bf16 %v724, %v721
    %v820 = vpack.c.bf16 %v732, %v729
    %v821 = vpack.c.bf16 %v740, %v737
    %v822 = vpack.c.bf16 %v748, %v745
    %v823 = vpack.c.bf16 %v756, %v753
    %v824 = vpack.c.bf16 %v764, %v761
    %v825 = vpack.c.bf16 %v772, %v769
    %v826 = vpack.c.bf16 %v780, %v777
    %v827 = vpack.c.bf16 %v788, %v785
    %v828 = vpack.c.bf16 %v796, %v793
    %v829 = vpack.c.bf16 %v804, %v801
    %v830 = vpack.c.bf16 %v812, %v809
    %v831 = vmax.bf16 %v815, 0
    %v832 = vmax.bf16 %v816, 0
    %v833 = vmax.bf16 %v817, 0
    %v834 = vmax.bf16 %v818, 0
    %v835 = vmax.bf16 %v819, 0
    %v836 = vmax.bf16 %v820, 0
    %v837 = vmax.bf16 %v821, 0
    %v838 = vmax.bf16 %v822, 0
    %v839 = vmax.bf16 %v823, 0
    %v840 = vmax.bf16 %v824, 0
    %v841 = vmax.bf16 %v825, 0
    %v842 = vmax.bf16 %v826, 0
    %v843 = vmax.bf16 %v827, 0
    %v844 = vmax.bf16 %v828, 0
    %v845 = vmax.bf16 %v829, 0
    %v846 = vmax.bf16 %v830, 0
    %v847 = vld [vmem:[#allocation11] sm:$0xff]
    %v848 = vld [vmem:[#allocation11 + $0x8] sm:$0xff]
    %v849 = vld [vmem:[#allocation11 + $0x10] sm:$0xff]
    %v850 = vld [vmem:[#allocation11 + $0x18] sm:$0xff]
    %v851 = vld [vmem:[#allocation11 + $0x20] sm:$0xff]
    %v852 = vld [vmem:[#allocation11 + $0x28] sm:$0xff]
    %v853 = vld [vmem:[#allocation11 + $0x30] sm:$0xff]
    %v854 = vld [vmem:[#allocation11 + $0x38] sm:$0xff]
    %v855 = vld [vmem:[#allocation11 + $0x40] sm:$0xff]
    %v856 = vld [vmem:[#allocation11 + $0x48] sm:$0xff]
    %v857 = vld [vmem:[#allocation11 + $0x50] sm:$0xff]
    %v858 = vld [vmem:[#allocation11 + $0x58] sm:$0xff]
    %v859 = vld [vmem:[#allocation11 + $0x60] sm:$0xff]
    %v860 = vld [vmem:[#allocation11 + $0x68] sm:$0xff]
    %v861 = vld [vmem:[#allocation11 + $0x70] sm:$0xff]
    %v862 = vld [vmem:[#allocation11 + $0x78] sm:$0xff]
    %v863 = vld [vmem:[#allocation11 + $0x80] sm:$0xff]
    %v864 = vld [vmem:[#allocation11 + $0x88] sm:$0xff]
    %v865 = vld [vmem:[#allocation11 + $0x90] sm:$0xff]
    %v866 = vld [vmem:[#allocation11 + $0x98] sm:$0xff]
    %v867 = vld [vmem:[#allocation11 + $0xa0] sm:$0xff]
    %v868 = vld [vmem:[#allocation11 + $0xa8] sm:$0xff]
    %v869 = vld [vmem:[#allocation11 + $0xb0] sm:$0xff]
    %v870 = vld [vmem:[#allocation11 + $0xb8] sm:$0xff]
    %v871 = vld [vmem:[#allocation11 + $0xc0] sm:$0xff]
    %v872 = vld [vmem:[#allocation11 + $0xc8] sm:$0xff]
    %v873 = vld [vmem:[#allocation11 + $0xd0] sm:$0xff]
    %v874 = vld [vmem:[#allocation11 + $0xd8] sm:$0xff]
    %v875 = vld [vmem:[#allocation11 + $0xe0] sm:$0xff]
    %v876 = vld [vmem:[#allocation11 + $0xe8] sm:$0xff]
    %v877 = vld [vmem:[#allocation11 + $0xf0] sm:$0xff]
    %v878 = vld [vmem:[#allocation11 + $0xf8] sm:$0xff]
    %v879 = vld [vmem:[#allocation13] sm:$0xf]
    %v881 = vlaneseq
    %v882 = vshrl.u32 %v881, 7
    %v883 = vsub.s32 0, %v882
    %v884 = vrot.slane %v879, %v883
    %v885 = vlaneseq
    %v886 = vshrl.u32 %v885, 7
    %v887 = vsub.s32 1, %v886
    %v888 = vrot.slane %v879, %v887
    %v889 = vlaneseq
    %v890 = vshrl.u32 %v889, 7
    %v891 = vsub.s32 2, %v890
    %v892 = vrot.slane %v879, %v891
    %v893 = vlaneseq
    %v894 = vshrl.u32 %v893, 7
    %v895 = vsub.s32 3, %v894
    %v896 = vrot.slane %v879, %v895
    %v933 = vunpack.c.l.b16 %v847
    %v934 = vunpack.c.h.b16 %v847
    %v935 = vunpack.c.l.b16 %v848
    %v936 = vunpack.c.h.b16 %v848
    %v937 = vunpack.c.l.b16 %v849
    %v938 = vunpack.c.h.b16 %v849
    %v939 = vunpack.c.l.b16 %v850
    %v940 = vunpack.c.h.b16 %v850
    %v941 = vunpack.c.l.b16 %v851
    %v942 = vunpack.c.h.b16 %v851
    %v943 = vunpack.c.l.b16 %v852
    %v944 = vunpack.c.h.b16 %v852
    %v945 = vunpack.c.l.b16 %v853
    %v946 = vunpack.c.h.b16 %v853
    %v947 = vunpack.c.l.b16 %v854
    %v948 = vunpack.c.h.b16 %v854
    %v949 = vunpack.c.l.b16 %v855
    %v950 = vunpack.c.h.b16 %v855
    %v951 = vunpack.c.l.b16 %v856
    %v952 = vunpack.c.h.b16 %v856
    %v953 = vunpack.c.l.b16 %v857
    %v954 = vunpack.c.h.b16 %v857
    %v955 = vunpack.c.l.b16 %v858
    %v956 = vunpack.c.h.b16 %v858
    %v957 = vunpack.c.l.b16 %v859
    %v958 = vunpack.c.h.b16 %v859
    %v959 = vunpack.c.l.b16 %v860
    %v960 = vunpack.c.h.b16 %v860
    %v961 = vunpack.c.l.b16 %v861
    %v962 = vunpack.c.h.b16 %v861
    %v963 = vunpack.c.l.b16 %v862
    %v964 = vunpack.c.h.b16 %v862
    %v965 = vunpack.c.l.b16 %v863
    %v966 = vunpack.c.h.b16 %v863
    %v967 = vunpack.c.l.b16 %v864
    %v968 = vunpack.c.h.b16 %v864
    %v969 = vunpack.c.l.b16 %v865
    %v970 = vunpack.c.h.b16 %v865
    %v971 = vunpack.c.l.b16 %v866
    %v972 = vunpack.c.h.b16 %v866
    %v973 = vunpack.c.l.b16 %v867
    %v974 = vunpack.c.h.b16 %v867
    %v975 = vunpack.c.l.b16 %v868
    %v976 = vunpack.c.h.b16 %v868
    %v977 = vunpack.c.l.b16 %v869
    %v978 = vunpack.c.h.b16 %v869
    %v979 = vunpack.c.l.b16 %v870
    %v980 = vunpack.c.h.b16 %v870
    %v981 = vunpack.c.l.b16 %v871
    %v982 = vunpack.c.h.b16 %v871
    %v983 = vunpack.c.l.b16 %v872
    %v984 = vunpack.c.h.b16 %v872
    %v985 = vunpack.c.l.b16 %v873
    %v986 = vunpack.c.h.b16 %v873
    %v987 = vunpack.c.l.b16 %v874
    %v988 = vunpack.c.h.b16 %v874
    %v989 = vunpack.c.l.b16 %v875
    %v990 = vunpack.c.h.b16 %v875
    %v991 = vunpack.c.l.b16 %v876
    %v992 = vunpack.c.h.b16 %v876
    %v993 = vunpack.c.l.b16 %v877
    %v994 = vunpack.c.h.b16 %v877
    %v995 = vunpack.c.l.b16 %v878
    %v996 = vunpack.c.h.b16 %v878
    %v997 = vpack.c.b16 %v937, %v933
    %v998 = vpack.c.b16 %v938, %v934
    %v999 = vpack.c.b16 %v939, %v935
    %v1000 = vpack.c.b16 %v940, %v936
    %v1001 = vpack.c.b16 %v945, %v941
    %v1002 = vpack.c.b16 %v946, %v942
    %v1003 = vpack.c.b16 %v947, %v943
    %v1004 = vpack.c.b16 %v948, %v944
    %v1005 = vpack.c.b16 %v953, %v949
    %v1006 = vpack.c.b16 %v954, %v950
    %v1007 = vpack.c.b16 %v955, %v951
    %v1008 = vpack.c.b16 %v956, %v952
    %v1009 = vpack.c.b16 %v961, %v957
    %v1010 = vpack.c.b16 %v962, %v958
    %v1011 = vpack.c.b16 %v963, %v959
    %v1012 = vpack.c.b16 %v964, %v960
    %v1013 = vpack.c.b16 %v969, %v965
    %v1014 = vpack.c.b16 %v970, %v966
    %v1015 = vpack.c.b16 %v971, %v967
    %v1016 = vpack.c.b16 %v972, %v968
    %v1017 = vpack.c.b16 %v977, %v973
    %v1018 = vpack.c.b16 %v978, %v974
    %v1019 = vpack.c.b16 %v979, %v975
    %v1020 = vpack.c.b16 %v980, %v976
    %v1021 = vpack.c.b16 %v985, %v981
    %v1022 = vpack.c.b16 %v986, %v982
    %v1023 = vpack.c.b16 %v987, %v983
    %v1024 = vpack.c.b16 %v988, %v984
    %v1025 = vpack.c.b16 %v993, %v989
    %v1026 = vpack.c.b16 %v994, %v990
    %v1027 = vpack.c.b16 %v995, %v991
    %v1028 = vpack.c.b16 %v996, %v992
    %1061 = vmatprep.subr.bf16.mxu0 %v998
    %1062 = vmatpush1.bf16.msra.mxu0 %v997
    %1063 = vmatprep.subr.bf16.mxu0 %v1002
    %1064 = vmatpush1.bf16.msra.mxu0 %v1001
    %1065 = vmatprep.subr.bf16.mxu0 %v1006
    %1066 = vmatpush1.bf16.msra.mxu0 %v1005
    %1067 = vmatprep.subr.bf16.mxu0 %v1010
    %1068 = vmatpush1.bf16.msra.mxu0 %v1009
    %1069 = vmatprep.subr.bf16.mxu0 %v1014
    %1070 = vmatpush1.bf16.msra.mxu0 %v1013
    %1071 = vmatprep.subr.bf16.mxu0 %v1018
    %1072 = vmatpush1.bf16.msra.mxu0 %v1017
    %1073 = vmatprep.subr.bf16.mxu0 %v1022
    %1074 = vmatpush1.bf16.msra.mxu0 %v1021
    %1075 = vmatprep.subr.bf16.mxu0 %v1026
    %1076 = vmatpush1.bf16.msra.mxu0 %v1025
    %1077 = vmatprep.subr.bf16.mxu0 0
    %1078 = vmatpush1.bf16.msra.mxu0 0
    %1079 = vmatprep.subr.bf16.mxu0 0
    %1080 = vmatpush1.bf16.msra.mxu0 0
    %1081 = vmatprep.subr.bf16.mxu0 0
    %1082 = vmatpush1.bf16.msra.mxu0 0
    %1083 = vmatprep.subr.bf16.mxu0 0
    %1084 = vmatpush1.bf16.msra.mxu0 0
    %1085 = vmatprep.subr.bf16.mxu0 0
    %1086 = vmatpush1.bf16.msra.mxu0 0
    %1087 = vmatprep.subr.bf16.mxu0 0
    %1088 = vmatpush1.bf16.msra.mxu0 0
    %1089 = vmatprep.subr.bf16.mxu0 0
    %1090 = vmatpush1.bf16.msra.mxu0 0
    %1091 = vmatprep.subr.bf16.mxu0 0
    %1092 = vmatpush1.bf16.msra.mxu0 0
    %1093 = vmatprep.mubr.bf16.mxu0 0
    %1094 = vmatmul.mubr.bf16.gmra.mrb[0].mxu0 %v831
    %v1095 = vpop.f32.mrb[0].mxu0
    %v1096 = vadd.f32 %v884, %v1095
    %v1097 = vpop.f32.mrb[0].mxu0
    %v1098 = vadd.f32 %v888, %v1097
    %v1099 = vpop.f32.mrb[0].mxu0
    %v1100 = vadd.f32 %v884, %v1099
    %v1101 = vpop.f32.mrb[0].mxu0
    %v1102 = vadd.f32 %v888, %v1101
    %1103 = vmatprep.mubr.bf16.mxu0 0
    %1104 = vmatmul.mubr.bf16.gmra.mrb[0].mxu0 %v832
    %v1105 = vpop.f32.mrb[0].mxu0
    %v1106 = vadd.f32 %v884, %v1105
    %v1107 = vpop.f32.mrb[0].mxu0
    %v1108 = vadd.f32 %v888, %v1107
    %v1109 = vpop.f32.mrb[0].mxu0
    %v1110 = vadd.f32 %v884, %v1109
    %v1111 = vpop.f32.mrb[0].mxu0
    %v1112 = vadd.f32 %v888, %v1111
    %1113 = vmatprep.mubr.bf16.mxu0 0
    %1114 = vmatmul.mubr.bf16.gmra.mrb[0].mxu0 %v833
    %v1115 = vpop.f32.mrb[0].mxu0
    %v1116 = vadd.f32 %v884, %v1115
    %v1117 = vpop.f32.mrb[0].mxu0
    %v1118 = vadd.f32 %v888, %v1117
    %v1119 = vpop.f32.mrb[0].mxu0
    %v1120 = vadd.f32 %v884, %v1119
    %v1121 = vpop.f32.mrb[0].mxu0
    %v1122 = vadd.f32 %v888, %v1121
    %1123 = vmatprep.mubr.bf16.mxu0 0
    %1124 = vmatmul.mubr.bf16.gmra.mrb[0].mxu0 %v834
    %v1125 = vpop.f32.mrb[0].mxu0
    %v1126 = vadd.f32 %v884, %v1125
    %v1127 = vpop.f32.mrb[0].mxu0
    %v1128 = vadd.f32 %v888, %v1127
    %v1129 = vpop.f32.mrb[0].mxu0
    %v1130 = vadd.f32 %v884, %v1129
    %v1131 = vpop.f32.mrb[0].mxu0
    %v1132 = vadd.f32 %v888, %v1131
    %1133 = vmatprep.mubr.bf16.mxu0 0
    %1134 = vmatmul.mubr.bf16.gmra.mrb[0].mxu0 %v835
    %v1135 = vpop.f32.mrb[0].mxu0
    %v1136 = vadd.f32 %v884, %v1135
    %v1137 = vpop.f32.mrb[0].mxu0
    %v1138 = vadd.f32 %v888, %v1137
    %v1139 = vpop.f32.mrb[0].mxu0
    %v1140 = vadd.f32 %v884, %v1139
    %v1141 = vpop.f32.mrb[0].mxu0
    %v1142 = vadd.f32 %v888, %v1141
    %1143 = vmatprep.mubr.bf16.mxu0 0
    %1144 = vmatmul.mubr.bf16.gmra.mrb[0].mxu0 %v836
    %v1145 = vpop.f32.mrb[0].mxu0
    %v1146 = vadd.f32 %v884, %v1145
    %v1147 = vpop.f32.mrb[0].mxu0
    %v1148 = vadd.f32 %v888, %v1147
    %v1149 = vpop.f32.mrb[0].mxu0
    %v1150 = vadd.f32 %v884, %v1149
    %v1151 = vpop.f32.mrb[0].mxu0
    %v1152 = vadd.f32 %v888, %v1151
    %1153 = vmatprep.mubr.bf16.mxu0 0
    %1154 = vmatmul.mubr.bf16.gmra.mrb[0].mxu0 %v837
    %v1155 = vpop.f32.mrb[0].mxu0
    %v1156 = vadd.f32 %v884, %v1155
    %v1157 = vpop.f32.mrb[0].mxu0
    %v1158 = vadd.f32 %v888, %v1157
    %v1159 = vpop.f32.mrb[0].mxu0
    %v1160 = vadd.f32 %v884, %v1159
    %v1161 = vpop.f32.mrb[0].mxu0
    %v1162 = vadd.f32 %v888, %v1161
    %1163 = vmatprep.mubr.bf16.mxu0 0
    %1164 = vmatmul.mubr.bf16.gmra.mrb[0].mxu0 %v838
    %v1165 = vpop.f32.mrb[0].mxu0
    %v1166 = vadd.f32 %v884, %v1165
    %v1167 = vpop.f32.mrb[0].mxu0
    %v1168 = vadd.f32 %v888, %v1167
    %v1169 = vpop.f32.mrb[0].mxu0
    %v1170 = vadd.f32 %v884, %v1169
    %v1171 = vpop.f32.mrb[0].mxu0
    %v1172 = vadd.f32 %v888, %v1171
    %1173 = vmatprep.mubr.bf16.mxu0 0
    %1174 = vmatmul.mubr.bf16.gmra.mrb[0].mxu0 %v839
    %v1175 = vpop.f32.mrb[0].mxu0
    %v1176 = vadd.f32 %v884, %v1175
    %v1177 = vpop.f32.mrb[0].mxu0
    %v1178 = vadd.f32 %v888, %v1177
    %v1179 = vpop.f32.mrb[0].mxu0
    %v1180 = vadd.f32 %v884, %v1179
    %v1181 = vpop.f32.mrb[0].mxu0
    %v1182 = vadd.f32 %v888, %v1181
    %1183 = vmatprep.mubr.bf16.mxu0 0
    %1184 = vmatmul.mubr.bf16.gmra.mrb[0].mxu0 %v840
    %v1185 = vpop.f32.mrb[0].mxu0
    %v1186 = vadd.f32 %v884, %v1185
    %v1187 = vpop.f32.mrb[0].mxu0
    %v1188 = vadd.f32 %v888, %v1187
    %v1189 = vpop.f32.mrb[0].mxu0
    %v1190 = vadd.f32 %v884, %v1189
    %v1191 = vpop.f32.mrb[0].mxu0
    %v1192 = vadd.f32 %v888, %v1191
    %1193 = vmatprep.mubr.bf16.mxu0 0
    %1194 = vmatmul.mubr.bf16.gmra.mrb[0].mxu0 %v841
    %v1195 = vpop.f32.mrb[0].mxu0
    %v1196 = vadd.f32 %v884, %v1195
    %v1197 = vpop.f32.mrb[0].mxu0
    %v1198 = vadd.f32 %v888, %v1197
    %v1199 = vpop.f32.mrb[0].mxu0
    %v1200 = vadd.f32 %v884, %v1199
    %v1201 = vpop.f32.mrb[0].mxu0
    %v1202 = vadd.f32 %v888, %v1201
    %1203 = vmatprep.mubr.bf16.mxu0 0
    %1204 = vmatmul.mubr.bf16.gmra.mrb[0].mxu0 %v842
    %v1205 = vpop.f32.mrb[0].mxu0
    %v1206 = vadd.f32 %v884, %v1205
    %v1207 = vpop.f32.mrb[0].mxu0
    %v1208 = vadd.f32 %v888, %v1207
    %v1209 = vpop.f32.mrb[0].mxu0
    %v1210 = vadd.f32 %v884, %v1209
    %v1211 = vpop.f32.mrb[0].mxu0
    %v1212 = vadd.f32 %v888, %v1211
    %1213 = vmatprep.mubr.bf16.mxu0 0
    %1214 = vmatmul.mubr.bf16.gmra.mrb[0].mxu0 %v843
    %v1215 = vpop.f32.mrb[0].mxu0
    %v1216 = vadd.f32 %v884, %v1215
    %v1217 = vpop.f32.mrb[0].mxu0
    %v1218 = vadd.f32 %v888, %v1217
    %v1219 = vpop.f32.mrb[0].mxu0
    %v1220 = vadd.f32 %v884, %v1219
    %v1221 = vpop.f32.mrb[0].mxu0
    %v1222 = vadd.f32 %v888, %v1221
    %1223 = vmatprep.mubr.bf16.mxu0 0
    %1224 = vmatmul.mubr.bf16.gmra.mrb[0].mxu0 %v844
    %v1225 = vpop.f32.mrb[0].mxu0
    %v1226 = vadd.f32 %v884, %v1225
    %v1227 = vpop.f32.mrb[0].mxu0
    %v1228 = vadd.f32 %v888, %v1227
    %v1229 = vpop.f32.mrb[0].mxu0
    %v1230 = vadd.f32 %v884, %v1229
    %v1231 = vpop.f32.mrb[0].mxu0
    %v1232 = vadd.f32 %v888, %v1231
    %1233 = vmatprep.mubr.bf16.mxu0 0
    %1234 = vmatmul.mubr.bf16.gmra.mrb[0].mxu0 %v845
    %v1235 = vpop.f32.mrb[0].mxu0
    %v1236 = vadd.f32 %v884, %v1235
    %v1237 = vpop.f32.mrb[0].mxu0
    %v1238 = vadd.f32 %v888, %v1237
    %v1239 = vpop.f32.mrb[0].mxu0
    %v1240 = vadd.f32 %v884, %v1239
    %v1241 = vpop.f32.mrb[0].mxu0
    %v1242 = vadd.f32 %v888, %v1241
    %1243 = vmatprep.mubr.bf16.mxu0 0
    %1244 = vmatmul.mubr.bf16.gmra.mrb[0].mxu0 %v846
    %v1245 = vpop.f32.mrb[0].mxu0
    %v1246 = vadd.f32 %v884, %v1245
    %v1247 = vpop.f32.mrb[0].mxu0
    %v1248 = vadd.f32 %v888, %v1247
    %v1249 = vpop.f32.mrb[0].mxu0
    %v1250 = vadd.f32 %v884, %v1249
    %v1251 = vpop.f32.mrb[0].mxu0
    %v1252 = vadd.f32 %v888, %v1251
    %1253 = vdwg.mxu0
    %1254 = vmatprep.subr.bf16.mxu0 %v1000
    %1255 = vmatpush1.bf16.msra.mxu0 %v999
    %1256 = vmatprep.subr.bf16.mxu0 %v1004
    %1257 = vmatpush1.bf16.msra.mxu0 %v1003
    %1258 = vmatprep.subr.bf16.mxu0 %v1008
    %1259 = vmatpush1.bf16.msra.mxu0 %v1007
    %1260 = vmatprep.subr.bf16.mxu0 %v1012
    %1261 = vmatpush1.bf16.msra.mxu0 %v1011
    %1262 = vmatprep.subr.bf16.mxu0 %v1016
    %1263 = vmatpush1.bf16.msra.mxu0 %v1015
    %1264 = vmatprep.subr.bf16.mxu0 %v1020
    %1265 = vmatpush1.bf16.msra.mxu0 %v1019
    %1266 = vmatprep.subr.bf16.mxu0 %v1024
    %1267 = vmatpush1.bf16.msra.mxu0 %v1023
    %1268 = vmatprep.subr.bf16.mxu0 %v1028
    %1269 = vmatpush1.bf16.msra.mxu0 %v1027
    %1270 = vmatprep.subr.bf16.mxu0 0
    %1271 = vmatpush1.bf16.msra.mxu0 0
    %1272 = vmatprep.subr.bf16.mxu0 0
    %1273 = vmatpush1.bf16.msra.mxu0 0
    %1274 = vmatprep.subr.bf16.mxu0 0
    %1275 = vmatpush1.bf16.msra.mxu0 0
    %1276 = vmatprep.subr.bf16.mxu0 0
    %1277 = vmatpush1.bf16.msra.mxu0 0
    %1278 = vmatprep.subr.bf16.mxu0 0
    %1279 = vmatpush1.bf16.msra.mxu0 0
    %1280 = vmatprep.subr.bf16.mxu0 0
    %1281 = vmatpush1.bf16.msra.mxu0 0
    %1282 = vmatprep.subr.bf16.mxu0 0
    %1283 = vmatpush1.bf16.msra.mxu0 0
    %1284 = vmatprep.subr.bf16.mxu0 0
    %1285 = vmatpush1.bf16.msra.mxu0 0
    %1286 = vmatprep.mubr.bf16.mxu0 0
    %1287 = vmatmul.mubr.bf16.gmra.mrb[0].mxu0 %v831
    %v1288 = vpop.f32.mrb[0].mxu0
    %v1289 = vadd.f32 %v892, %v1288
    %v1290 = vpop.f32.mrb[0].mxu0
    %v1291 = vadd.f32 %v896, %v1290
    %v1292 = vpop.f32.mrb[0].mxu0
    %v1293 = vadd.f32 %v892, %v1292
    %v1294 = vpop.f32.mrb[0].mxu0
    %v1295 = vadd.f32 %v896, %v1294
    %1296 = vmatprep.mubr.bf16.mxu0 0
    %1297 = vmatmul.mubr.bf16.gmra.mrb[0].mxu0 %v832
    %v1298 = vpop.f32.mrb[0].mxu0
    %v1299 = vadd.f32 %v892, %v1298
    %v1300 = vpop.f32.mrb[0].mxu0
    %v1301 = vadd.f32 %v896, %v1300
    %v1302 = vpop.f32.mrb[0].mxu0
    %v1303 = vadd.f32 %v892, %v1302
    %v1304 = vpop.f32.mrb[0].mxu0
    %v1305 = vadd.f32 %v896, %v1304
    %1306 = vmatprep.mubr.bf16.mxu0 0
    %1307 = vmatmul.mubr.bf16.gmra.mrb[0].mxu0 %v833
    %v1308 = vpop.f32.mrb[0].mxu0
    %v1309 = vadd.f32 %v892, %v1308
    %v1310 = vpop.f32.mrb[0].mxu0
    %v1311 = vadd.f32 %v896, %v1310
    %v1312 = vpop.f32.mrb[0].mxu0
    %v1313 = vadd.f32 %v892, %v1312
    %v1314 = vpop.f32.mrb[0].mxu0
    %v1315 = vadd.f32 %v896, %v1314
    %1316 = vmatprep.mubr.bf16.mxu0 0
    %1317 = vmatmul.mubr.bf16.gmra.mrb[0].mxu0 %v834
    %v1318 = vpop.f32.mrb[0].mxu0
    %v1319 = vadd.f32 %v892, %v1318
    %v1320 = vpop.f32.mrb[0].mxu0
    %v1321 = vadd.f32 %v896, %v1320
    %v1322 = vpop.f32.mrb[0].mxu0
    %v1323 = vadd.f32 %v892, %v1322
    %v1324 = vpop.f32.mrb[0].mxu0
    %v1325 = vadd.f32 %v896, %v1324
    %1326 = vmatprep.mubr.bf16.mxu0 0
    %1327 = vmatmul.mubr.bf16.gmra.mrb[0].mxu0 %v835
    %v1328 = vpop.f32.mrb[0].mxu0
    %v1329 = vadd.f32 %v892, %v1328
    %v1330 = vpop.f32.mrb[0].mxu0
    %v1331 = vadd.f32 %v896, %v1330
    %v1332 = vpop.f32.mrb[0].mxu0
    %v1333 = vadd.f32 %v892, %v1332
    %v1334 = vpop.f32.mrb[0].mxu0
    %v1335 = vadd.f32 %v896, %v1334
    %1336 = vmatprep.mubr.bf16.mxu0 0
    %1337 = vmatmul.mubr.bf16.gmra.mrb[0].mxu0 %v836
    %v1338 = vpop.f32.mrb[0].mxu0
    %v1339 = vadd.f32 %v892, %v1338
    %v1340 = vpop.f32.mrb[0].mxu0
    %v1341 = vadd.f32 %v896, %v1340
    %v1342 = vpop.f32.mrb[0].mxu0
    %v1343 = vadd.f32 %v892, %v1342
    %v1344 = vpop.f32.mrb[0].mxu0
    %v1345 = vadd.f32 %v896, %v1344
    %1346 = vmatprep.mubr.bf16.mxu0 0
    %1347 = vmatmul.mubr.bf16.gmra.mrb[0].mxu0 %v837
    %v1348 = vpop.f32.mrb[0].mxu0
    %v1349 = vadd.f32 %v892, %v1348
    %v1350 = vpop.f32.mrb[0].mxu0
    %v1351 = vadd.f32 %v896, %v1350
    %v1352 = vpop.f32.mrb[0].mxu0
    %v1353 = vadd.f32 %v892, %v1352
    %v1354 = vpop.f32.mrb[0].mxu0
    %v1355 = vadd.f32 %v896, %v1354
    %1356 = vmatprep.mubr.bf16.mxu0 0
    %1357 = vmatmul.mubr.bf16.gmra.mrb[0].mxu0 %v838
    %v1358 = vpop.f32.mrb[0].mxu0
    %v1359 = vadd.f32 %v892, %v1358
    %v1360 = vpop.f32.mrb[0].mxu0
    %v1361 = vadd.f32 %v896, %v1360
    %v1362 = vpop.f32.mrb[0].mxu0
    %v1363 = vadd.f32 %v892, %v1362
    %v1364 = vpop.f32.mrb[0].mxu0
    %v1365 = vadd.f32 %v896, %v1364
    %1366 = vmatprep.mubr.bf16.mxu0 0
    %1367 = vmatmul.mubr.bf16.gmra.mrb[0].mxu0 %v839
    %v1368 = vpop.f32.mrb[0].mxu0
    %v1369 = vadd.f32 %v892, %v1368
    %v1370 = vpop.f32.mrb[0].mxu0
    %v1371 = vadd.f32 %v896, %v1370
    %v1372 = vpop.f32.mrb[0].mxu0
    %v1373 = vadd.f32 %v892, %v1372
    %v1374 = vpop.f32.mrb[0].mxu0
    %v1375 = vadd.f32 %v896, %v1374
    %1376 = vmatprep.mubr.bf16.mxu0 0
    %1377 = vmatmul.mubr.bf16.gmra.mrb[0].mxu0 %v840
    %v1378 = vpop.f32.mrb[0].mxu0
    %v1379 = vadd.f32 %v892, %v1378
    %v1380 = vpop.f32.mrb[0].mxu0
    %v1381 = vadd.f32 %v896, %v1380
    %v1382 = vpop.f32.mrb[0].mxu0
    %v1383 = vadd.f32 %v892, %v1382
    %v1384 = vpop.f32.mrb[0].mxu0
    %v1385 = vadd.f32 %v896, %v1384
    %1386 = vmatprep.mubr.bf16.mxu0 0
    %1387 = vmatmul.mubr.bf16.gmra.mrb[0].mxu0 %v841
    %v1388 = vpop.f32.mrb[0].mxu0
    %v1389 = vadd.f32 %v892, %v1388
    %v1390 = vpop.f32.mrb[0].mxu0
    %v1391 = vadd.f32 %v896, %v1390
    %v1392 = vpop.f32.mrb[0].mxu0
    %v1393 = vadd.f32 %v892, %v1392
    %v1394 = vpop.f32.mrb[0].mxu0
    %v1395 = vadd.f32 %v896, %v1394
    %1396 = vmatprep.mubr.bf16.mxu0 0
    %1397 = vmatmul.mubr.bf16.gmra.mrb[0].mxu0 %v842
    %v1398 = vpop.f32.mrb[0].mxu0
    %v1399 = vadd.f32 %v892, %v1398
    %v1400 = vpop.f32.mrb[0].mxu0
    %v1401 = vadd.f32 %v896, %v1400
    %v1402 = vpop.f32.mrb[0].mxu0
    %v1403 = vadd.f32 %v892, %v1402
    %v1404 = vpop.f32.mrb[0].mxu0
    %v1405 = vadd.f32 %v896, %v1404
    %1406 = vmatprep.mubr.bf16.mxu0 0
    %1407 = vmatmul.mubr.bf16.gmra.mrb[0].mxu0 %v843
    %v1408 = vpop.f32.mrb[0].mxu0
    %v1409 = vadd.f32 %v892, %v1408
    %v1410 = vpop.f32.mrb[0].mxu0
    %v1411 = vadd.f32 %v896, %v1410
    %v1412 = vpop.f32.mrb[0].mxu0
    %v1413 = vadd.f32 %v892, %v1412
    %v1414 = vpop.f32.mrb[0].mxu0
    %v1415 = vadd.f32 %v896, %v1414
    %1416 = vmatprep.mubr.bf16.mxu0 0
    %1417 = vmatmul.mubr.bf16.gmra.mrb[0].mxu0 %v844
    %v1418 = vpop.f32.mrb[0].mxu0
    %v1419 = vadd.f32 %v892, %v1418
    %v1420 = vpop.f32.mrb[0].mxu0
    %v1421 = vadd.f32 %v896, %v1420
    %v1422 = vpop.f32.mrb[0].mxu0
    %v1423 = vadd.f32 %v892, %v1422
    %v1424 = vpop.f32.mrb[0].mxu0
    %v1425 = vadd.f32 %v896, %v1424
    %1426 = vmatprep.mubr.bf16.mxu0 0
    %1427 = vmatmul.mubr.bf16.gmra.mrb[0].mxu0 %v845
    %v1428 = vpop.f32.mrb[0].mxu0
    %v1429 = vadd.f32 %v892, %v1428
    %v1430 = vpop.f32.mrb[0].mxu0
    %v1431 = vadd.f32 %v896, %v1430
    %v1432 = vpop.f32.mrb[0].mxu0
    %v1433 = vadd.f32 %v892, %v1432
    %v1434 = vpop.f32.mrb[0].mxu0
    %v1435 = vadd.f32 %v896, %v1434
    %1436 = vmatprep.mubr.bf16.mxu0 0
    %1437 = vmatmul.mubr.bf16.gmra.mrb[0].mxu0 %v846
    %v1438 = vpop.f32.mrb[0].mxu0
    %v1439 = vadd.f32 %v892, %v1438
    %v1440 = vpop.f32.mrb[0].mxu0
    %v1441 = vadd.f32 %v896, %v1440
    %v1442 = vpop.f32.mrb[0].mxu0
    %v1443 = vadd.f32 %v892, %v1442
    %v1444 = vpop.f32.mrb[0].mxu0
    %v1445 = vadd.f32 %v896, %v1444
    %1446 = vdwg.mxu0
    %v1447 = vpack.c.bf16 %v1100, %v1096
    %v1448 = vpack.c.bf16 %v1102, %v1098
    %v1449 = vpack.c.bf16 %v1293, %v1289
    %v1450 = vpack.c.bf16 %v1295, %v1291
    %v1451 = vpack.c.bf16 %v1110, %v1106
    %v1452 = vpack.c.bf16 %v1112, %v1108
    %v1453 = vpack.c.bf16 %v1303, %v1299
    %v1454 = vpack.c.bf16 %v1305, %v1301
    %v1455 = vpack.c.bf16 %v1120, %v1116
    %v1456 = vpack.c.bf16 %v1122, %v1118
    %v1457 = vpack.c.bf16 %v1313, %v1309
    %v1458 = vpack.c.bf16 %v1315, %v1311
    %v1459 = vpack.c.bf16 %v1130, %v1126
    %v1460 = vpack.c.bf16 %v1132, %v1128
    %v1461 = vpack.c.bf16 %v1323, %v1319
    %v1462 = vpack.c.bf16 %v1325, %v1321
    %v1463 = vpack.c.bf16 %v1140, %v1136
    %v1464 = vpack.c.bf16 %v1142, %v1138
    %v1465 = vpack.c.bf16 %v1333, %v1329
    %v1466 = vpack.c.bf16 %v1335, %v1331
    %v1467 = vpack.c.bf16 %v1150, %v1146
    %v1468 = vpack.c.bf16 %v1152, %v1148
    %v1469 = vpack.c.bf16 %v1343, %v1339
    %v1470 = vpack.c.bf16 %v1345, %v1341
    %v1471 = vpack.c.bf16 %v1160, %v1156
    %v1472 = vpack.c.bf16 %v1162, %v1158
    %v1473 = vpack.c.bf16 %v1353, %v1349
    %v1474 = vpack.c.bf16 %v1355, %v1351
    %v1475 = vpack.c.bf16 %v1170, %v1166
    %v1476 = vpack.c.bf16 %v1172, %v1168
    %v1477 = vpack.c.bf16 %v1363, %v1359
    %v1478 = vpack.c.bf16 %v1365, %v1361
    %v1479 = vpack.c.bf16 %v1180, %v1176
    %v1480 = vpack.c.bf16 %v1182, %v1178
    %v1481 = vpack.c.bf16 %v1373, %v1369
    %v1482 = vpack.c.bf16 %v1375, %v1371
    %v1483 = vpack.c.bf16 %v1190, %v1186
    %v1484 = vpack.c.bf16 %v1192, %v1188
    %v1485 = vpack.c.bf16 %v1383, %v1379
    %v1486 = vpack.c.bf16 %v1385, %v1381
    %v1487 = vpack.c.bf16 %v1200, %v1196
    %v1488 = vpack.c.bf16 %v1202, %v1198
    %v1489 = vpack.c.bf16 %v1393, %v1389
    %v1490 = vpack.c.bf16 %v1395, %v1391
    %v1491 = vpack.c.bf16 %v1210, %v1206
    %v1492 = vpack.c.bf16 %v1212, %v1208
    %v1493 = vpack.c.bf16 %v1403, %v1399
    %v1494 = vpack.c.bf16 %v1405, %v1401
    %v1495 = vpack.c.bf16 %v1220, %v1216
    %v1496 = vpack.c.bf16 %v1222, %v1218
    %v1497 = vpack.c.bf16 %v1413, %v1409
    %v1498 = vpack.c.bf16 %v1415, %v1411
    %v1499 = vpack.c.bf16 %v1230, %v1226
    %v1500 = vpack.c.bf16 %v1232, %v1228
    %v1501 = vpack.c.bf16 %v1423, %v1419
    %v1502 = vpack.c.bf16 %v1425, %v1421
    %v1503 = vpack.c.bf16 %v1240, %v1236
    %v1504 = vpack.c.bf16 %v1242, %v1238
    %v1505 = vpack.c.bf16 %v1433, %v1429
    %v1506 = vpack.c.bf16 %v1435, %v1431
    %v1507 = vpack.c.bf16 %v1250, %v1246
    %v1508 = vpack.c.bf16 %v1252, %v1248
    %v1509 = vpack.c.bf16 %v1443, %v1439
    %v1510 = vpack.c.bf16 %v1445, %v1441
    %v1511 = vmax.bf16 %v1447, 0
    %v1512 = vmax.bf16 %v1448, 0
    %v1513 = vmax.bf16 %v1449, 0
    %v1514 = vmax.bf16 %v1450, 0
    %v1515 = vmax.bf16 %v1451, 0
    %v1516 = vmax.bf16 %v1452, 0
    %v1517 = vmax.bf16 %v1453, 0
    %v1518 = vmax.bf16 %v1454, 0
    %v1519 = vmax.bf16 %v1455, 0
    %v1520 = vmax.bf16 %v1456, 0
    %v1521 = vmax.bf16 %v1457, 0
    %v1522 = vmax.bf16 %v1458, 0
    %v1523 = vmax.bf16 %v1459, 0
    %v1524 = vmax.bf16 %v1460, 0
    %v1525 = vmax.bf16 %v1461, 0
    %v1526 = vmax.bf16 %v1462, 0
    %v1527 = vmax.bf16 %v1463, 0
    %v1528 = vmax.bf16 %v1464, 0
    %v1529 = vmax.bf16 %v1465, 0
    %v1530 = vmax.bf16 %v1466, 0
    %v1531 = vmax.bf16 %v1467, 0
    %v1532 = vmax.bf16 %v1468, 0
    %v1533 = vmax.bf16 %v1469, 0
    %v1534 = vmax.bf16 %v1470, 0
    %v1535 = vmax.bf16 %v1471, 0
    %v1536 = vmax.bf16 %v1472, 0
    %v1537 = vmax.bf16 %v1473, 0
    %v1538 = vmax.bf16 %v1474, 0
    %v1539 = vmax.bf16 %v1475, 0
    %v1540 = vmax.bf16 %v1476, 0
    %v1541 = vmax.bf16 %v1477, 0
    %v1542 = vmax.bf16 %v1478, 0
    %v1543 = vmax.bf16 %v1479, 0
    %v1544 = vmax.bf16 %v1480, 0
    %v1545 = vmax.bf16 %v1481, 0
    %v1546 = vmax.bf16 %v1482, 0
    %v1547 = vmax.bf16 %v1483, 0
    %v1548 = vmax.bf16 %v1484, 0
    %v1549 = vmax.bf16 %v1485, 0
    %v1550 = vmax.bf16 %v1486, 0
    %v1551 = vmax.bf16 %v1487, 0
    %v1552 = vmax.bf16 %v1488, 0
    %v1553 = vmax.bf16 %v1489, 0
    %v1554 = vmax.bf16 %v1490, 0
    %v1555 = vmax.bf16 %v1491, 0
    %v1556 = vmax.bf16 %v1492, 0
    %v1557 = vmax.bf16 %v1493, 0
    %v1558 = vmax.bf16 %v1494, 0
    %v1559 = vmax.bf16 %v1495, 0
    %v1560 = vmax.bf16 %v1496, 0
    %v1561 = vmax.bf16 %v1497, 0
    %v1562 = vmax.bf16 %v1498, 0
    %v1563 = vmax.bf16 %v1499, 0
    %v1564 = vmax.bf16 %v1500, 0
    %v1565 = vmax.bf16 %v1501, 0
    %v1566 = vmax.bf16 %v1502, 0
    %v1567 = vmax.bf16 %v1503, 0
    %v1568 = vmax.bf16 %v1504, 0
    %v1569 = vmax.bf16 %v1505, 0
    %v1570 = vmax.bf16 %v1506, 0
    %v1571 = vmax.bf16 %v1507, 0
    %v1572 = vmax.bf16 %v1508, 0
    %v1573 = vmax.bf16 %v1509, 0
    %v1574 = vmax.bf16 %v1510, 0
    %v1575 = vld [vmem:[#allocation14] sm:$0xff]
    %v1576 = vld [vmem:[#allocation14 + $0x8] sm:$0xff]
    %v1577 = vld [vmem:[#allocation14 + $0x10] sm:$0xff]
    %v1578 = vld [vmem:[#allocation14 + $0x18] sm:$0xff]
    %v1579 = vld [vmem:[#allocation14 + $0x20] sm:$0xff]
    %v1580 = vld [vmem:[#allocation14 + $0x28] sm:$0xff]
    %v1581 = vld [vmem:[#allocation14 + $0x30] sm:$0xff]
    %v1582 = vld [vmem:[#allocation14 + $0x38] sm:$0xff]
    %v1583 = vld [vmem:[#allocation14 + $0x40] sm:$0xff]
    %v1584 = vld [vmem:[#allocation14 + $0x48] sm:$0xff]
    %v1585 = vld [vmem:[#allocation14 + $0x50] sm:$0xff]
    %v1586 = vld [vmem:[#allocation14 + $0x58] sm:$0xff]
    %v1587 = vld [vmem:[#allocation14 + $0x60] sm:$0xff]
    %v1588 = vld [vmem:[#allocation14 + $0x68] sm:$0xff]
    %v1589 = vld [vmem:[#allocation14 + $0x70] sm:$0xff]
    %v1590 = vld [vmem:[#allocation14 + $0x78] sm:$0xff]
    %v1591 = vld [vmem:[#allocation14 + $0x80] sm:$0xff]
    %v1592 = vld [vmem:[#allocation14 + $0x88] sm:$0xff]
    %v1593 = vld [vmem:[#allocation14 + $0x90] sm:$0xff]
    %v1594 = vld [vmem:[#allocation14 + $0x98] sm:$0xff]
    %v1595 = vld [vmem:[#allocation14 + $0xa0] sm:$0xff]
    %v1596 = vld [vmem:[#allocation14 + $0xa8] sm:$0xff]
    %v1597 = vld [vmem:[#allocation14 + $0xb0] sm:$0xff]
    %v1598 = vld [vmem:[#allocation14 + $0xb8] sm:$0xff]
    %v1599 = vld [vmem:[#allocation14 + $0xc0] sm:$0xff]
    %v1600 = vld [vmem:[#allocation14 + $0xc8] sm:$0xff]
    %v1601 = vld [vmem:[#allocation14 + $0xd0] sm:$0xff]
    %v1602 = vld [vmem:[#allocation14 + $0xd8] sm:$0xff]
    %v1603 = vld [vmem:[#allocation14 + $0xe0] sm:$0xff]
    %v1604 = vld [vmem:[#allocation14 + $0xe8] sm:$0xff]
    %v1605 = vld [vmem:[#allocation14 + $0xf0] sm:$0xff]
    %v1606 = vld [vmem:[#allocation14 + $0xf8] sm:$0xff]
    %v1607 = vld [vmem:[#allocation14 + $0x100] sm:$0xff]
    %v1608 = vld [vmem:[#allocation14 + $0x108] sm:$0xff]
    %v1609 = vld [vmem:[#allocation14 + $0x110] sm:$0xff]
    %v1610 = vld [vmem:[#allocation14 + $0x118] sm:$0xff]
    %v1611 = vld [vmem:[#allocation14 + $0x120] sm:$0xff]
    %v1612 = vld [vmem:[#allocation14 + $0x128] sm:$0xff]
    %v1613 = vld [vmem:[#allocation14 + $0x130] sm:$0xff]
    %v1614 = vld [vmem:[#allocation14 + $0x138] sm:$0xff]
    %v1615 = vld [vmem:[#allocation14 + $0x140] sm:$0xff]
    %v1616 = vld [vmem:[#allocation14 + $0x148] sm:$0xff]
    %v1617 = vld [vmem:[#allocation14 + $0x150] sm:$0xff]
    %v1618 = vld [vmem:[#allocation14 + $0x158] sm:$0xff]
    %v1619 = vld [vmem:[#allocation14 + $0x160] sm:$0xff]
    %v1620 = vld [vmem:[#allocation14 + $0x168] sm:$0xff]
    %v1621 = vld [vmem:[#allocation14 + $0x170] sm:$0xff]
    %v1622 = vld [vmem:[#allocation14 + $0x178] sm:$0xff]
    %v1623 = vld [vmem:[#allocation14 + $0x180] sm:$0xff]
    %v1624 = vld [vmem:[#allocation14 + $0x188] sm:$0xff]
    %v1625 = vld [vmem:[#allocation14 + $0x190] sm:$0xff]
    %v1626 = vld [vmem:[#allocation14 + $0x198] sm:$0xff]
    %v1627 = vld [vmem:[#allocation14 + $0x1a0] sm:$0xff]
    %v1628 = vld [vmem:[#allocation14 + $0x1a8] sm:$0xff]
    %v1629 = vld [vmem:[#allocation14 + $0x1b0] sm:$0xff]
    %v1630 = vld [vmem:[#allocation14 + $0x1b8] sm:$0xff]
    %v1631 = vld [vmem:[#allocation14 + $0x1c0] sm:$0xff]
    %v1632 = vld [vmem:[#allocation14 + $0x1c8] sm:$0xff]
    %v1633 = vld [vmem:[#allocation14 + $0x1d0] sm:$0xff]
    %v1634 = vld [vmem:[#allocation14 + $0x1d8] sm:$0xff]
    %v1635 = vld [vmem:[#allocation14 + $0x1e0] sm:$0xff]
    %v1636 = vld [vmem:[#allocation14 + $0x1e8] sm:$0xff]
    %v1637 = vld [vmem:[#allocation14 + $0x1f0] sm:$0xff]
    %v1638 = vld [vmem:[#allocation14 + $0x1f8] sm:$0xff]
    %v1639 = vld [vmem:[#allocation14 + $0x200] sm:$0xff]
    %v1640 = vld [vmem:[#allocation14 + $0x208] sm:$0xff]
    %v1641 = vld [vmem:[#allocation14 + $0x210] sm:$0xff]
    %v1642 = vld [vmem:[#allocation14 + $0x218] sm:$0xff]
    %v1643 = vld [vmem:[#allocation14 + $0x220] sm:$0xff]
    %v1644 = vld [vmem:[#allocation14 + $0x228] sm:$0xff]
    %v1645 = vld [vmem:[#allocation14 + $0x230] sm:$0xff]
    %v1646 = vld [vmem:[#allocation14 + $0x238] sm:$0xff]
    %v1647 = vld [vmem:[#allocation14 + $0x240] sm:$0xff]
    %v1648 = vld [vmem:[#allocation14 + $0x248] sm:$0xff]
    %v1649 = vld [vmem:[#allocation14 + $0x250] sm:$0xff]
    %v1650 = vld [vmem:[#allocation14 + $0x258] sm:$0xff]
    %v1651 = vld [vmem:[#allocation14 + $0x260] sm:$0xff]
    %v1652 = vld [vmem:[#allocation14 + $0x268] sm:$0xff]
    %v1653 = vld [vmem:[#allocation14 + $0x270] sm:$0xff]
    %v1654 = vld [vmem:[#allocation14 + $0x278] sm:$0xff]
    %v1655 = vld [vmem:[#allocation14 + $0x280] sm:$0xff]
    %v1656 = vld [vmem:[#allocation14 + $0x288] sm:$0xff]
    %v1657 = vld [vmem:[#allocation14 + $0x290] sm:$0xff]
    %v1658 = vld [vmem:[#allocation14 + $0x298] sm:$0xff]
    %v1659 = vld [vmem:[#allocation14 + $0x2a0] sm:$0xff]
    %v1660 = vld [vmem:[#allocation14 + $0x2a8] sm:$0xff]
    %v1661 = vld [vmem:[#allocation14 + $0x2b0] sm:$0xff]
    %v1662 = vld [vmem:[#allocation14 + $0x2b8] sm:$0xff]
    %v1663 = vld [vmem:[#allocation14 + $0x2c0] sm:$0xff]
    %v1664 = vld [vmem:[#allocation14 + $0x2c8] sm:$0xff]
    %v1665 = vld [vmem:[#allocation14 + $0x2d0] sm:$0xff]
    %v1666 = vld [vmem:[#allocation14 + $0x2d8] sm:$0xff]
    %v1667 = vld [vmem:[#allocation14 + $0x2e0] sm:$0xff]
    %v1668 = vld [vmem:[#allocation14 + $0x2e8] sm:$0xff]
    %v1669 = vld [vmem:[#allocation14 + $0x2f0] sm:$0xff]
    %v1670 = vld [vmem:[#allocation14 + $0x2f8] sm:$0xff]
    %v1671 = vld [vmem:[#allocation14 + $0x300] sm:$0xff]
    %v1672 = vld [vmem:[#allocation14 + $0x308] sm:$0xff]
    %v1673 = vld [vmem:[#allocation14 + $0x310] sm:$0xff]
    %v1674 = vld [vmem:[#allocation14 + $0x318] sm:$0xff]
    %v1675 = vld [vmem:[#allocation14 + $0x320] sm:$0xff]
    %v1676 = vld [vmem:[#allocation14 + $0x328] sm:$0xff]
    %v1677 = vld [vmem:[#allocation14 + $0x330] sm:$0xff]
    %v1678 = vld [vmem:[#allocation14 + $0x338] sm:$0xff]
    %v1679 = vld [vmem:[#allocation14 + $0x340] sm:$0xff]
    %v1680 = vld [vmem:[#allocation14 + $0x348] sm:$0xff]
    %v1681 = vld [vmem:[#allocation14 + $0x350] sm:$0xff]
    %v1682 = vld [vmem:[#allocation14 + $0x358] sm:$0xff]
    %v1683 = vld [vmem:[#allocation14 + $0x360] sm:$0xff]
    %v1684 = vld [vmem:[#allocation14 + $0x368] sm:$0xff]
    %v1685 = vld [vmem:[#allocation14 + $0x370] sm:$0xff]
    %v1686 = vld [vmem:[#allocation14 + $0x378] sm:$0xff]
    %v1687 = vld [vmem:[#allocation14 + $0x380] sm:$0xff]
    %v1688 = vld [vmem:[#allocation14 + $0x388] sm:$0xff]
    %v1689 = vld [vmem:[#allocation14 + $0x390] sm:$0xff]
    %v1690 = vld [vmem:[#allocation14 + $0x398] sm:$0xff]
    %v1691 = vld [vmem:[#allocation14 + $0x3a0] sm:$0xff]
    %v1692 = vld [vmem:[#allocation14 + $0x3a8] sm:$0xff]
    %v1693 = vld [vmem:[#allocation14 + $0x3b0] sm:$0xff]
    %v1694 = vld [vmem:[#allocation14 + $0x3b8] sm:$0xff]
    %v1695 = vld [vmem:[#allocation14 + $0x3c0] sm:$0xff]
    %v1696 = vld [vmem:[#allocation14 + $0x3c8] sm:$0xff]
    %v1697 = vld [vmem:[#allocation14 + $0x3d0] sm:$0xff]
    %v1698 = vld [vmem:[#allocation14 + $0x3d8] sm:$0xff]
    %v1699 = vld [vmem:[#allocation14 + $0x3e0] sm:$0xff]
    %v1700 = vld [vmem:[#allocation14 + $0x3e8] sm:$0xff]
    %v1701 = vld [vmem:[#allocation14 + $0x3f0] sm:$0xff]
    %v1702 = vld [vmem:[#allocation14 + $0x3f8] sm:$0xff]
    %v1703 = vld [vmem:[#allocation14 + $0x400] sm:$0xff]
    %v1704 = vld [vmem:[#allocation14 + $0x408] sm:$0xff]
    %v1705 = vld [vmem:[#allocation14 + $0x410] sm:$0xff]
    %v1706 = vld [vmem:[#allocation14 + $0x418] sm:$0xff]
    %v1707 = vld [vmem:[#allocation14 + $0x420] sm:$0xff]
    %v1708 = vld [vmem:[#allocation14 + $0x428] sm:$0xff]
    %v1709 = vld [vmem:[#allocation14 + $0x430] sm:$0xff]
    %v1710 = vld [vmem:[#allocation14 + $0x438] sm:$0xff]
    %v1711 = vld [vmem:[#allocation14 + $0x440] sm:$0xff]
    %v1712 = vld [vmem:[#allocation14 + $0x448] sm:$0xff]
    %v1713 = vld [vmem:[#allocation14 + $0x450] sm:$0xff]
    %v1714 = vld [vmem:[#allocation14 + $0x458] sm:$0xff]
    %v1715 = vld [vmem:[#allocation14 + $0x460] sm:$0xff]
    %v1716 = vld [vmem:[#allocation14 + $0x468] sm:$0xff]
    %v1717 = vld [vmem:[#allocation14 + $0x470] sm:$0xff]
    %v1718 = vld [vmem:[#allocation14 + $0x478] sm:$0xff]
    %v1719 = vld [vmem:[#allocation14 + $0x480] sm:$0xff]
    %v1720 = vld [vmem:[#allocation14 + $0x488] sm:$0xff]
    %v1721 = vld [vmem:[#allocation14 + $0x490] sm:$0xff]
    %v1722 = vld [vmem:[#allocation14 + $0x498] sm:$0xff]
    %v1723 = vld [vmem:[#allocation14 + $0x4a0] sm:$0xff]
    %v1724 = vld [vmem:[#allocation14 + $0x4a8] sm:$0xff]
    %v1725 = vld [vmem:[#allocation14 + $0x4b0] sm:$0xff]
    %v1726 = vld [vmem:[#allocation14 + $0x4b8] sm:$0xff]
    %v1727 = vld [vmem:[#allocation14 + $0x4c0] sm:$0xff]
    %v1728 = vld [vmem:[#allocation14 + $0x4c8] sm:$0xff]
    %v1729 = vld [vmem:[#allocation14 + $0x4d0] sm:$0xff]
    %v1730 = vld [vmem:[#allocation14 + $0x4d8] sm:$0xff]
    %v1731 = vld [vmem:[#allocation14 + $0x4e0] sm:$0xff]
    %v1732 = vld [vmem:[#allocation14 + $0x4e8] sm:$0xff]
    %v1733 = vld [vmem:[#allocation14 + $0x4f0] sm:$0xff]
    %v1734 = vld [vmem:[#allocation14 + $0x4f8] sm:$0xff]
    %v1735 = vld [vmem:[#allocation14 + $0x500] sm:$0xff]
    %v1736 = vld [vmem:[#allocation14 + $0x508] sm:$0xff]
    %v1737 = vld [vmem:[#allocation14 + $0x510] sm:$0xff]
    %v1738 = vld [vmem:[#allocation14 + $0x518] sm:$0xff]
    %v1739 = vld [vmem:[#allocation14 + $0x520] sm:$0xff]
    %v1740 = vld [vmem:[#allocation14 + $0x528] sm:$0xff]
    %v1741 = vld [vmem:[#allocation14 + $0x530] sm:$0xff]
    %v1742 = vld [vmem:[#allocation14 + $0x538] sm:$0xff]
    %v1743 = vld [vmem:[#allocation14 + $0x540] sm:$0xff]
    %v1744 = vld [vmem:[#allocation14 + $0x548] sm:$0xff]
    %v1745 = vld [vmem:[#allocation14 + $0x550] sm:$0xff]
    %v1746 = vld [vmem:[#allocation14 + $0x558] sm:$0xff]
    %v1747 = vld [vmem:[#allocation14 + $0x560] sm:$0xff]
    %v1748 = vld [vmem:[#allocation14 + $0x568] sm:$0xff]
    %v1749 = vld [vmem:[#allocation14 + $0x570] sm:$0xff]
    %v1750 = vld [vmem:[#allocation14 + $0x578] sm:$0xff]
    %v1751 = vld [vmem:[#allocation14 + $0x580] sm:$0xff]
    %v1752 = vld [vmem:[#allocation14 + $0x588] sm:$0xff]
    %v1753 = vld [vmem:[#allocation14 + $0x590] sm:$0xff]
    %v1754 = vld [vmem:[#allocation14 + $0x598] sm:$0xff]
    %v1755 = vld [vmem:[#allocation14 + $0x5a0] sm:$0xff]
    %v1756 = vld [vmem:[#allocation14 + $0x5a8] sm:$0xff]
    %v1757 = vld [vmem:[#allocation14 + $0x5b0] sm:$0xff]
    %v1758 = vld [vmem:[#allocation14 + $0x5b8] sm:$0xff]
    %v1759 = vld [vmem:[#allocation14 + $0x5c0] sm:$0xff]
    %v1760 = vld [vmem:[#allocation14 + $0x5c8] sm:$0xff]
    %v1761 = vld [vmem:[#allocation14 + $0x5d0] sm:$0xff]
    %v1762 = vld [vmem:[#allocation14 + $0x5d8] sm:$0xff]
    %v1763 = vld [vmem:[#allocation14 + $0x5e0] sm:$0xff]
    %v1764 = vld [vmem:[#allocation14 + $0x5e8] sm:$0xff]
    %v1765 = vld [vmem:[#allocation14 + $0x5f0] sm:$0xff]
    %v1766 = vld [vmem:[#allocation14 + $0x5f8] sm:$0xff]
    %v1767 = vld [vmem:[#allocation14 + $0x600] sm:$0xff]
    %v1768 = vld [vmem:[#allocation14 + $0x608] sm:$0xff]
    %v1769 = vld [vmem:[#allocation14 + $0x610] sm:$0xff]
    %v1770 = vld [vmem:[#allocation14 + $0x618] sm:$0xff]
    %v1771 = vld [vmem:[#allocation14 + $0x620] sm:$0xff]
    %v1772 = vld [vmem:[#allocation14 + $0x628] sm:$0xff]
    %v1773 = vld [vmem:[#allocation14 + $0x630] sm:$0xff]
    %v1774 = vld [vmem:[#allocation14 + $0x638] sm:$0xff]
    %v1775 = vld [vmem:[#allocation14 + $0x640] sm:$0xff]
    %v1776 = vld [vmem:[#allocation14 + $0x648] sm:$0xff]
    %v1777 = vld [vmem:[#allocation14 + $0x650] sm:$0xff]
    %v1778 = vld [vmem:[#allocation14 + $0x658] sm:$0xff]
    %v1779 = vld [vmem:[#allocation14 + $0x660] sm:$0xff]
    %v1780 = vld [vmem:[#allocation14 + $0x668] sm:$0xff]
    %v1781 = vld [vmem:[#allocation14 + $0x670] sm:$0xff]
    %v1782 = vld [vmem:[#allocation14 + $0x678] sm:$0xff]
    %v1783 = vld [vmem:[#allocation14 + $0x680] sm:$0xff]
    %v1784 = vld [vmem:[#allocation14 + $0x688] sm:$0xff]
    %v1785 = vld [vmem:[#allocation14 + $0x690] sm:$0xff]
    %v1786 = vld [vmem:[#allocation14 + $0x698] sm:$0xff]
    %v1787 = vld [vmem:[#allocation14 + $0x6a0] sm:$0xff]
    %v1788 = vld [vmem:[#allocation14 + $0x6a8] sm:$0xff]
    %v1789 = vld [vmem:[#allocation14 + $0x6b0] sm:$0xff]
    %v1790 = vld [vmem:[#allocation14 + $0x6b8] sm:$0xff]
    %v1791 = vld [vmem:[#allocation14 + $0x6c0] sm:$0xff]
    %v1792 = vld [vmem:[#allocation14 + $0x6c8] sm:$0xff]
    %v1793 = vld [vmem:[#allocation14 + $0x6d0] sm:$0xff]
    %v1794 = vld [vmem:[#allocation14 + $0x6d8] sm:$0xff]
    %v1795 = vld [vmem:[#allocation14 + $0x6e0] sm:$0xff]
    %v1796 = vld [vmem:[#allocation14 + $0x6e8] sm:$0xff]
    %v1797 = vld [vmem:[#allocation14 + $0x6f0] sm:$0xff]
    %v1798 = vld [vmem:[#allocation14 + $0x6f8] sm:$0xff]
    %v1799 = vld [vmem:[#allocation14 + $0x700] sm:$0xff]
    %v1800 = vld [vmem:[#allocation14 + $0x708] sm:$0xff]
    %v1801 = vld [vmem:[#allocation14 + $0x710] sm:$0xff]
    %v1802 = vld [vmem:[#allocation14 + $0x718] sm:$0xff]
    %v1803 = vld [vmem:[#allocation14 + $0x720] sm:$0xff]
    %v1804 = vld [vmem:[#allocation14 + $0x728] sm:$0xff]
    %v1805 = vld [vmem:[#allocation14 + $0x730] sm:$0xff]
    %v1806 = vld [vmem:[#allocation14 + $0x738] sm:$0xff]
    %v1807 = vld [vmem:[#allocation14 + $0x740] sm:$0xff]
    %v1808 = vld [vmem:[#allocation14 + $0x748] sm:$0xff]
    %v1809 = vld [vmem:[#allocation14 + $0x750] sm:$0xff]
    %v1810 = vld [vmem:[#allocation14 + $0x758] sm:$0xff]
    %v1811 = vld [vmem:[#allocation14 + $0x760] sm:$0xff]
    %v1812 = vld [vmem:[#allocation14 + $0x768] sm:$0xff]
    %v1813 = vld [vmem:[#allocation14 + $0x770] sm:$0xff]
    %v1814 = vld [vmem:[#allocation14 + $0x778] sm:$0xff]
    %v1815 = vld [vmem:[#allocation14 + $0x780] sm:$0xff]
    %v1816 = vld [vmem:[#allocation14 + $0x788] sm:$0xff]
    %v1817 = vld [vmem:[#allocation14 + $0x790] sm:$0xff]
    %v1818 = vld [vmem:[#allocation14 + $0x798] sm:$0xff]
    %v1819 = vld [vmem:[#allocation14 + $0x7a0] sm:$0xff]
    %v1820 = vld [vmem:[#allocation14 + $0x7a8] sm:$0xff]
    %v1821 = vld [vmem:[#allocation14 + $0x7b0] sm:$0xff]
    %v1822 = vld [vmem:[#allocation14 + $0x7b8] sm:$0xff]
    %v1823 = vld [vmem:[#allocation14 + $0x7c0] sm:$0xff]
    %v1824 = vld [vmem:[#allocation14 + $0x7c8] sm:$0xff]
    %v1825 = vld [vmem:[#allocation14 + $0x7d0] sm:$0xff]
    %v1826 = vld [vmem:[#allocation14 + $0x7d8] sm:$0xff]
    %v1827 = vld [vmem:[#allocation14 + $0x7e0] sm:$0xff]
    %v1828 = vld [vmem:[#allocation14 + $0x7e8] sm:$0xff]
    %v1829 = vld [vmem:[#allocation14 + $0x7f0] sm:$0xff]
    %v1830 = vld [vmem:[#allocation14 + $0x7f8] sm:$0xff]
    %v2087 = vunpack.c.l.b16 %v1575
    %v2088 = vunpack.c.h.b16 %v1575
    %v2089 = vunpack.c.l.b16 %v1576
    %v2090 = vunpack.c.h.b16 %v1576
    %v2091 = vunpack.c.l.b16 %v1577
    %v2092 = vunpack.c.h.b16 %v1577
    %v2093 = vunpack.c.l.b16 %v1578
    %v2094 = vunpack.c.h.b16 %v1578
    %v2095 = vunpack.c.l.b16 %v1579
    %v2096 = vunpack.c.h.b16 %v1579
    %v2097 = vunpack.c.l.b16 %v1580
    %v2098 = vunpack.c.h.b16 %v1580
    %v2099 = vunpack.c.l.b16 %v1581
    %v2100 = vunpack.c.h.b16 %v1581
    %v2101 = vunpack.c.l.b16 %v1582
    %v2102 = vunpack.c.h.b16 %v1582
    %v2103 = vunpack.c.l.b16 %v1583
    %v2104 = vunpack.c.h.b16 %v1583
    %v2105 = vunpack.c.l.b16 %v1584
    %v2106 = vunpack.c.h.b16 %v1584
    %v2107 = vunpack.c.l.b16 %v1585
    %v2108 = vunpack.c.h.b16 %v1585
    %v2109 = vunpack.c.l.b16 %v1586
    %v2110 = vunpack.c.h.b16 %v1586
    %v2111 = vunpack.c.l.b16 %v1587
    %v2112 = vunpack.c.h.b16 %v1587
    %v2113 = vunpack.c.l.b16 %v1588
    %v2114 = vunpack.c.h.b16 %v1588
    %v2115 = vunpack.c.l.b16 %v1589
    %v2116 = vunpack.c.h.b16 %v1589
    %v2117 = vunpack.c.l.b16 %v1590
    %v2118 = vunpack.c.h.b16 %v1590
    %v2119 = vunpack.c.l.b16 %v1591
    %v2120 = vunpack.c.h.b16 %v1591
    %v2121 = vunpack.c.l.b16 %v1592
    %v2122 = vunpack.c.h.b16 %v1592
    %v2123 = vunpack.c.l.b16 %v1593
    %v2124 = vunpack.c.h.b16 %v1593
    %v2125 = vunpack.c.l.b16 %v1594
    %v2126 = vunpack.c.h.b16 %v1594
    %v2127 = vunpack.c.l.b16 %v1595
    %v2128 = vunpack.c.h.b16 %v1595
    %v2129 = vunpack.c.l.b16 %v1596
    %v2130 = vunpack.c.h.b16 %v1596
    %v2131 = vunpack.c.l.b16 %v1597
    %v2132 = vunpack.c.h.b16 %v1597
    %v2133 = vunpack.c.l.b16 %v1598
    %v2134 = vunpack.c.h.b16 %v1598
    %v2135 = vunpack.c.l.b16 %v1599
    %v2136 = vunpack.c.h.b16 %v1599
    %v2137 = vunpack.c.l.b16 %v1600
    %v2138 = vunpack.c.h.b16 %v1600
    %v2139 = vunpack.c.l.b16 %v1601
    %v2140 = vunpack.c.h.b16 %v1601
    %v2141 = vunpack.c.l.b16 %v1602
    %v2142 = vunpack.c.h.b16 %v1602
    %v2143 = vunpack.c.l.b16 %v1603
    %v2144 = vunpack.c.h.b16 %v1603
    %v2145 = vunpack.c.l.b16 %v1604
    %v2146 = vunpack.c.h.b16 %v1604
    %v2147 = vunpack.c.l.b16 %v1605
    %v2148 = vunpack.c.h.b16 %v1605
    %v2149 = vunpack.c.l.b16 %v1606
    %v2150 = vunpack.c.h.b16 %v1606
    %v2151 = vunpack.c.l.b16 %v1607
    %v2152 = vunpack.c.h.b16 %v1607
    %v2153 = vunpack.c.l.b16 %v1608
    %v2154 = vunpack.c.h.b16 %v1608
    %v2155 = vunpack.c.l.b16 %v1609
    %v2156 = vunpack.c.h.b16 %v1609
    %v2157 = vunpack.c.l.b16 %v1610
    %v2158 = vunpack.c.h.b16 %v1610
    %v2159 = vunpack.c.l.b16 %v1611
    %v2160 = vunpack.c.h.b16 %v1611
    %v2161 = vunpack.c.l.b16 %v1612
    %v2162 = vunpack.c.h.b16 %v1612
    %v2163 = vunpack.c.l.b16 %v1613
    %v2164 = vunpack.c.h.b16 %v1613
    %v2165 = vunpack.c.l.b16 %v1614
    %v2166 = vunpack.c.h.b16 %v1614
    %v2167 = vunpack.c.l.b16 %v1615
    %v2168 = vunpack.c.h.b16 %v1615
    %v2169 = vunpack.c.l.b16 %v1616
    %v2170 = vunpack.c.h.b16 %v1616
    %v2171 = vunpack.c.l.b16 %v1617
    %v2172 = vunpack.c.h.b16 %v1617
    %v2173 = vunpack.c.l.b16 %v1618
    %v2174 = vunpack.c.h.b16 %v1618
    %v2175 = vunpack.c.l.b16 %v1619
    %v2176 = vunpack.c.h.b16 %v1619
    %v2177 = vunpack.c.l.b16 %v1620
    %v2178 = vunpack.c.h.b16 %v1620
    %v2179 = vunpack.c.l.b16 %v1621
    %v2180 = vunpack.c.h.b16 %v1621
    %v2181 = vunpack.c.l.b16 %v1622
    %v2182 = vunpack.c.h.b16 %v1622
    %v2183 = vunpack.c.l.b16 %v1623
    %v2184 = vunpack.c.h.b16 %v1623
    %v2185 = vunpack.c.l.b16 %v1624
    %v2186 = vunpack.c.h.b16 %v1624
    %v2187 = vunpack.c.l.b16 %v1625
    %v2188 = vunpack.c.h.b16 %v1625
    %v2189 = vunpack.c.l.b16 %v1626
    %v2190 = vunpack.c.h.b16 %v1626
    %v2191 = vunpack.c.l.b16 %v1627
    %v2192 = vunpack.c.h.b16 %v1627
    %v2193 = vunpack.c.l.b16 %v1628
    %v2194 = vunpack.c.h.b16 %v1628
    %v2195 = vunpack.c.l.b16 %v1629
    %v2196 = vunpack.c.h.b16 %v1629
    %v2197 = vunpack.c.l.b16 %v1630
    %v2198 = vunpack.c.h.b16 %v1630
    %v2199 = vunpack.c.l.b16 %v1631
    %v2200 = vunpack.c.h.b16 %v1631
    %v2201 = vunpack.c.l.b16 %v1632
    %v2202 = vunpack.c.h.b16 %v1632
    %v2203 = vunpack.c.l.b16 %v1633
    %v2204 = vunpack.c.h.b16 %v1633
    %v2205 = vunpack.c.l.b16 %v1634
    %v2206 = vunpack.c.h.b16 %v1634
    %v2207 = vunpack.c.l.b16 %v1635
    %v2208 = vunpack.c.h.b16 %v1635
    %v2209 = vunpack.c.l.b16 %v1636
    %v2210 = vunpack.c.h.b16 %v1636
    %v2211 = vunpack.c.l.b16 %v1637
    %v2212 = vunpack.c.h.b16 %v1637
    %v2213 = vunpack.c.l.b16 %v1638
    %v2214 = vunpack.c.h.b16 %v1638
    %v2215 = vunpack.c.l.b16 %v1639
    %v2216 = vunpack.c.h.b16 %v1639
    %v2217 = vunpack.c.l.b16 %v1640
    %v2218 = vunpack.c.h.b16 %v1640
    %v2219 = vunpack.c.l.b16 %v1641
    %v2220 = vunpack.c.h.b16 %v1641
    %v2221 = vunpack.c.l.b16 %v1642
    %v2222 = vunpack.c.h.b16 %v1642
    %v2223 = vunpack.c.l.b16 %v1643
    %v2224 = vunpack.c.h.b16 %v1643
    %v2225 = vunpack.c.l.b16 %v1644
    %v2226 = vunpack.c.h.b16 %v1644
    %v2227 = vunpack.c.l.b16 %v1645
    %v2228 = vunpack.c.h.b16 %v1645
    %v2229 = vunpack.c.l.b16 %v1646
    %v2230 = vunpack.c.h.b16 %v1646
    %v2231 = vunpack.c.l.b16 %v1647
    %v2232 = vunpack.c.h.b16 %v1647
    %v2233 = vunpack.c.l.b16 %v1648
    %v2234 = vunpack.c.h.b16 %v1648
    %v2235 = vunpack.c.l.b16 %v1649
    %v2236 = vunpack.c.h.b16 %v1649
    %v2237 = vunpack.c.l.b16 %v1650
    %v2238 = vunpack.c.h.b16 %v1650
    %v2239 = vunpack.c.l.b16 %v1651
    %v2240 = vunpack.c.h.b16 %v1651
    %v2241 = vunpack.c.l.b16 %v1652
    %v2242 = vunpack.c.h.b16 %v1652
    %v2243 = vunpack.c.l.b16 %v1653
    %v2244 = vunpack.c.h.b16 %v1653
    %v2245 = vunpack.c.l.b16 %v1654
    %v2246 = vunpack.c.h.b16 %v1654
    %v2247 = vunpack.c.l.b16 %v1655
    %v2248 = vunpack.c.h.b16 %v1655
    %v2249 = vunpack.c.l.b16 %v1656
    %v2250 = vunpack.c.h.b16 %v1656
    %v2251 = vunpack.c.l.b16 %v1657
    %v2252 = vunpack.c.h.b16 %v1657
    %v2253 = vunpack.c.l.b16 %v1658
    %v2254 = vunpack.c.h.b16 %v1658
    %v2255 = vunpack.c.l.b16 %v1659
    %v2256 = vunpack.c.h.b16 %v1659
    %v2257 = vunpack.c.l.b16 %v1660
    %v2258 = vunpack.c.h.b16 %v1660
    %v2259 = vunpack.c.l.b16 %v1661
    %v2260 = vunpack.c.h.b16 %v1661
    %v2261 = vunpack.c.l.b16 %v1662
    %v2262 = vunpack.c.h.b16 %v1662
    %v2263 = vunpack.c.l.b16 %v1663
    %v2264 = vunpack.c.h.b16 %v1663
    %v2265 = vunpack.c.l.b16 %v1664
    %v2266 = vunpack.c.h.b16 %v1664
    %v2267 = vunpack.c.l.b16 %v1665
    %v2268 = vunpack.c.h.b16 %v1665
    %v2269 = vunpack.c.l.b16 %v1666
    %v2270 = vunpack.c.h.b16 %v1666
    %v2271 = vunpack.c.l.b16 %v1667
    %v2272 = vunpack.c.h.b16 %v1667
    %v2273 = vunpack.c.l.b16 %v1668
    %v2274 = vunpack.c.h.b16 %v1668
    %v2275 = vunpack.c.l.b16 %v1669
    %v2276 = vunpack.c.h.b16 %v1669
    %v2277 = vunpack.c.l.b16 %v1670
    %v2278 = vunpack.c.h.b16 %v1670
    %v2279 = vunpack.c.l.b16 %v1671
    %v2280 = vunpack.c.h.b16 %v1671
    %v2281 = vunpack.c.l.b16 %v1672
    %v2282 = vunpack.c.h.b16 %v1672
    %v2283 = vunpack.c.l.b16 %v1673
    %v2284 = vunpack.c.h.b16 %v1673
    %v2285 = vunpack.c.l.b16 %v1674
    %v2286 = vunpack.c.h.b16 %v1674
    %v2287 = vunpack.c.l.b16 %v1675
    %v2288 = vunpack.c.h.b16 %v1675
    %v2289 = vunpack.c.l.b16 %v1676
    %v2290 = vunpack.c.h.b16 %v1676
    %v2291 = vunpack.c.l.b16 %v1677
    %v2292 = vunpack.c.h.b16 %v1677
    %v2293 = vunpack.c.l.b16 %v1678
    %v2294 = vunpack.c.h.b16 %v1678
    %v2295 = vunpack.c.l.b16 %v1679
    %v2296 = vunpack.c.h.b16 %v1679
    %v2297 = vunpack.c.l.b16 %v1680
    %v2298 = vunpack.c.h.b16 %v1680
    %v2299 = vunpack.c.l.b16 %v1681
    %v2300 = vunpack.c.h.b16 %v1681
    %v2301 = vunpack.c.l.b16 %v1682
    %v2302 = vunpack.c.h.b16 %v1682
    %v2303 = vunpack.c.l.b16 %v1683
    %v2304 = vunpack.c.h.b16 %v1683
    %v2305 = vunpack.c.l.b16 %v1684
    %v2306 = vunpack.c.h.b16 %v1684
    %v2307 = vunpack.c.l.b16 %v1685
    %v2308 = vunpack.c.h.b16 %v1685
    %v2309 = vunpack.c.l.b16 %v1686
    %v2310 = vunpack.c.h.b16 %v1686
    %v2311 = vunpack.c.l.b16 %v1687
    %v2312 = vunpack.c.h.b16 %v1687
    %v2313 = vunpack.c.l.b16 %v1688
    %v2314 = vunpack.c.h.b16 %v1688
    %v2315 = vunpack.c.l.b16 %v1689
    %v2316 = vunpack.c.h.b16 %v1689
    %v2317 = vunpack.c.l.b16 %v1690
    %v2318 = vunpack.c.h.b16 %v1690
    %v2319 = vunpack.c.l.b16 %v1691
    %v2320 = vunpack.c.h.b16 %v1691
    %v2321 = vunpack.c.l.b16 %v1692
    %v2322 = vunpack.c.h.b16 %v1692
    %v2323 = vunpack.c.l.b16 %v1693
    %v2324 = vunpack.c.h.b16 %v1693
    %v2325 = vunpack.c.l.b16 %v1694
    %v2326 = vunpack.c.h.b16 %v1694
    %v2327 = vunpack.c.l.b16 %v1695
    %v2328 = vunpack.c.h.b16 %v1695
    %v2329 = vunpack.c.l.b16 %v1696
    %v2330 = vunpack.c.h.b16 %v1696
    %v2331 = vunpack.c.l.b16 %v1697
    %v2332 = vunpack.c.h.b16 %v1697
    %v2333 = vunpack.c.l.b16 %v1698
    %v2334 = vunpack.c.h.b16 %v1698
    %v2335 = vunpack.c.l.b16 %v1699
    %v2336 = vunpack.c.h.b16 %v1699
    %v2337 = vunpack.c.l.b16 %v1700
    %v2338 = vunpack.c.h.b16 %v1700
    %v2339 = vunpack.c.l.b16 %v1701
    %v2340 = vunpack.c.h.b16 %v1701
    %v2341 = vunpack.c.l.b16 %v1702
    %v2342 = vunpack.c.h.b16 %v1702
    %v2343 = vunpack.c.l.b16 %v1703
    %v2344 = vunpack.c.h.b16 %v1703
    %v2345 = vunpack.c.l.b16 %v1704
    %v2346 = vunpack.c.h.b16 %v1704
    %v2347 = vunpack.c.l.b16 %v1705
    %v2348 = vunpack.c.h.b16 %v1705
    %v2349 = vunpack.c.l.b16 %v1706
    %v2350 = vunpack.c.h.b16 %v1706
    %v2351 = vunpack.c.l.b16 %v1707
    %v2352 = vunpack.c.h.b16 %v1707
    %v2353 = vunpack.c.l.b16 %v1708
    %v2354 = vunpack.c.h.b16 %v1708
    %v2355 = vunpack.c.l.b16 %v1709
    %v2356 = vunpack.c.h.b16 %v1709
    %v2357 = vunpack.c.l.b16 %v1710
    %v2358 = vunpack.c.h.b16 %v1710
    %v2359 = vunpack.c.l.b16 %v1711
    %v2360 = vunpack.c.h.b16 %v1711
    %v2361 = vunpack.c.l.b16 %v1712
    %v2362 = vunpack.c.h.b16 %v1712
    %v2363 = vunpack.c.l.b16 %v1713
    %v2364 = vunpack.c.h.b16 %v1713
    %v2365 = vunpack.c.l.b16 %v1714
    %v2366 = vunpack.c.h.b16 %v1714
    %v2367 = vunpack.c.l.b16 %v1715
    %v2368 = vunpack.c.h.b16 %v1715
    %v2369 = vunpack.c.l.b16 %v1716
    %v2370 = vunpack.c.h.b16 %v1716
    %v2371 = vunpack.c.l.b16 %v1717
    %v2372 = vunpack.c.h.b16 %v1717
    %v2373 = vunpack.c.l.b16 %v1718
    %v2374 = vunpack.c.h.b16 %v1718
    %v2375 = vunpack.c.l.b16 %v1719
    %v2376 = vunpack.c.h.b16 %v1719
    %v2377 = vunpack.c.l.b16 %v1720
    %v2378 = vunpack.c.h.b16 %v1720
    %v2379 = vunpack.c.l.b16 %v1721
    %v2380 = vunpack.c.h.b16 %v1721
    %v2381 = vunpack.c.l.b16 %v1722
    %v2382 = vunpack.c.h.b16 %v1722
    %v2383 = vunpack.c.l.b16 %v1723
    %v2384 = vunpack.c.h.b16 %v1723
    %v2385 = vunpack.c.l.b16 %v1724
    %v2386 = vunpack.c.h.b16 %v1724
    %v2387 = vunpack.c.l.b16 %v1725
    %v2388 = vunpack.c.h.b16 %v1725
    %v2389 = vunpack.c.l.b16 %v1726
    %v2390 = vunpack.c.h.b16 %v1726
    %v2391 = vunpack.c.l.b16 %v1727
    %v2392 = vunpack.c.h.b16 %v1727
    %v2393 = vunpack.c.l.b16 %v1728
    %v2394 = vunpack.c.h.b16 %v1728
    %v2395 = vunpack.c.l.b16 %v1729
    %v2396 = vunpack.c.h.b16 %v1729
    %v2397 = vunpack.c.l.b16 %v1730
    %v2398 = vunpack.c.h.b16 %v1730
    %v2399 = vunpack.c.l.b16 %v1731
    %v2400 = vunpack.c.h.b16 %v1731
    %v2401 = vunpack.c.l.b16 %v1732
    %v2402 = vunpack.c.h.b16 %v1732
    %v2403 = vunpack.c.l.b16 %v1733
    %v2404 = vunpack.c.h.b16 %v1733
    %v2405 = vunpack.c.l.b16 %v1734
    %v2406 = vunpack.c.h.b16 %v1734
    %v2407 = vunpack.c.l.b16 %v1735
    %v2408 = vunpack.c.h.b16 %v1735
    %v2409 = vunpack.c.l.b16 %v1736
    %v2410 = vunpack.c.h.b16 %v1736
    %v2411 = vunpack.c.l.b16 %v1737
    %v2412 = vunpack.c.h.b16 %v1737
    %v2413 = vunpack.c.l.b16 %v1738
    %v2414 = vunpack.c.h.b16 %v1738
    %v2415 = vunpack.c.l.b16 %v1739
    %v2416 = vunpack.c.h.b16 %v1739
    %v2417 = vunpack.c.l.b16 %v1740
    %v2418 = vunpack.c.h.b16 %v1740
    %v2419 = vunpack.c.l.b16 %v1741
    %v2420 = vunpack.c.h.b16 %v1741
    %v2421 = vunpack.c.l.b16 %v1742
    %v2422 = vunpack.c.h.b16 %v1742
    %v2423 = vunpack.c.l.b16 %v1743
    %v2424 = vunpack.c.h.b16 %v1743
    %v2425 = vunpack.c.l.b16 %v1744
    %v2426 = vunpack.c.h.b16 %v1744
    %v2427 = vunpack.c.l.b16 %v1745
    %v2428 = vunpack.c.h.b16 %v1745
    %v2429 = vunpack.c.l.b16 %v1746
    %v2430 = vunpack.c.h.b16 %v1746
    %v2431 = vunpack.c.l.b16 %v1747
    %v2432 = vunpack.c.h.b16 %v1747
    %v2433 = vunpack.c.l.b16 %v1748
    %v2434 = vunpack.c.h.b16 %v1748
    %v2435 = vunpack.c.l.b16 %v1749
    %v2436 = vunpack.c.h.b16 %v1749
    %v2437 = vunpack.c.l.b16 %v1750
    %v2438 = vunpack.c.h.b16 %v1750
    %v2439 = vunpack.c.l.b16 %v1751
    %v2440 = vunpack.c.h.b16 %v1751
    %v2441 = vunpack.c.l.b16 %v1752
    %v2442 = vunpack.c.h.b16 %v1752
    %v2443 = vunpack.c.l.b16 %v1753
    %v2444 = vunpack.c.h.b16 %v1753
    %v2445 = vunpack.c.l.b16 %v1754
    %v2446 = vunpack.c.h.b16 %v1754
    %v2447 = vunpack.c.l.b16 %v1755
    %v2448 = vunpack.c.h.b16 %v1755
    %v2449 = vunpack.c.l.b16 %v1756
    %v2450 = vunpack.c.h.b16 %v1756
    %v2451 = vunpack.c.l.b16 %v1757
    %v2452 = vunpack.c.h.b16 %v1757
    %v2453 = vunpack.c.l.b16 %v1758
    %v2454 = vunpack.c.h.b16 %v1758
    %v2455 = vunpack.c.l.b16 %v1759
    %v2456 = vunpack.c.h.b16 %v1759
    %v2457 = vunpack.c.l.b16 %v1760
    %v2458 = vunpack.c.h.b16 %v1760
    %v2459 = vunpack.c.l.b16 %v1761
    %v2460 = vunpack.c.h.b16 %v1761
    %v2461 = vunpack.c.l.b16 %v1762
    %v2462 = vunpack.c.h.b16 %v1762
    %v2463 = vunpack.c.l.b16 %v1763
    %v2464 = vunpack.c.h.b16 %v1763
    %v2465 = vunpack.c.l.b16 %v1764
    %v2466 = vunpack.c.h.b16 %v1764
    %v2467 = vunpack.c.l.b16 %v1765
    %v2468 = vunpack.c.h.b16 %v1765
    %v2469 = vunpack.c.l.b16 %v1766
    %v2470 = vunpack.c.h.b16 %v1766
    %v2471 = vunpack.c.l.b16 %v1767
    %v2472 = vunpack.c.h.b16 %v1767
    %v2473 = vunpack.c.l.b16 %v1768
    %v2474 = vunpack.c.h.b16 %v1768
    %v2475 = vunpack.c.l.b16 %v1769
    %v2476 = vunpack.c.h.b16 %v1769
    %v2477 = vunpack.c.l.b16 %v1770
    %v2478 = vunpack.c.h.b16 %v1770
    %v2479 = vunpack.c.l.b16 %v1771
    %v2480 = vunpack.c.h.b16 %v1771
    %v2481 = vunpack.c.l.b16 %v1772
    %v2482 = vunpack.c.h.b16 %v1772
    %v2483 = vunpack.c.l.b16 %v1773
    %v2484 = vunpack.c.h.b16 %v1773
    %v2485 = vunpack.c.l.b16 %v1774
    %v2486 = vunpack.c.h.b16 %v1774
    %v2487 = vunpack.c.l.b16 %v1775
    %v2488 = vunpack.c.h.b16 %v1775
    %v2489 = vunpack.c.l.b16 %v1776
    %v2490 = vunpack.c.h.b16 %v1776
    %v2491 = vunpack.c.l.b16 %v1777
    %v2492 = vunpack.c.h.b16 %v1777
    %v2493 = vunpack.c.l.b16 %v1778
    %v2494 = vunpack.c.h.b16 %v1778
    %v2495 = vunpack.c.l.b16 %v1779
    %v2496 = vunpack.c.h.b16 %v1779
    %v2497 = vunpack.c.l.b16 %v1780
    %v2498 = vunpack.c.h.b16 %v1780
    %v2499 = vunpack.c.l.b16 %v1781
    %v2500 = vunpack.c.h.b16 %v1781
    %v2501 = vunpack.c.l.b16 %v1782
    %v2502 = vunpack.c.h.b16 %v1782
    %v2503 = vunpack.c.l.b16 %v1783
    %v2504 = vunpack.c.h.b16 %v1783
    %v2505 = vunpack.c.l.b16 %v1784
    %v2506 = vunpack.c.h.b16 %v1784
    %v2507 = vunpack.c.l.b16 %v1785
    %v2508 = vunpack.c.h.b16 %v1785
    %v2509 = vunpack.c.l.b16 %v1786
    %v2510 = vunpack.c.h.b16 %v1786
    %v2511 = vunpack.c.l.b16 %v1787
    %v2512 = vunpack.c.h.b16 %v1787
    %v2513 = vunpack.c.l.b16 %v1788
    %v2514 = vunpack.c.h.b16 %v1788
    %v2515 = vunpack.c.l.b16 %v1789
    %v2516 = vunpack.c.h.b16 %v1789
    %v2517 = vunpack.c.l.b16 %v1790
    %v2518 = vunpack.c.h.b16 %v1790
    %v2519 = vunpack.c.l.b16 %v1791
    %v2520 = vunpack.c.h.b16 %v1791
    %v2521 = vunpack.c.l.b16 %v1792
    %v2522 = vunpack.c.h.b16 %v1792
    %v2523 = vunpack.c.l.b16 %v1793
    %v2524 = vunpack.c.h.b16 %v1793
    %v2525 = vunpack.c.l.b16 %v1794
    %v2526 = vunpack.c.h.b16 %v1794
    %v2527 = vunpack.c.l.b16 %v1795
    %v2528 = vunpack.c.h.b16 %v1795
    %v2529 = vunpack.c.l.b16 %v1796
    %v2530 = vunpack.c.h.b16 %v1796
    %v2531 = vunpack.c.l.b16 %v1797
    %v2532 = vunpack.c.h.b16 %v1797
    %v2533 = vunpack.c.l.b16 %v1798
    %v2534 = vunpack.c.h.b16 %v1798
    %v2535 = vunpack.c.l.b16 %v1799
    %v2536 = vunpack.c.h.b16 %v1799
    %v2537 = vunpack.c.l.b16 %v1800
    %v2538 = vunpack.c.h.b16 %v1800
    %v2539 = vunpack.c.l.b16 %v1801
    %v2540 = vunpack.c.h.b16 %v1801
    %v2541 = vunpack.c.l.b16 %v1802
    %v2542 = vunpack.c.h.b16 %v1802
    %v2543 = vunpack.c.l.b16 %v1803
    %v2544 = vunpack.c.h.b16 %v1803
    %v2545 = vunpack.c.l.b16 %v1804
    %v2546 = vunpack.c.h.b16 %v1804
    %v2547 = vunpack.c.l.b16 %v1805
    %v2548 = vunpack.c.h.b16 %v1805
    %v2549 = vunpack.c.l.b16 %v1806
    %v2550 = vunpack.c.h.b16 %v1806
    %v2551 = vunpack.c.l.b16 %v1807
    %v2552 = vunpack.c.h.b16 %v1807
    %v2553 = vunpack.c.l.b16 %v1808
    %v2554 = vunpack.c.h.b16 %v1808
    %v2555 = vunpack.c.l.b16 %v1809
    %v2556 = vunpack.c.h.b16 %v1809
    %v2557 = vunpack.c.l.b16 %v1810
    %v2558 = vunpack.c.h.b16 %v1810
    %v2559 = vunpack.c.l.b16 %v1811
    %v2560 = vunpack.c.h.b16 %v1811
    %v2561 = vunpack.c.l.b16 %v1812
    %v2562 = vunpack.c.h.b16 %v1812
    %v2563 = vunpack.c.l.b16 %v1813
    %v2564 = vunpack.c.h.b16 %v1813
    %v2565 = vunpack.c.l.b16 %v1814
    %v2566 = vunpack.c.h.b16 %v1814
    %v2567 = vunpack.c.l.b16 %v1815
    %v2568 = vunpack.c.h.b16 %v1815
    %v2569 = vunpack.c.l.b16 %v1816
    %v2570 = vunpack.c.h.b16 %v1816
    %v2571 = vunpack.c.l.b16 %v1817
    %v2572 = vunpack.c.h.b16 %v1817
    %v2573 = vunpack.c.l.b16 %v1818
    %v2574 = vunpack.c.h.b16 %v1818
    %v2575 = vunpack.c.l.b16 %v1819
    %v2576 = vunpack.c.h.b16 %v1819
    %v2577 = vunpack.c.l.b16 %v1820
    %v2578 = vunpack.c.h.b16 %v1820
    %v2579 = vunpack.c.l.b16 %v1821
    %v2580 = vunpack.c.h.b16 %v1821
    %v2581 = vunpack.c.l.b16 %v1822
    %v2582 = vunpack.c.h.b16 %v1822
    %v2583 = vunpack.c.l.b16 %v1823
    %v2584 = vunpack.c.h.b16 %v1823
    %v2585 = vunpack.c.l.b16 %v1824
    %v2586 = vunpack.c.h.b16 %v1824
    %v2587 = vunpack.c.l.b16 %v1825
    %v2588 = vunpack.c.h.b16 %v1825
    %v2589 = vunpack.c.l.b16 %v1826
    %v2590 = vunpack.c.h.b16 %v1826
    %v2591 = vunpack.c.l.b16 %v1827
    %v2592 = vunpack.c.h.b16 %v1827
    %v2593 = vunpack.c.l.b16 %v1828
    %v2594 = vunpack.c.h.b16 %v1828
    %v2595 = vunpack.c.l.b16 %v1829
    %v2596 = vunpack.c.h.b16 %v1829
    %v2597 = vunpack.c.l.b16 %v1830
    %v2598 = vunpack.c.h.b16 %v1830
    %v2599 = vpack.c.b16 %v2095, %v2087
    %v2600 = vpack.c.b16 %v2096, %v2088
    %v2601 = vpack.c.b16 %v2097, %v2089
    %v2602 = vpack.c.b16 %v2098, %v2090
    %v2603 = vpack.c.b16 %v2099, %v2091
    %v2604 = vpack.c.b16 %v2100, %v2092
    %v2605 = vpack.c.b16 %v2101, %v2093
    %v2606 = vpack.c.b16 %v2102, %v2094
    %v2607 = vpack.c.b16 %v2111, %v2103
    %v2608 = vpack.c.b16 %v2112, %v2104
    %v2609 = vpack.c.b16 %v2113, %v2105
    %v2610 = vpack.c.b16 %v2114, %v2106
    %v2611 = vpack.c.b16 %v2115, %v2107
    %v2612 = vpack.c.b16 %v2116, %v2108
    %v2613 = vpack.c.b16 %v2117, %v2109
    %v2614 = vpack.c.b16 %v2118, %v2110
    %v2615 = vpack.c.b16 %v2127, %v2119
    %v2616 = vpack.c.b16 %v2128, %v2120
    %v2617 = vpack.c.b16 %v2129, %v2121
    %v2618 = vpack.c.b16 %v2130, %v2122
    %v2619 = vpack.c.b16 %v2131, %v2123
    %v2620 = vpack.c.b16 %v2132, %v2124
    %v2621 = vpack.c.b16 %v2133, %v2125
    %v2622 = vpack.c.b16 %v2134, %v2126
    %v2623 = vpack.c.b16 %v2143, %v2135
    %v2624 = vpack.c.b16 %v2144, %v2136
    %v2625 = vpack.c.b16 %v2145, %v2137
    %v2626 = vpack.c.b16 %v2146, %v2138
    %v2627 = vpack.c.b16 %v2147, %v2139
    %v2628 = vpack.c.b16 %v2148, %v2140
    %v2629 = vpack.c.b16 %v2149, %v2141
    %v2630 = vpack.c.b16 %v2150, %v2142
    %v2631 = vpack.c.b16 %v2159, %v2151
    %v2632 = vpack.c.b16 %v2160, %v2152
    %v2633 = vpack.c.b16 %v2161, %v2153
    %v2634 = vpack.c.b16 %v2162, %v2154
    %v2635 = vpack.c.b16 %v2163, %v2155
    %v2636 = vpack.c.b16 %v2164, %v2156
    %v2637 = vpack.c.b16 %v2165, %v2157
    %v2638 = vpack.c.b16 %v2166, %v2158
    %v2639 = vpack.c.b16 %v2175, %v2167
    %v2640 = vpack.c.b16 %v2176, %v2168
    %v2641 = vpack.c.b16 %v2177, %v2169
    %v2642 = vpack.c.b16 %v2178, %v2170
    %v2643 = vpack.c.b16 %v2179, %v2171
    %v2644 = vpack.c.b16 %v2180, %v2172
    %v2645 = vpack.c.b16 %v2181, %v2173
    %v2646 = vpack.c.b16 %v2182, %v2174
    %v2647 = vpack.c.b16 %v2191, %v2183
    %v2648 = vpack.c.b16 %v2192, %v2184
    %v2649 = vpack.c.b16 %v2193, %v2185
    %v2650 = vpack.c.b16 %v2194, %v2186
    %v2651 = vpack.c.b16 %v2195, %v2187
    %v2652 = vpack.c.b16 %v2196, %v2188
    %v2653 = vpack.c.b16 %v2197, %v2189
    %v2654 = vpack.c.b16 %v2198, %v2190
    %v2655 = vpack.c.b16 %v2207, %v2199
    %v2656 = vpack.c.b16 %v2208, %v2200
    %v2657 = vpack.c.b16 %v2209, %v2201
    %v2658 = vpack.c.b16 %v2210, %v2202
    %v2659 = vpack.c.b16 %v2211, %v2203
    %v2660 = vpack.c.b16 %v2212, %v2204
    %v2661 = vpack.c.b16 %v2213, %v2205
    %v2662 = vpack.c.b16 %v2214, %v2206
    %v2663 = vpack.c.b16 %v2223, %v2215
    %v2664 = vpack.c.b16 %v2224, %v2216
    %v2665 = vpack.c.b16 %v2225, %v2217
    %v2666 = vpack.c.b16 %v2226, %v2218
    %v2667 = vpack.c.b16 %v2227, %v2219
    %v2668 = vpack.c.b16 %v2228, %v2220
    %v2669 = vpack.c.b16 %v2229, %v2221
    %v2670 = vpack.c.b16 %v2230, %v2222
    %v2671 = vpack.c.b16 %v2239, %v2231
    %v2672 = vpack.c.b16 %v2240, %v2232
    %v2673 = vpack.c.b16 %v2241, %v2233
    %v2674 = vpack.c.b16 %v2242, %v2234
    %v2675 = vpack.c.b16 %v2243, %v2235
    %v2676 = vpack.c.b16 %v2244, %v2236
    %v2677 = vpack.c.b16 %v2245, %v2237
    %v2678 = vpack.c.b16 %v2246, %v2238
    %v2679 = vpack.c.b16 %v2255, %v2247
    %v2680 = vpack.c.b16 %v2256, %v2248
    %v2681 = vpack.c.b16 %v2257, %v2249
    %v2682 = vpack.c.b16 %v2258, %v2250
    %v2683 = vpack.c.b16 %v2259, %v2251
    %v2684 = vpack.c.b16 %v2260, %v2252
    %v2685 = vpack.c.b16 %v2261, %v2253
    %v2686 = vpack.c.b16 %v2262, %v2254
    %v2687 = vpack.c.b16 %v2271, %v2263
    %v2688 = vpack.c.b16 %v2272, %v2264
    %v2689 = vpack.c.b16 %v2273, %v2265
    %v2690 = vpack.c.b16 %v2274, %v2266
    %v2691 = vpack.c.b16 %v2275, %v2267
    %v2692 = vpack.c.b16 %v2276, %v2268
    %v2693 = vpack.c.b16 %v2277, %v2269
    %v2694 = vpack.c.b16 %v2278, %v2270
    %v2695 = vpack.c.b16 %v2287, %v2279
    %v2696 = vpack.c.b16 %v2288, %v2280
    %v2697 = vpack.c.b16 %v2289, %v2281
    %v2698 = vpack.c.b16 %v2290, %v2282
    %v2699 = vpack.c.b16 %v2291, %v2283
    %v2700 = vpack.c.b16 %v2292, %v2284
    %v2701 = vpack.c.b16 %v2293, %v2285
    %v2702 = vpack.c.b16 %v2294, %v2286
    %v2703 = vpack.c.b16 %v2303, %v2295
    %v2704 = vpack.c.b16 %v2304, %v2296
    %v2705 = vpack.c.b16 %v2305, %v2297
    %v2706 = vpack.c.b16 %v2306, %v2298
    %v2707 = vpack.c.b16 %v2307, %v2299
    %v2708 = vpack.c.b16 %v2308, %v2300
    %v2709 = vpack.c.b16 %v2309, %v2301
    %v2710 = vpack.c.b16 %v2310, %v2302
    %v2711 = vpack.c.b16 %v2319, %v2311
    %v2712 = vpack.c.b16 %v2320, %v2312
    %v2713 = vpack.c.b16 %v2321, %v2313
    %v2714 = vpack.c.b16 %v2322, %v2314
    %v2715 = vpack.c.b16 %v2323, %v2315
    %v2716 = vpack.c.b16 %v2324, %v2316
    %v2717 = vpack.c.b16 %v2325, %v2317
    %v2718 = vpack.c.b16 %v2326, %v2318
    %v2719 = vpack.c.b16 %v2335, %v2327
    %v2720 = vpack.c.b16 %v2336, %v2328
    %v2721 = vpack.c.b16 %v2337, %v2329
    %v2722 = vpack.c.b16 %v2338, %v2330
    %v2723 = vpack.c.b16 %v2339, %v2331
    %v2724 = vpack.c.b16 %v2340, %v2332
    %v2725 = vpack.c.b16 %v2341, %v2333
    %v2726 = vpack.c.b16 %v2342, %v2334
    %v2727 = vpack.c.b16 %v2351, %v2343
    %v2728 = vpack.c.b16 %v2352, %v2344
    %v2729 = vpack.c.b16 %v2353, %v2345
    %v2730 = vpack.c.b16 %v2354, %v2346
    %v2731 = vpack.c.b16 %v2355, %v2347
    %v2732 = vpack.c.b16 %v2356, %v2348
    %v2733 = vpack.c.b16 %v2357, %v2349
    %v2734 = vpack.c.b16 %v2358, %v2350
    %v2735 = vpack.c.b16 %v2367, %v2359
    %v2736 = vpack.c.b16 %v2368, %v2360
    %v2737 = vpack.c.b16 %v2369, %v2361
    %v2738 = vpack.c.b16 %v2370, %v2362
    %v2739 = vpack.c.b16 %v2371, %v2363
    %v2740 = vpack.c.b16 %v2372, %v2364
    %v2741 = vpack.c.b16 %v2373, %v2365
    %v2742 = vpack.c.b16 %v2374, %v2366
    %v2743 = vpack.c.b16 %v2383, %v2375
    %v2744 = vpack.c.b16 %v2384, %v2376
    %v2745 = vpack.c.b16 %v2385, %v2377
    %v2746 = vpack.c.b16 %v2386, %v2378
    %v2747 = vpack.c.b16 %v2387, %v2379
    %v2748 = vpack.c.b16 %v2388, %v2380
    %v2749 = vpack.c.b16 %v2389, %v2381
    %v2750 = vpack.c.b16 %v2390, %v2382
    %v2751 = vpack.c.b16 %v2399, %v2391
    %v2752 = vpack.c.b16 %v2400, %v2392
    %v2753 = vpack.c.b16 %v2401, %v2393
    %v2754 = vpack.c.b16 %v2402, %v2394
    %v2755 = vpack.c.b16 %v2403, %v2395
    %v2756 = vpack.c.b16 %v2404, %v2396
    %v2757 = vpack.c.b16 %v2405, %v2397
    %v2758 = vpack.c.b16 %v2406, %v2398
    %v2759 = vpack.c.b16 %v2415, %v2407
    %v2760 = vpack.c.b16 %v2416, %v2408
    %v2761 = vpack.c.b16 %v2417, %v2409
    %v2762 = vpack.c.b16 %v2418, %v2410
    %v2763 = vpack.c.b16 %v2419, %v2411
    %v2764 = vpack.c.b16 %v2420, %v2412
    %v2765 = vpack.c.b16 %v2421, %v2413
    %v2766 = vpack.c.b16 %v2422, %v2414
    %v2767 = vpack.c.b16 %v2431, %v2423
    %v2768 = vpack.c.b16 %v2432, %v2424
    %v2769 = vpack.c.b16 %v2433, %v2425
    %v2770 = vpack.c.b16 %v2434, %v2426
    %v2771 = vpack.c.b16 %v2435, %v2427
    %v2772 = vpack.c.b16 %v2436, %v2428
    %v2773 = vpack.c.b16 %v2437, %v2429
    %v2774 = vpack.c.b16 %v2438, %v2430
    %v2775 = vpack.c.b16 %v2447, %v2439
    %v2776 = vpack.c.b16 %v2448, %v2440
    %v2777 = vpack.c.b16 %v2449, %v2441
    %v2778 = vpack.c.b16 %v2450, %v2442
    %v2779 = vpack.c.b16 %v2451, %v2443
    %v2780 = vpack.c.b16 %v2452, %v2444
    %v2781 = vpack.c.b16 %v2453, %v2445
    %v2782 = vpack.c.b16 %v2454, %v2446
    %v2783 = vpack.c.b16 %v2463, %v2455
    %v2784 = vpack.c.b16 %v2464, %v2456
    %v2785 = vpack.c.b16 %v2465, %v2457
    %v2786 = vpack.c.b16 %v2466, %v2458
    %v2787 = vpack.c.b16 %v2467, %v2459
    %v2788 = vpack.c.b16 %v2468, %v2460
    %v2789 = vpack.c.b16 %v2469, %v2461
    %v2790 = vpack.c.b16 %v2470, %v2462
    %v2791 = vpack.c.b16 %v2479, %v2471
    %v2792 = vpack.c.b16 %v2480, %v2472
    %v2793 = vpack.c.b16 %v2481, %v2473
    %v2794 = vpack.c.b16 %v2482, %v2474
    %v2795 = vpack.c.b16 %v2483, %v2475
    %v2796 = vpack.c.b16 %v2484, %v2476
    %v2797 = vpack.c.b16 %v2485, %v2477
    %v2798 = vpack.c.b16 %v2486, %v2478
    %v2799 = vpack.c.b16 %v2495, %v2487
    %v2800 = vpack.c.b16 %v2496, %v2488
    %v2801 = vpack.c.b16 %v2497, %v2489
    %v2802 = vpack.c.b16 %v2498, %v2490
    %v2803 = vpack.c.b16 %v2499, %v2491
    %v2804 = vpack.c.b16 %v2500, %v2492
    %v2805 = vpack.c.b16 %v2501, %v2493
    %v2806 = vpack.c.b16 %v2502, %v2494
    %v2807 = vpack.c.b16 %v2511, %v2503
    %v2808 = vpack.c.b16 %v2512, %v2504
    %v2809 = vpack.c.b16 %v2513, %v2505
    %v2810 = vpack.c.b16 %v2514, %v2506
    %v2811 = vpack.c.b16 %v2515, %v2507
    %v2812 = vpack.c.b16 %v2516, %v2508
    %v2813 = vpack.c.b16 %v2517, %v2509
    %v2814 = vpack.c.b16 %v2518, %v2510
    %v2815 = vpack.c.b16 %v2527, %v2519
    %v2816 = vpack.c.b16 %v2528, %v2520
    %v2817 = vpack.c.b16 %v2529, %v2521
    %v2818 = vpack.c.b16 %v2530, %v2522
    %v2819 = vpack.c.b16 %v2531, %v2523
    %v2820 = vpack.c.b16 %v2532, %v2524
    %v2821 = vpack.c.b16 %v2533, %v2525
    %v2822 = vpack.c.b16 %v2534, %v2526
    %v2823 = vpack.c.b16 %v2543, %v2535
    %v2824 = vpack.c.b16 %v2544, %v2536
    %v2825 = vpack.c.b16 %v2545, %v2537
    %v2826 = vpack.c.b16 %v2546, %v2538
    %v2827 = vpack.c.b16 %v2547, %v2539
    %v2828 = vpack.c.b16 %v2548, %v2540
    %v2829 = vpack.c.b16 %v2549, %v2541
    %v2830 = vpack.c.b16 %v2550, %v2542
    %v2831 = vpack.c.b16 %v2559, %v2551
    %v2832 = vpack.c.b16 %v2560, %v2552
    %v2833 = vpack.c.b16 %v2561, %v2553
    %v2834 = vpack.c.b16 %v2562, %v2554
    %v2835 = vpack.c.b16 %v2563, %v2555
    %v2836 = vpack.c.b16 %v2564, %v2556
    %v2837 = vpack.c.b16 %v2565, %v2557
    %v2838 = vpack.c.b16 %v2566, %v2558
    %v2839 = vpack.c.b16 %v2575, %v2567
    %v2840 = vpack.c.b16 %v2576, %v2568
    %v2841 = vpack.c.b16 %v2577, %v2569
    %v2842 = vpack.c.b16 %v2578, %v2570
    %v2843 = vpack.c.b16 %v2579, %v2571
    %v2844 = vpack.c.b16 %v2580, %v2572
    %v2845 = vpack.c.b16 %v2581, %v2573
    %v2846 = vpack.c.b16 %v2582, %v2574
    %v2847 = vpack.c.b16 %v2591, %v2583
    %v2848 = vpack.c.b16 %v2592, %v2584
    %v2849 = vpack.c.b16 %v2593, %v2585
    %v2850 = vpack.c.b16 %v2594, %v2586
    %v2851 = vpack.c.b16 %v2595, %v2587
    %v2852 = vpack.c.b16 %v2596, %v2588
    %v2853 = vpack.c.b16 %v2597, %v2589
    %v2854 = vpack.c.b16 %v2598, %v2590
    %3111 = vmatprep.subr.bf16.mxu0 %v2600
    %3112 = vmatpush1.bf16.msra.mxu0 %v2599
    %3113 = vmatprep.subr.bf16.mxu0 %v2608
    %3114 = vmatpush1.bf16.msra.mxu0 %v2607
    %3115 = vmatprep.subr.bf16.mxu0 %v2616
    %3116 = vmatpush1.bf16.msra.mxu0 %v2615
    %3117 = vmatprep.subr.bf16.mxu0 %v2624
    %3118 = vmatpush1.bf16.msra.mxu0 %v2623
    %3119 = vmatprep.subr.bf16.mxu0 %v2632
    %3120 = vmatpush1.bf16.msra.mxu0 %v2631
    %3121 = vmatprep.subr.bf16.mxu0 %v2640
    %3122 = vmatpush1.bf16.msra.mxu0 %v2639
    %3123 = vmatprep.subr.bf16.mxu0 %v2648
    %3124 = vmatpush1.bf16.msra.mxu0 %v2647
    %3125 = vmatprep.subr.bf16.mxu0 %v2656
    %3126 = vmatpush1.bf16.msra.mxu0 %v2655
    %3127 = vmatprep.subr.bf16.mxu0 %v2664
    %3128 = vmatpush1.bf16.msra.mxu0 %v2663
    %3129 = vmatprep.subr.bf16.mxu0 %v2672
    %3130 = vmatpush1.bf16.msra.mxu0 %v2671
    %3131 = vmatprep.subr.bf16.mxu0 %v2680
    %3132 = vmatpush1.bf16.msra.mxu0 %v2679
    %3133 = vmatprep.subr.bf16.mxu0 %v2688
    %3134 = vmatpush1.bf16.msra.mxu0 %v2687
    %3135 = vmatprep.subr.bf16.mxu0 %v2696
    %3136 = vmatpush1.bf16.msra.mxu0 %v2695
    %3137 = vmatprep.subr.bf16.mxu0 %v2704
    %3138 = vmatpush1.bf16.msra.mxu0 %v2703
    %3139 = vmatprep.subr.bf16.mxu0 %v2712
    %3140 = vmatpush1.bf16.msra.mxu0 %v2711
    %3141 = vmatprep.subr.bf16.mxu0 %v2720
    %3142 = vmatpush1.bf16.msra.mxu0 %v2719
    %3143 = vmatprep.mubr.bf16.mxu0 %v1512
    %3144 = vmatmul.mubr.bf16.gmra.mrb[0].mxu0 %v1511
    %v3145 = vpop.f32.mrb[0].mxu0
    %v3146 = vadd.f32 0.0, %v3145
    %v3147 = vpop.f32.mrb[0].mxu0
    %v3148 = vadd.f32 0.0, %v3147
    %v3149 = vpop.f32.mrb[0].mxu0
    %v3150 = vadd.f32 0.0, %v3149
    %v3151 = vpop.f32.mrb[0].mxu0
    %v3152 = vadd.f32 0.0, %v3151
    %3153 = vmatprep.mubr.bf16.mxu0 %v1516
    %3154 = vmatmul.mubr.bf16.gmra.mrb[0].mxu0 %v1515
    %v3155 = vpop.f32.mrb[0].mxu0
    %v3156 = vadd.f32 0.0, %v3155
    %v3157 = vpop.f32.mrb[0].mxu0
    %v3158 = vadd.f32 0.0, %v3157
    %v3159 = vpop.f32.mrb[0].mxu0
    %v3160 = vadd.f32 0.0, %v3159
    %v3161 = vpop.f32.mrb[0].mxu0
    %v3162 = vadd.f32 0.0, %v3161
    %3163 = vmatprep.mubr.bf16.mxu0 %v1520
    %3164 = vmatmul.mubr.bf16.gmra.mrb[0].mxu0 %v1519
    %v3165 = vpop.f32.mrb[0].mxu0
    %v3166 = vadd.f32 0.0, %v3165
    %v3167 = vpop.f32.mrb[0].mxu0
    %v3168 = vadd.f32 0.0, %v3167
    %v3169 = vpop.f32.mrb[0].mxu0
    %v3170 = vadd.f32 0.0, %v3169
    %v3171 = vpop.f32.mrb[0].mxu0
    %v3172 = vadd.f32 0.0, %v3171
    %3173 = vmatprep.mubr.bf16.mxu0 %v1524
    %3174 = vmatmul.mubr.bf16.gmra.mrb[0].mxu0 %v1523
    %v3175 = vpop.f32.mrb[0].mxu0
    %v3176 = vadd.f32 0.0, %v3175
    %v3177 = vpop.f32.mrb[0].mxu0
    %v3178 = vadd.f32 0.0, %v3177
    %v3179 = vpop.f32.mrb[0].mxu0
    %v3180 = vadd.f32 0.0, %v3179
    %v3181 = vpop.f32.mrb[0].mxu0
    %v3182 = vadd.f32 0.0, %v3181
    %3183 = vmatprep.mubr.bf16.mxu0 %v1528
    %3184 = vmatmul.mubr.bf16.gmra.mrb[0].mxu0 %v1527
    %v3185 = vpop.f32.mrb[0].mxu0
    %v3186 = vadd.f32 0.0, %v3185
    %v3187 = vpop.f32.mrb[0].mxu0
    %v3188 = vadd.f32 0.0, %v3187
    %v3189 = vpop.f32.mrb[0].mxu0
    %v3190 = vadd.f32 0.0, %v3189
    %v3191 = vpop.f32.mrb[0].mxu0
    %v3192 = vadd.f32 0.0, %v3191
    %3193 = vmatprep.mubr.bf16.mxu0 %v1532
    %3194 = vmatmul.mubr.bf16.gmra.mrb[0].mxu0 %v1531
    %v3195 = vpop.f32.mrb[0].mxu0
    %v3196 = vadd.f32 0.0, %v3195
    %v3197 = vpop.f32.mrb[0].mxu0
    %v3198 = vadd.f32 0.0, %v3197
    %v3199 = vpop.f32.mrb[0].mxu0
    %v3200 = vadd.f32 0.0, %v3199
    %v3201 = vpop.f32.mrb[0].mxu0
    %v3202 = vadd.f32 0.0, %v3201
    %3203 = vmatprep.mubr.bf16.mxu0 %v1536
    %3204 = vmatmul.mubr.bf16.gmra.mrb[0].mxu0 %v1535
    %v3205 = vpop.f32.mrb[0].mxu0
    %v3206 = vadd.f32 0.0, %v3205
    %v3207 = vpop.f32.mrb[0].mxu0
    %v3208 = vadd.f32 0.0, %v3207
    %v3209 = vpop.f32.mrb[0].mxu0
    %v3210 = vadd.f32 0.0, %v3209
    %v3211 = vpop.f32.mrb[0].mxu0
    %v3212 = vadd.f32 0.0, %v3211
    %3213 = vmatprep.mubr.bf16.mxu0 %v1540
    %3214 = vmatmul.mubr.bf16.gmra.mrb[0].mxu0 %v1539
    %v3215 = vpop.f32.mrb[0].mxu0
    %v3216 = vadd.f32 0.0, %v3215
    %v3217 = vpop.f32.mrb[0].mxu0
    %v3218 = vadd.f32 0.0, %v3217
    %v3219 = vpop.f32.mrb[0].mxu0
    %v3220 = vadd.f32 0.0, %v3219
    %v3221 = vpop.f32.mrb[0].mxu0
    %v3222 = vadd.f32 0.0, %v3221
    %3223 = vmatprep.mubr.bf16.mxu0 %v1544
    %3224 = vmatmul.mubr.bf16.gmra.mrb[0].mxu0 %v1543
    %v3225 = vpop.f32.mrb[0].mxu0
    %v3226 = vadd.f32 0.0, %v3225
    %v3227 = vpop.f32.mrb[0].mxu0
    %v3228 = vadd.f32 0.0, %v3227
    %v3229 = vpop.f32.mrb[0].mxu0
    %v3230 = vadd.f32 0.0, %v3229
    %v3231 = vpop.f32.mrb[0].mxu0
    %v3232 = vadd.f32 0.0, %v3231
    %3233 = vmatprep.mubr.bf16.mxu0 %v1548
    %3234 = vmatmul.mubr.bf16.gmra.mrb[0].mxu0 %v1547
    %v3235 = vpop.f32.mrb[0].mxu0
    %v3236 = vadd.f32 0.0, %v3235
    %v3237 = vpop.f32.mrb[0].mxu0
    %v3238 = vadd.f32 0.0, %v3237
    %v3239 = vpop.f32.mrb[0].mxu0
    %v3240 = vadd.f32 0.0, %v3239
    %v3241 = vpop.f32.mrb[0].mxu0
    %v3242 = vadd.f32 0.0, %v3241
    %3243 = vmatprep.mubr.bf16.mxu0 %v1552
    %3244 = vmatmul.mubr.bf16.gmra.mrb[0].mxu0 %v1551
    %v3245 = vpop.f32.mrb[0].mxu0
    %v3246 = vadd.f32 0.0, %v3245
    %v3247 = vpop.f32.mrb[0].mxu0
    %v3248 = vadd.f32 0.0, %v3247
    %v3249 = vpop.f32.mrb[0].mxu0
    %v3250 = vadd.f32 0.0, %v3249
    %v3251 = vpop.f32.mrb[0].mxu0
    %v3252 = vadd.f32 0.0, %v3251
    %3253 = vmatprep.mubr.bf16.mxu0 %v1556
    %3254 = vmatmul.mubr.bf16.gmra.mrb[0].mxu0 %v1555
    %v3255 = vpop.f32.mrb[0].mxu0
    %v3256 = vadd.f32 0.0, %v3255
    %v3257 = vpop.f32.mrb[0].mxu0
    %v3258 = vadd.f32 0.0, %v3257
    %v3259 = vpop.f32.mrb[0].mxu0
    %v3260 = vadd.f32 0.0, %v3259
    %v3261 = vpop.f32.mrb[0].mxu0
    %v3262 = vadd.f32 0.0, %v3261
    %3263 = vmatprep.mubr.bf16.mxu0 %v1560
    %3264 = vmatmul.mubr.bf16.gmra.mrb[0].mxu0 %v1559
    %v3265 = vpop.f32.mrb[0].mxu0
    %v3266 = vadd.f32 0.0, %v3265
    %v3267 = vpop.f32.mrb[0].mxu0
    %v3268 = vadd.f32 0.0, %v3267
    %v3269 = vpop.f32.mrb[0].mxu0
    %v3270 = vadd.f32 0.0, %v3269
    %v3271 = vpop.f32.mrb[0].mxu0
    %v3272 = vadd.f32 0.0, %v3271
    %3273 = vmatprep.mubr.bf16.mxu0 %v1564
    %3274 = vmatmul.mubr.bf16.gmra.mrb[0].mxu0 %v1563
    %v3275 = vpop.f32.mrb[0].mxu0
    %v3276 = vadd.f32 0.0, %v3275
    %v3277 = vpop.f32.mrb[0].mxu0
    %v3278 = vadd.f32 0.0, %v3277
    %v3279 = vpop.f32.mrb[0].mxu0
    %v3280 = vadd.f32 0.0, %v3279
    %v3281 = vpop.f32.mrb[0].mxu0
    %v3282 = vadd.f32 0.0, %v3281
    %3283 = vmatprep.mubr.bf16.mxu0 %v1568
    %3284 = vmatmul.mubr.bf16.gmra.mrb[0].mxu0 %v1567
    %v3285 = vpop.f32.mrb[0].mxu0
    %v3286 = vadd.f32 0.0, %v3285
    %v3287 = vpop.f32.mrb[0].mxu0
    %v3288 = vadd.f32 0.0, %v3287
    %v3289 = vpop.f32.mrb[0].mxu0
    %v3290 = vadd.f32 0.0, %v3289
    %v3291 = vpop.f32.mrb[0].mxu0
    %v3292 = vadd.f32 0.0, %v3291
    %3293 = vmatprep.mubr.bf16.mxu0 %v1572
    %3294 = vmatmul.mubr.bf16.gmra.mrb[0].mxu0 %v1571
    %v3295 = vpop.f32.mrb[0].mxu0
    %v3296 = vadd.f32 0.0, %v3295
    %v3297 = vpop.f32.mrb[0].mxu0
    %v3298 = vadd.f32 0.0, %v3297
    %v3299 = vpop.f32.mrb[0].mxu0
    %v3300 = vadd.f32 0.0, %v3299
    %v3301 = vpop.f32.mrb[0].mxu0
    %v3302 = vadd.f32 0.0, %v3301
    %3303 = vdwg.mxu0
    %3304 = vmatprep.subr.bf16.mxu0 %v2728
    %3305 = vmatpush1.bf16.msra.mxu0 %v2727
    %3306 = vmatprep.subr.bf16.mxu0 %v2736
    %3307 = vmatpush1.bf16.msra.mxu0 %v2735
    %3308 = vmatprep.subr.bf16.mxu0 %v2744
    %3309 = vmatpush1.bf16.msra.mxu0 %v2743
    %3310 = vmatprep.subr.bf16.mxu0 %v2752
    %3311 = vmatpush1.bf16.msra.mxu0 %v2751
    %3312 = vmatprep.subr.bf16.mxu0 %v2760
    %3313 = vmatpush1.bf16.msra.mxu0 %v2759
    %3314 = vmatprep.subr.bf16.mxu0 %v2768
    %3315 = vmatpush1.bf16.msra.mxu0 %v2767
    %3316 = vmatprep.subr.bf16.mxu0 %v2776
    %3317 = vmatpush1.bf16.msra.mxu0 %v2775
    %3318 = vmatprep.subr.bf16.mxu0 %v2784
    %3319 = vmatpush1.bf16.msra.mxu0 %v2783
    %3320 = vmatprep.subr.bf16.mxu0 %v2792
    %3321 = vmatpush1.bf16.msra.mxu0 %v2791
    %3322 = vmatprep.subr.bf16.mxu0 %v2800
    %3323 = vmatpush1.bf16.msra.mxu0 %v2799
    %3324 = vmatprep.subr.bf16.mxu0 %v2808
    %3325 = vmatpush1.bf16.msra.mxu0 %v2807
    %3326 = vmatprep.subr.bf16.mxu0 %v2816
    %3327 = vmatpush1.bf16.msra.mxu0 %v2815
    %3328 = vmatprep.subr.bf16.mxu0 %v2824
    %3329 = vmatpush1.bf16.msra.mxu0 %v2823
    %3330 = vmatprep.subr.bf16.mxu0 %v2832
    %3331 = vmatpush1.bf16.msra.mxu0 %v2831
    %3332 = vmatprep.subr.bf16.mxu0 %v2840
    %3333 = vmatpush1.bf16.msra.mxu0 %v2839
    %3334 = vmatprep.subr.bf16.mxu0 %v2848
    %3335 = vmatpush1.bf16.msra.mxu0 %v2847
    %3336 = vmatprep.mubr.bf16.mxu0 %v1514
    %3337 = vmatmul.mubr.bf16.gmra.mrb[0].mxu0 %v1513
    %v3338 = vpop.f32.mrb[0].mxu0
    %v3339 = vadd.f32 %v3146, %v3338
    %v3340 = vpop.f32.mrb[0].mxu0
    %v3341 = vadd.f32 %v3148, %v3340
    %v3342 = vpop.f32.mrb[0].mxu0
    %v3343 = vadd.f32 %v3150, %v3342
    %v3344 = vpop.f32.mrb[0].mxu0
    %v3345 = vadd.f32 %v3152, %v3344
    %3346 = vmatprep.mubr.bf16.mxu0 %v1518
    %3347 = vmatmul.mubr.bf16.gmra.mrb[0].mxu0 %v1517
    %v3348 = vpop.f32.mrb[0].mxu0
    %v3349 = vadd.f32 %v3156, %v3348
    %v3350 = vpop.f32.mrb[0].mxu0
    %v3351 = vadd.f32 %v3158, %v3350
    %v3352 = vpop.f32.mrb[0].mxu0
    %v3353 = vadd.f32 %v3160, %v3352
    %v3354 = vpop.f32.mrb[0].mxu0
    %v3355 = vadd.f32 %v3162, %v3354
    %3356 = vmatprep.mubr.bf16.mxu0 %v1522
    %3357 = vmatmul.mubr.bf16.gmra.mrb[0].mxu0 %v1521
    %v3358 = vpop.f32.mrb[0].mxu0
    %v3359 = vadd.f32 %v3166, %v3358
    %v3360 = vpop.f32.mrb[0].mxu0
    %v3361 = vadd.f32 %v3168, %v3360
    %v3362 = vpop.f32.mrb[0].mxu0
    %v3363 = vadd.f32 %v3170, %v3362
    %v3364 = vpop.f32.mrb[0].mxu0
    %v3365 = vadd.f32 %v3172, %v3364
    %3366 = vmatprep.mubr.bf16.mxu0 %v1526
    %3367 = vmatmul.mubr.bf16.gmra.mrb[0].mxu0 %v1525
    %v3368 = vpop.f32.mrb[0].mxu0
    %v3369 = vadd.f32 %v3176, %v3368
    %v3370 = vpop.f32.mrb[0].mxu0
    %v3371 = vadd.f32 %v3178, %v3370
    %v3372 = vpop.f32.mrb[0].mxu0
    %v3373 = vadd.f32 %v3180, %v3372
    %v3374 = vpop.f32.mrb[0].mxu0
    %v3375 = vadd.f32 %v3182, %v3374
    %3376 = vmatprep.mubr.bf16.mxu0 %v1530
    %3377 = vmatmul.mubr.bf16.gmra.mrb[0].mxu0 %v1529
    %v3378 = vpop.f32.mrb[0].mxu0
    %v3379 = vadd.f32 %v3186, %v3378
    %v3380 = vpop.f32.mrb[0].mxu0
    %v3381 = vadd.f32 %v3188, %v3380
    %v3382 = vpop.f32.mrb[0].mxu0
    %v3383 = vadd.f32 %v3190, %v3382
    %v3384 = vpop.f32.mrb[0].mxu0
    %v3385 = vadd.f32 %v3192, %v3384
    %3386 = vmatprep.mubr.bf16.mxu0 %v1534
    %3387 = vmatmul.mubr.bf16.gmra.mrb[0].mxu0 %v1533
    %v3388 = vpop.f32.mrb[0].mxu0
    %v3389 = vadd.f32 %v3196, %v3388
    %v3390 = vpop.f32.mrb[0].mxu0
    %v3391 = vadd.f32 %v3198, %v3390
    %v3392 = vpop.f32.mrb[0].mxu0
    %v3393 = vadd.f32 %v3200, %v3392
    %v3394 = vpop.f32.mrb[0].mxu0
    %v3395 = vadd.f32 %v3202, %v3394
    %3396 = vmatprep.mubr.bf16.mxu0 %v1538
    %3397 = vmatmul.mubr.bf16.gmra.mrb[0].mxu0 %v1537
    %v3398 = vpop.f32.mrb[0].mxu0
    %v3399 = vadd.f32 %v3206, %v3398
    %v3400 = vpop.f32.mrb[0].mxu0
    %v3401 = vadd.f32 %v3208, %v3400
    %v3402 = vpop.f32.mrb[0].mxu0
    %v3403 = vadd.f32 %v3210, %v3402
    %v3404 = vpop.f32.mrb[0].mxu0
    %v3405 = vadd.f32 %v3212, %v3404
    %3406 = vmatprep.mubr.bf16.mxu0 %v1542
    %3407 = vmatmul.mubr.bf16.gmra.mrb[0].mxu0 %v1541
    %v3408 = vpop.f32.mrb[0].mxu0
    %v3409 = vadd.f32 %v3216, %v3408
    %v3410 = vpop.f32.mrb[0].mxu0
    %v3411 = vadd.f32 %v3218, %v3410
    %v3412 = vpop.f32.mrb[0].mxu0
    %v3413 = vadd.f32 %v3220, %v3412
    %v3414 = vpop.f32.mrb[0].mxu0
    %v3415 = vadd.f32 %v3222, %v3414
    %3416 = vmatprep.mubr.bf16.mxu0 %v1546
    %3417 = vmatmul.mubr.bf16.gmra.mrb[0].mxu0 %v1545
    %v3418 = vpop.f32.mrb[0].mxu0
    %v3419 = vadd.f32 %v3226, %v3418
    %v3420 = vpop.f32.mrb[0].mxu0
    %v3421 = vadd.f32 %v3228, %v3420
    %v3422 = vpop.f32.mrb[0].mxu0
    %v3423 = vadd.f32 %v3230, %v3422
    %v3424 = vpop.f32.mrb[0].mxu0
    %v3425 = vadd.f32 %v3232, %v3424
    %3426 = vmatprep.mubr.bf16.mxu0 %v1550
    %3427 = vmatmul.mubr.bf16.gmra.mrb[0].mxu0 %v1549
    %v3428 = vpop.f32.mrb[0].mxu0
    %v3429 = vadd.f32 %v3236, %v3428
    %v3430 = vpop.f32.mrb[0].mxu0
    %v3431 = vadd.f32 %v3238, %v3430
    %v3432 = vpop.f32.mrb[0].mxu0
    %v3433 = vadd.f32 %v3240, %v3432
    %v3434 = vpop.f32.mrb[0].mxu0
    %v3435 = vadd.f32 %v3242, %v3434
    %3436 = vmatprep.mubr.bf16.mxu0 %v1554
    %3437 = vmatmul.mubr.bf16.gmra.mrb[0].mxu0 %v1553
    %v3438 = vpop.f32.mrb[0].mxu0
    %v3439 = vadd.f32 %v3246, %v3438
    %v3440 = vpop.f32.mrb[0].mxu0
    %v3441 = vadd.f32 %v3248, %v3440
    %v3442 = vpop.f32.mrb[0].mxu0
    %v3443 = vadd.f32 %v3250, %v3442
    %v3444 = vpop.f32.mrb[0].mxu0
    %v3445 = vadd.f32 %v3252, %v3444
    %3446 = vmatprep.mubr.bf16.mxu0 %v1558
    %3447 = vmatmul.mubr.bf16.gmra.mrb[0].mxu0 %v1557
    %v3448 = vpop.f32.mrb[0].mxu0
    %v3449 = vadd.f32 %v3256, %v3448
    %v3450 = vpop.f32.mrb[0].mxu0
    %v3451 = vadd.f32 %v3258, %v3450
    %v3452 = vpop.f32.mrb[0].mxu0
    %v3453 = vadd.f32 %v3260, %v3452
    %v3454 = vpop.f32.mrb[0].mxu0
    %v3455 = vadd.f32 %v3262, %v3454
    %3456 = vmatprep.mubr.bf16.mxu0 %v1562
    %3457 = vmatmul.mubr.bf16.gmra.mrb[0].mxu0 %v1561
    %v3458 = vpop.f32.mrb[0].mxu0
    %v3459 = vadd.f32 %v3266, %v3458
    %v3460 = vpop.f32.mrb[0].mxu0
    %v3461 = vadd.f32 %v3268, %v3460
    %v3462 = vpop.f32.mrb[0].mxu0
    %v3463 = vadd.f32 %v3270, %v3462
    %v3464 = vpop.f32.mrb[0].mxu0
    %v3465 = vadd.f32 %v3272, %v3464
    %3466 = vmatprep.mubr.bf16.mxu0 %v1566
    %3467 = vmatmul.mubr.bf16.gmra.mrb[0].mxu0 %v1565
    %v3468 = vpop.f32.mrb[0].mxu0
    %v3469 = vadd.f32 %v3276, %v3468
    %v3470 = vpop.f32.mrb[0].mxu0
    %v3471 = vadd.f32 %v3278, %v3470
    %v3472 = vpop.f32.mrb[0].mxu0
    %v3473 = vadd.f32 %v3280, %v3472
    %v3474 = vpop.f32.mrb[0].mxu0
    %v3475 = vadd.f32 %v3282, %v3474
    %3476 = vmatprep.mubr.bf16.mxu0 %v1570
    %3477 = vmatmul.mubr.bf16.gmra.mrb[0].mxu0 %v1569
    %v3478 = vpop.f32.mrb[0].mxu0
    %v3479 = vadd.f32 %v3286, %v3478
    %v3480 = vpop.f32.mrb[0].mxu0
    %v3481 = vadd.f32 %v3288, %v3480
    %v3482 = vpop.f32.mrb[0].mxu0
    %v3483 = vadd.f32 %v3290, %v3482
    %v3484 = vpop.f32.mrb[0].mxu0
    %v3485 = vadd.f32 %v3292, %v3484
    %3486 = vmatprep.mubr.bf16.mxu0 %v1574
    %3487 = vmatmul.mubr.bf16.gmra.mrb[0].mxu0 %v1573
    %v3488 = vpop.f32.mrb[0].mxu0
    %v3489 = vadd.f32 %v3296, %v3488
    %v3490 = vpop.f32.mrb[0].mxu0
    %v3491 = vadd.f32 %v3298, %v3490
    %v3492 = vpop.f32.mrb[0].mxu0
    %v3493 = vadd.f32 %v3300, %v3492
    %v3494 = vpop.f32.mrb[0].mxu0
    %v3495 = vadd.f32 %v3302, %v3494
    %3496 = vdwg.mxu0
    %3497 = vmatprep.subr.bf16.mxu0 %v2602
    %3498 = vmatpush1.bf16.msra.mxu0 %v2601
    %3499 = vmatprep.subr.bf16.mxu0 %v2610
    %3500 = vmatpush1.bf16.msra.mxu0 %v2609
    %3501 = vmatprep.subr.bf16.mxu0 %v2618
    %3502 = vmatpush1.bf16.msra.mxu0 %v2617
    %3503 = vmatprep.subr.bf16.mxu0 %v2626
    %3504 = vmatpush1.bf16.msra.mxu0 %v2625
    %3505 = vmatprep.subr.bf16.mxu0 %v2634
    %3506 = vmatpush1.bf16.msra.mxu0 %v2633
    %3507 = vmatprep.subr.bf16.mxu0 %v2642
    %3508 = vmatpush1.bf16.msra.mxu0 %v2641
    %3509 = vmatprep.subr.bf16.mxu0 %v2650
    %3510 = vmatpush1.bf16.msra.mxu0 %v2649
    %3511 = vmatprep.subr.bf16.mxu0 %v2658
    %3512 = vmatpush1.bf16.msra.mxu0 %v2657
    %3513 = vmatprep.subr.bf16.mxu0 %v2666
    %3514 = vmatpush1.bf16.msra.mxu0 %v2665
    %3515 = vmatprep.subr.bf16.mxu0 %v2674
    %3516 = vmatpush1.bf16.msra.mxu0 %v2673
    %3517 = vmatprep.subr.bf16.mxu0 %v2682
    %3518 = vmatpush1.bf16.msra.mxu0 %v2681
    %3519 = vmatprep.subr.bf16.mxu0 %v2690
    %3520 = vmatpush1.bf16.msra.mxu0 %v2689
    %3521 = vmatprep.subr.bf16.mxu0 %v2698
    %3522 = vmatpush1.bf16.msra.mxu0 %v2697
    %3523 = vmatprep.subr.bf16.mxu0 %v2706
    %3524 = vmatpush1.bf16.msra.mxu0 %v2705
    %3525 = vmatprep.subr.bf16.mxu0 %v2714
    %3526 = vmatpush1.bf16.msra.mxu0 %v2713
    %3527 = vmatprep.subr.bf16.mxu0 %v2722
    %3528 = vmatpush1.bf16.msra.mxu0 %v2721
    %3529 = vmatprep.mubr.bf16.mxu0 %v1512
    %3530 = vmatmul.mubr.bf16.gmra.mrb[0].mxu0 %v1511
    %v3531 = vpop.f32.mrb[0].mxu0
    %v3532 = vadd.f32 0.0, %v3531
    %v3533 = vpop.f32.mrb[0].mxu0
    %v3534 = vadd.f32 0.0, %v3533
    %v3535 = vpop.f32.mrb[0].mxu0
    %v3536 = vadd.f32 0.0, %v3535
    %v3537 = vpop.f32.mrb[0].mxu0
    %v3538 = vadd.f32 0.0, %v3537
    %3539 = vmatprep.mubr.bf16.mxu0 %v1516
    %3540 = vmatmul.mubr.bf16.gmra.mrb[0].mxu0 %v1515
    %v3541 = vpop.f32.mrb[0].mxu0
    %v3542 = vadd.f32 0.0, %v3541
    %v3543 = vpop.f32.mrb[0].mxu0
    %v3544 = vadd.f32 0.0, %v3543
    %v3545 = vpop.f32.mrb[0].mxu0
    %v3546 = vadd.f32 0.0, %v3545
    %v3547 = vpop.f32.mrb[0].mxu0
    %v3548 = vadd.f32 0.0, %v3547
    %3549 = vmatprep.mubr.bf16.mxu0 %v1520
    %3550 = vmatmul.mubr.bf16.gmra.mrb[0].mxu0 %v1519
    %v3551 = vpop.f32.mrb[0].mxu0
    %v3552 = vadd.f32 0.0, %v3551
    %v3553 = vpop.f32.mrb[0].mxu0
    %v3554 = vadd.f32 0.0, %v3553
    %v3555 = vpop.f32.mrb[0].mxu0
    %v3556 = vadd.f32 0.0, %v3555
    %v3557 = vpop.f32.mrb[0].mxu0
    %v3558 = vadd.f32 0.0, %v3557
    %3559 = vmatprep.mubr.bf16.mxu0 %v1524
    %3560 = vmatmul.mubr.bf16.gmra.mrb[0].mxu0 %v1523
    %v3561 = vpop.f32.mrb[0].mxu0
    %v3562 = vadd.f32 0.0, %v3561
    %v3563 = vpop.f32.mrb[0].mxu0
    %v3564 = vadd.f32 0.0, %v3563
    %v3565 = vpop.f32.mrb[0].mxu0
    %v3566 = vadd.f32 0.0, %v3565
    %v3567 = vpop.f32.mrb[0].mxu0
    %v3568 = vadd.f32 0.0, %v3567
    %3569 = vmatprep.mubr.bf16.mxu0 %v1528
    %3570 = vmatmul.mubr.bf16.gmra.mrb[0].mxu0 %v1527
    %v3571 = vpop.f32.mrb[0].mxu0
    %v3572 = vadd.f32 0.0, %v3571
    %v3573 = vpop.f32.mrb[0].mxu0
    %v3574 = vadd.f32 0.0, %v3573
    %v3575 = vpop.f32.mrb[0].mxu0
    %v3576 = vadd.f32 0.0, %v3575
    %v3577 = vpop.f32.mrb[0].mxu0
    %v3578 = vadd.f32 0.0, %v3577
    %3579 = vmatprep.mubr.bf16.mxu0 %v1532
    %3580 = vmatmul.mubr.bf16.gmra.mrb[0].mxu0 %v1531
    %v3581 = vpop.f32.mrb[0].mxu0
    %v3582 = vadd.f32 0.0, %v3581
    %v3583 = vpop.f32.mrb[0].mxu0
    %v3584 = vadd.f32 0.0, %v3583
    %v3585 = vpop.f32.mrb[0].mxu0
    %v3586 = vadd.f32 0.0, %v3585
    %v3587 = vpop.f32.mrb[0].mxu0
    %v3588 = vadd.f32 0.0, %v3587
    %3589 = vmatprep.mubr.bf16.mxu0 %v1536
    %3590 = vmatmul.mubr.bf16.gmra.mrb[0].mxu0 %v1535
    %v3591 = vpop.f32.mrb[0].mxu0
    %v3592 = vadd.f32 0.0, %v3591
    %v3593 = vpop.f32.mrb[0].mxu0
    %v3594 = vadd.f32 0.0, %v3593
    %v3595 = vpop.f32.mrb[0].mxu0
    %v3596 = vadd.f32 0.0, %v3595
    %v3597 = vpop.f32.mrb[0].mxu0
    %v3598 = vadd.f32 0.0, %v3597
    %3599 = vmatprep.mubr.bf16.mxu0 %v1540
    %3600 = vmatmul.mubr.bf16.gmra.mrb[0].mxu0 %v1539
    %v3601 = vpop.f32.mrb[0].mxu0
    %v3602 = vadd.f32 0.0, %v3601
    %v3603 = vpop.f32.mrb[0].mxu0
    %v3604 = vadd.f32 0.0, %v3603
    %v3605 = vpop.f32.mrb[0].mxu0
    %v3606 = vadd.f32 0.0, %v3605
    %v3607 = vpop.f32.mrb[0].mxu0
    %v3608 = vadd.f32 0.0, %v3607
    %3609 = vmatprep.mubr.bf16.mxu0 %v1544
    %3610 = vmatmul.mubr.bf16.gmra.mrb[0].mxu0 %v1543
    %v3611 = vpop.f32.mrb[0].mxu0
    %v3612 = vadd.f32 0.0, %v3611
    %v3613 = vpop.f32.mrb[0].mxu0
    %v3614 = vadd.f32 0.0, %v3613
    %v3615 = vpop.f32.mrb[0].mxu0
    %v3616 = vadd.f32 0.0, %v3615
    %v3617 = vpop.f32.mrb[0].mxu0
    %v3618 = vadd.f32 0.0, %v3617
    %3619 = vmatprep.mubr.bf16.mxu0 %v1548
    %3620 = vmatmul.mubr.bf16.gmra.mrb[0].mxu0 %v1547
    %v3621 = vpop.f32.mrb[0].mxu0
    %v3622 = vadd.f32 0.0, %v3621
    %v3623 = vpop.f32.mrb[0].mxu0
    %v3624 = vadd.f32 0.0, %v3623
    %v3625 = vpop.f32.mrb[0].mxu0
    %v3626 = vadd.f32 0.0, %v3625
    %v3627 = vpop.f32.mrb[0].mxu0
    %v3628 = vadd.f32 0.0, %v3627
    %3629 = vmatprep.mubr.bf16.mxu0 %v1552
    %3630 = vmatmul.mubr.bf16.gmra.mrb[0].mxu0 %v1551
    %v3631 = vpop.f32.mrb[0].mxu0
    %v3632 = vadd.f32 0.0, %v3631
    %v3633 = vpop.f32.mrb[0].mxu0
    %v3634 = vadd.f32 0.0, %v3633
    %v3635 = vpop.f32.mrb[0].mxu0
    %v3636 = vadd.f32 0.0, %v3635
    %v3637 = vpop.f32.mrb[0].mxu0
    %v3638 = vadd.f32 0.0, %v3637
    %3639 = vmatprep.mubr.bf16.mxu0 %v1556
    %3640 = vmatmul.mubr.bf16.gmra.mrb[0].mxu0 %v1555
    %v3641 = vpop.f32.mrb[0].mxu0
    %v3642 = vadd.f32 0.0, %v3641
    %v3643 = vpop.f32.mrb[0].mxu0
    %v3644 = vadd.f32 0.0, %v3643
    %v3645 = vpop.f32.mrb[0].mxu0
    %v3646 = vadd.f32 0.0, %v3645
    %v3647 = vpop.f32.mrb[0].mxu0
    %v3648 = vadd.f32 0.0, %v3647
    %3649 = vmatprep.mubr.bf16.mxu0 %v1560
    %3650 = vmatmul.mubr.bf16.gmra.mrb[0].mxu0 %v1559
    %v3651 = vpop.f32.mrb[0].mxu0
    %v3652 = vadd.f32 0.0, %v3651
    %v3653 = vpop.f32.mrb[0].mxu0
    %v3654 = vadd.f32 0.0, %v3653
    %v3655 = vpop.f32.mrb[0].mxu0
    %v3656 = vadd.f32 0.0, %v3655
    %v3657 = vpop.f32.mrb[0].mxu0
    %v3658 = vadd.f32 0.0, %v3657
    %3659 = vmatprep.mubr.bf16.mxu0 %v1564
    %3660 = vmatmul.mubr.bf16.gmra.mrb[0].mxu0 %v1563
    %v3661 = vpop.f32.mrb[0].mxu0
    %v3662 = vadd.f32 0.0, %v3661
    %v3663 = vpop.f32.mrb[0].mxu0
    %v3664 = vadd.f32 0.0, %v3663
    %v3665 = vpop.f32.mrb[0].mxu0
    %v3666 = vadd.f32 0.0, %v3665
    %v3667 = vpop.f32.mrb[0].mxu0
    %v3668 = vadd.f32 0.0, %v3667
    %3669 = vmatprep.mubr.bf16.mxu0 %v1568
    %3670 = vmatmul.mubr.bf16.gmra.mrb[0].mxu0 %v1567
    %v3671 = vpop.f32.mrb[0].mxu0
    %v3672 = vadd.f32 0.0, %v3671
    %v3673 = vpop.f32.mrb[0].mxu0
    %v3674 = vadd.f32 0.0, %v3673
    %v3675 = vpop.f32.mrb[0].mxu0
    %v3676 = vadd.f32 0.0, %v3675
    %v3677 = vpop.f32.mrb[0].mxu0
    %v3678 = vadd.f32 0.0, %v3677
    %3679 = vmatprep.mubr.bf16.mxu0 %v1572
    %3680 = vmatmul.mubr.bf16.gmra.mrb[0].mxu0 %v1571
    %v3681 = vpop.f32.mrb[0].mxu0
    %v3682 = vadd.f32 0.0, %v3681
    %v3683 = vpop.f32.mrb[0].mxu0
    %v3684 = vadd.f32 0.0, %v3683
    %v3685 = vpop.f32.mrb[0].mxu0
    %v3686 = vadd.f32 0.0, %v3685
    %v3687 = vpop.f32.mrb[0].mxu0
    %v3688 = vadd.f32 0.0, %v3687
    %3689 = vdwg.mxu0
    %3690 = vmatprep.subr.bf16.mxu0 %v2730
    %3691 = vmatpush1.bf16.msra.mxu0 %v2729
    %3692 = vmatprep.subr.bf16.mxu0 %v2738
    %3693 = vmatpush1.bf16.msra.mxu0 %v2737
    %3694 = vmatprep.subr.bf16.mxu0 %v2746
    %3695 = vmatpush1.bf16.msra.mxu0 %v2745
    %3696 = vmatprep.subr.bf16.mxu0 %v2754
    %3697 = vmatpush1.bf16.msra.mxu0 %v2753
    %3698 = vmatprep.subr.bf16.mxu0 %v2762
    %3699 = vmatpush1.bf16.msra.mxu0 %v2761
    %3700 = vmatprep.subr.bf16.mxu0 %v2770
    %3701 = vmatpush1.bf16.msra.mxu0 %v2769
    %3702 = vmatprep.subr.bf16.mxu0 %v2778
    %3703 = vmatpush1.bf16.msra.mxu0 %v2777
    %3704 = vmatprep.subr.bf16.mxu0 %v2786
    %3705 = vmatpush1.bf16.msra.mxu0 %v2785
    %3706 = vmatprep.subr.bf16.mxu0 %v2794
    %3707 = vmatpush1.bf16.msra.mxu0 %v2793
    %3708 = vmatprep.subr.bf16.mxu0 %v2802
    %3709 = vmatpush1.bf16.msra.mxu0 %v2801
    %3710 = vmatprep.subr.bf16.mxu0 %v2810
    %3711 = vmatpush1.bf16.msra.mxu0 %v2809
    %3712 = vmatprep.subr.bf16.mxu0 %v2818
    %3713 = vmatpush1.bf16.msra.mxu0 %v2817
    %3714 = vmatprep.subr.bf16.mxu0 %v2826
    %3715 = vmatpush1.bf16.msra.mxu0 %v2825
    %3716 = vmatprep.subr.bf16.mxu0 %v2834
    %3717 = vmatpush1.bf16.msra.mxu0 %v2833
    %3718 = vmatprep.subr.bf16.mxu0 %v2842
    %3719 = vmatpush1.bf16.msra.mxu0 %v2841
    %3720 = vmatprep.subr.bf16.mxu0 %v2850
    %3721 = vmatpush1.bf16.msra.mxu0 %v2849
    %3722 = vmatprep.mubr.bf16.mxu0 %v1514
    %3723 = vmatmul.mubr.bf16.gmra.mrb[0].mxu0 %v1513
    %v3724 = vpop.f32.mrb[0].mxu0
    %v3725 = vadd.f32 %v3532, %v3724
    %v3726 = vpop.f32.mrb[0].mxu0
    %v3727 = vadd.f32 %v3534, %v3726
    %v3728 = vpop.f32.mrb[0].mxu0
    %v3729 = vadd.f32 %v3536, %v3728
    %v3730 = vpop.f32.mrb[0].mxu0
    %v3731 = vadd.f32 %v3538, %v3730
    %3732 = vmatprep.mubr.bf16.mxu0 %v1518
    %3733 = vmatmul.mubr.bf16.gmra.mrb[0].mxu0 %v1517
    %v3734 = vpop.f32.mrb[0].mxu0
    %v3735 = vadd.f32 %v3542, %v3734
    %v3736 = vpop.f32.mrb[0].mxu0
    %v3737 = vadd.f32 %v3544, %v3736
    %v3738 = vpop.f32.mrb[0].mxu0
    %v3739 = vadd.f32 %v3546, %v3738
    %v3740 = vpop.f32.mrb[0].mxu0
    %v3741 = vadd.f32 %v3548, %v3740
    %3742 = vmatprep.mubr.bf16.mxu0 %v1522
    %3743 = vmatmul.mubr.bf16.gmra.mrb[0].mxu0 %v1521
    %v3744 = vpop.f32.mrb[0].mxu0
    %v3745 = vadd.f32 %v3552, %v3744
    %v3746 = vpop.f32.mrb[0].mxu0
    %v3747 = vadd.f32 %v3554, %v3746
    %v3748 = vpop.f32.mrb[0].mxu0
    %v3749 = vadd.f32 %v3556, %v3748
    %v3750 = vpop.f32.mrb[0].mxu0
    %v3751 = vadd.f32 %v3558, %v3750
    %3752 = vmatprep.mubr.bf16.mxu0 %v1526
    %3753 = vmatmul.mubr.bf16.gmra.mrb[0].mxu0 %v1525
    %v3754 = vpop.f32.mrb[0].mxu0
    %v3755 = vadd.f32 %v3562, %v3754
    %v3756 = vpop.f32.mrb[0].mxu0
    %v3757 = vadd.f32 %v3564, %v3756
    %v3758 = vpop.f32.mrb[0].mxu0
    %v3759 = vadd.f32 %v3566, %v3758
    %v3760 = vpop.f32.mrb[0].mxu0
    %v3761 = vadd.f32 %v3568, %v3760
    %3762 = vmatprep.mubr.bf16.mxu0 %v1530
    %3763 = vmatmul.mubr.bf16.gmra.mrb[0].mxu0 %v1529
    %v3764 = vpop.f32.mrb[0].mxu0
    %v3765 = vadd.f32 %v3572, %v3764
    %v3766 = vpop.f32.mrb[0].mxu0
    %v3767 = vadd.f32 %v3574, %v3766
    %v3768 = vpop.f32.mrb[0].mxu0
    %v3769 = vadd.f32 %v3576, %v3768
    %v3770 = vpop.f32.mrb[0].mxu0
    %v3771 = vadd.f32 %v3578, %v3770
    %3772 = vmatprep.mubr.bf16.mxu0 %v1534
    %3773 = vmatmul.mubr.bf16.gmra.mrb[0].mxu0 %v1533
    %v3774 = vpop.f32.mrb[0].mxu0
    %v3775 = vadd.f32 %v3582, %v3774
    %v3776 = vpop.f32.mrb[0].mxu0
    %v3777 = vadd.f32 %v3584, %v3776
    %v3778 = vpop.f32.mrb[0].mxu0
    %v3779 = vadd.f32 %v3586, %v3778
    %v3780 = vpop.f32.mrb[0].mxu0
    %v3781 = vadd.f32 %v3588, %v3780
    %3782 = vmatprep.mubr.bf16.mxu0 %v1538
    %3783 = vmatmul.mubr.bf16.gmra.mrb[0].mxu0 %v1537
    %v3784 = vpop.f32.mrb[0].mxu0
    %v3785 = vadd.f32 %v3592, %v3784
    %v3786 = vpop.f32.mrb[0].mxu0
    %v3787 = vadd.f32 %v3594, %v3786
    %v3788 = vpop.f32.mrb[0].mxu0
    %v3789 = vadd.f32 %v3596, %v3788
    %v3790 = vpop.f32.mrb[0].mxu0
    %v3791 = vadd.f32 %v3598, %v3790
    %3792 = vmatprep.mubr.bf16.mxu0 %v1542
    %3793 = vmatmul.mubr.bf16.gmra.mrb[0].mxu0 %v1541
    %v3794 = vpop.f32.mrb[0].mxu0
    %v3795 = vadd.f32 %v3602, %v3794
    %v3796 = vpop.f32.mrb[0].mxu0
    %v3797 = vadd.f32 %v3604, %v3796
    %v3798 = vpop.f32.mrb[0].mxu0
    %v3799 = vadd.f32 %v3606, %v3798
    %v3800 = vpop.f32.mrb[0].mxu0
    %v3801 = vadd.f32 %v3608, %v3800
    %3802 = vmatprep.mubr.bf16.mxu0 %v1546
    %3803 = vmatmul.mubr.bf16.gmra.mrb[0].mxu0 %v1545
    %v3804 = vpop.f32.mrb[0].mxu0
    %v3805 = vadd.f32 %v3612, %v3804
    %v3806 = vpop.f32.mrb[0].mxu0
    %v3807 = vadd.f32 %v3614, %v3806
    %v3808 = vpop.f32.mrb[0].mxu0
    %v3809 = vadd.f32 %v3616, %v3808
    %v3810 = vpop.f32.mrb[0].mxu0
    %v3811 = vadd.f32 %v3618, %v3810
    %3812 = vmatprep.mubr.bf16.mxu0 %v1550
    %3813 = vmatmul.mubr.bf16.gmra.mrb[0].mxu0 %v1549
    %v3814 = vpop.f32.mrb[0].mxu0
    %v3815 = vadd.f32 %v3622, %v3814
    %v3816 = vpop.f32.mrb[0].mxu0
    %v3817 = vadd.f32 %v3624, %v3816
    %v3818 = vpop.f32.mrb[0].mxu0
    %v3819 = vadd.f32 %v3626, %v3818
    %v3820 = vpop.f32.mrb[0].mxu0
    %v3821 = vadd.f32 %v3628, %v3820
    %3822 = vmatprep.mubr.bf16.mxu0 %v1554
    %3823 = vmatmul.mubr.bf16.gmra.mrb[0].mxu0 %v1553
    %v3824 = vpop.f32.mrb[0].mxu0
    %v3825 = vadd.f32 %v3632, %v3824
    %v3826 = vpop.f32.mrb[0].mxu0
    %v3827 = vadd.f32 %v3634, %v3826
    %v3828 = vpop.f32.mrb[0].mxu0
    %v3829 = vadd.f32 %v3636, %v3828
    %v3830 = vpop.f32.mrb[0].mxu0
    %v3831 = vadd.f32 %v3638, %v3830
    %3832 = vmatprep.mubr.bf16.mxu0 %v1558
    %3833 = vmatmul.mubr.bf16.gmra.mrb[0].mxu0 %v1557
    %v3834 = vpop.f32.mrb[0].mxu0
    %v3835 = vadd.f32 %v3642, %v3834
    %v3836 = vpop.f32.mrb[0].mxu0
    %v3837 = vadd.f32 %v3644, %v3836
    %v3838 = vpop.f32.mrb[0].mxu0
    %v3839 = vadd.f32 %v3646, %v3838
    %v3840 = vpop.f32.mrb[0].mxu0
    %v3841 = vadd.f32 %v3648, %v3840
    %3842 = vmatprep.mubr.bf16.mxu0 %v1562
    %3843 = vmatmul.mubr.bf16.gmra.mrb[0].mxu0 %v1561
    %v3844 = vpop.f32.mrb[0].mxu0
    %v3845 = vadd.f32 %v3652, %v3844
    %v3846 = vpop.f32.mrb[0].mxu0
    %v3847 = vadd.f32 %v3654, %v3846
    %v3848 = vpop.f32.mrb[0].mxu0
    %v3849 = vadd.f32 %v3656, %v3848
    %v3850 = vpop.f32.mrb[0].mxu0
    %v3851 = vadd.f32 %v3658, %v3850
    %3852 = vmatprep.mubr.bf16.mxu0 %v1566
    %3853 = vmatmul.mubr.bf16.gmra.mrb[0].mxu0 %v1565
    %v3854 = vpop.f32.mrb[0].mxu0
    %v3855 = vadd.f32 %v3662, %v3854
    %v3856 = vpop.f32.mrb[0].mxu0
    %v3857 = vadd.f32 %v3664, %v3856
    %v3858 = vpop.f32.mrb[0].mxu0
    %v3859 = vadd.f32 %v3666, %v3858
    %v3860 = vpop.f32.mrb[0].mxu0
    %v3861 = vadd.f32 %v3668, %v3860
    %3862 = vmatprep.mubr.bf16.mxu0 %v1570
    %3863 = vmatmul.mubr.bf16.gmra.mrb[0].mxu0 %v1569
    %v3864 = vpop.f32.mrb[0].mxu0
    %v3865 = vadd.f32 %v3672, %v3864
    %v3866 = vpop.f32.mrb[0].mxu0
    %v3867 = vadd.f32 %v3674, %v3866
    %v3868 = vpop.f32.mrb[0].mxu0
    %v3869 = vadd.f32 %v3676, %v3868
    %v3870 = vpop.f32.mrb[0].mxu0
    %v3871 = vadd.f32 %v3678, %v3870
    %3872 = vmatprep.mubr.bf16.mxu0 %v1574
    %3873 = vmatmul.mubr.bf16.gmra.mrb[0].mxu0 %v1573
    %v3874 = vpop.f32.mrb[0].mxu0
    %v3875 = vadd.f32 %v3682, %v3874
    %v3876 = vpop.f32.mrb[0].mxu0
    %v3877 = vadd.f32 %v3684, %v3876
    %v3878 = vpop.f32.mrb[0].mxu0
    %v3879 = vadd.f32 %v3686, %v3878
    %v3880 = vpop.f32.mrb[0].mxu0
    %v3881 = vadd.f32 %v3688, %v3880
    %3882 = vdwg.mxu0
    %3883 = vmatprep.subr.bf16.mxu0 %v2604
    %3884 = vmatpush1.bf16.msra.mxu0 %v2603
    %3885 = vmatprep.subr.bf16.mxu0 %v2612
    %3886 = vmatpush1.bf16.msra.mxu0 %v2611
    %3887 = vmatprep.subr.bf16.mxu0 %v2620
    %3888 = vmatpush1.bf16.msra.mxu0 %v2619
    %3889 = vmatprep.subr.bf16.mxu0 %v2628
    %3890 = vmatpush1.bf16.msra.mxu0 %v2627
    %3891 = vmatprep.subr.bf16.mxu0 %v2636
    %3892 = vmatpush1.bf16.msra.mxu0 %v2635
    %3893 = vmatprep.subr.bf16.mxu0 %v2644
    %3894 = vmatpush1.bf16.msra.mxu0 %v2643
    %3895 = vmatprep.subr.bf16.mxu0 %v2652
    %3896 = vmatpush1.bf16.msra.mxu0 %v2651
    %3897 = vmatprep.subr.bf16.mxu0 %v2660
    %3898 = vmatpush1.bf16.msra.mxu0 %v2659
    %3899 = vmatprep.subr.bf16.mxu0 %v2668
    %3900 = vmatpush1.bf16.msra.mxu0 %v2667
    %3901 = vmatprep.subr.bf16.mxu0 %v2676
    %3902 = vmatpush1.bf16.msra.mxu0 %v2675
    %3903 = vmatprep.subr.bf16.mxu0 %v2684
    %3904 = vmatpush1.bf16.msra.mxu0 %v2683
    %3905 = vmatprep.subr.bf16.mxu0 %v2692
    %3906 = vmatpush1.bf16.msra.mxu0 %v2691
    %3907 = vmatprep.subr.bf16.mxu0 %v2700
    %3908 = vmatpush1.bf16.msra.mxu0 %v2699
    %3909 = vmatprep.subr.bf16.mxu0 %v2708
    %3910 = vmatpush1.bf16.msra.mxu0 %v2707
    %3911 = vmatprep.subr.bf16.mxu0 %v2716
    %3912 = vmatpush1.bf16.msra.mxu0 %v2715
    %3913 = vmatprep.subr.bf16.mxu0 %v2724
    %3914 = vmatpush1.bf16.msra.mxu0 %v2723
    %3915 = vmatprep.mubr.bf16.mxu0 %v1512
    %3916 = vmatmul.mubr.bf16.gmra.mrb[0].mxu0 %v1511
    %v3917 = vpop.f32.mrb[0].mxu0
    %v3918 = vadd.f32 0.0, %v3917
    %v3919 = vpop.f32.mrb[0].mxu0
    %v3920 = vadd.f32 0.0, %v3919
    %v3921 = vpop.f32.mrb[0].mxu0
    %v3922 = vadd.f32 0.0, %v3921
    %v3923 = vpop.f32.mrb[0].mxu0
    %v3924 = vadd.f32 0.0, %v3923
    %3925 = vmatprep.mubr.bf16.mxu0 %v1516
    %3926 = vmatmul.mubr.bf16.gmra.mrb[0].mxu0 %v1515
    %v3927 = vpop.f32.mrb[0].mxu0
    %v3928 = vadd.f32 0.0, %v3927
    %v3929 = vpop.f32.mrb[0].mxu0
    %v3930 = vadd.f32 0.0, %v3929
    %v3931 = vpop.f32.mrb[0].mxu0
    %v3932 = vadd.f32 0.0, %v3931
    %v3933 = vpop.f32.mrb[0].mxu0
    %v3934 = vadd.f32 0.0, %v3933
    %3935 = vmatprep.mubr.bf16.mxu0 %v1520
    %3936 = vmatmul.mubr.bf16.gmra.mrb[0].mxu0 %v1519
    %v3937 = vpop.f32.mrb[0].mxu0
    %v3938 = vadd.f32 0.0, %v3937
    %v3939 = vpop.f32.mrb[0].mxu0
    %v3940 = vadd.f32 0.0, %v3939
    %v3941 = vpop.f32.mrb[0].mxu0
    %v3942 = vadd.f32 0.0, %v3941
    %v3943 = vpop.f32.mrb[0].mxu0
    %v3944 = vadd.f32 0.0, %v3943
    %3945 = vmatprep.mubr.bf16.mxu0 %v1524
    %3946 = vmatmul.mubr.bf16.gmra.mrb[0].mxu0 %v1523
    %v3947 = vpop.f32.mrb[0].mxu0
    %v3948 = vadd.f32 0.0, %v3947
    %v3949 = vpop.f32.mrb[0].mxu0
    %v3950 = vadd.f32 0.0, %v3949
    %v3951 = vpop.f32.mrb[0].mxu0
    %v3952 = vadd.f32 0.0, %v3951
    %v3953 = vpop.f32.mrb[0].mxu0
    %v3954 = vadd.f32 0.0, %v3953
    %3955 = vmatprep.mubr.bf16.mxu0 %v1528
    %3956 = vmatmul.mubr.bf16.gmra.mrb[0].mxu0 %v1527
    %v3957 = vpop.f32.mrb[0].mxu0
    %v3958 = vadd.f32 0.0, %v3957
    %v3959 = vpop.f32.mrb[0].mxu0
    %v3960 = vadd.f32 0.0, %v3959
    %v3961 = vpop.f32.mrb[0].mxu0
    %v3962 = vadd.f32 0.0, %v3961
    %v3963 = vpop.f32.mrb[0].mxu0
    %v3964 = vadd.f32 0.0, %v3963
    %3965 = vmatprep.mubr.bf16.mxu0 %v1532
    %3966 = vmatmul.mubr.bf16.gmra.mrb[0].mxu0 %v1531
    %v3967 = vpop.f32.mrb[0].mxu0
    %v3968 = vadd.f32 0.0, %v3967
    %v3969 = vpop.f32.mrb[0].mxu0
    %v3970 = vadd.f32 0.0, %v3969
    %v3971 = vpop.f32.mrb[0].mxu0
    %v3972 = vadd.f32 0.0, %v3971
    %v3973 = vpop.f32.mrb[0].mxu0
    %v3974 = vadd.f32 0.0, %v3973
    %3975 = vmatprep.mubr.bf16.mxu0 %v1536
    %3976 = vmatmul.mubr.bf16.gmra.mrb[0].mxu0 %v1535
    %v3977 = vpop.f32.mrb[0].mxu0
    %v3978 = vadd.f32 0.0, %v3977
    %v3979 = vpop.f32.mrb[0].mxu0
    %v3980 = vadd.f32 0.0, %v3979
    %v3981 = vpop.f32.mrb[0].mxu0
    %v3982 = vadd.f32 0.0, %v3981
    %v3983 = vpop.f32.mrb[0].mxu0
    %v3984 = vadd.f32 0.0, %v3983
    %3985 = vmatprep.mubr.bf16.mxu0 %v1540
    %3986 = vmatmul.mubr.bf16.gmra.mrb[0].mxu0 %v1539
    %v3987 = vpop.f32.mrb[0].mxu0
    %v3988 = vadd.f32 0.0, %v3987
    %v3989 = vpop.f32.mrb[0].mxu0
    %v3990 = vadd.f32 0.0, %v3989
    %v3991 = vpop.f32.mrb[0].mxu0
    %v3992 = vadd.f32 0.0, %v3991
    %v3993 = vpop.f32.mrb[0].mxu0
    %v3994 = vadd.f32 0.0, %v3993
    %3995 = vmatprep.mubr.bf16.mxu0 %v1544
    %3996 = vmatmul.mubr.bf16.gmra.mrb[0].mxu0 %v1543
    %v3997 = vpop.f32.mrb[0].mxu0
    %v3998 = vadd.f32 0.0, %v3997
    %v3999 = vpop.f32.mrb[0].mxu0
    %v4000 = vadd.f32 0.0, %v3999
    %v4001 = vpop.f32.mrb[0].mxu0
    %v4002 = vadd.f32 0.0, %v4001
    %v4003 = vpop.f32.mrb[0].mxu0
    %v4004 = vadd.f32 0.0, %v4003
    %4005 = vmatprep.mubr.bf16.mxu0 %v1548
    %4006 = vmatmul.mubr.bf16.gmra.mrb[0].mxu0 %v1547
    %v4007 = vpop.f32.mrb[0].mxu0
    %v4008 = vadd.f32 0.0, %v4007
    %v4009 = vpop.f32.mrb[0].mxu0
    %v4010 = vadd.f32 0.0, %v4009
    %v4011 = vpop.f32.mrb[0].mxu0
    %v4012 = vadd.f32 0.0, %v4011
    %v4013 = vpop.f32.mrb[0].mxu0
    %v4014 = vadd.f32 0.0, %v4013
    %4015 = vmatprep.mubr.bf16.mxu0 %v1552
    %4016 = vmatmul.mubr.bf16.gmra.mrb[0].mxu0 %v1551
    %v4017 = vpop.f32.mrb[0].mxu0
    %v4018 = vadd.f32 0.0, %v4017
    %v4019 = vpop.f32.mrb[0].mxu0
    %v4020 = vadd.f32 0.0, %v4019
    %v4021 = vpop.f32.mrb[0].mxu0
    %v4022 = vadd.f32 0.0, %v4021
    %v4023 = vpop.f32.mrb[0].mxu0
    %v4024 = vadd.f32 0.0, %v4023
    %4025 = vmatprep.mubr.bf16.mxu0 %v1556
    %4026 = vmatmul.mubr.bf16.gmra.mrb[0].mxu0 %v1555
    %v4027 = vpop.f32.mrb[0].mxu0
    %v4028 = vadd.f32 0.0, %v4027
    %v4029 = vpop.f32.mrb[0].mxu0
    %v4030 = vadd.f32 0.0, %v4029
    %v4031 = vpop.f32.mrb[0].mxu0
    %v4032 = vadd.f32 0.0, %v4031
    %v4033 = vpop.f32.mrb[0].mxu0
    %v4034 = vadd.f32 0.0, %v4033
    %4035 = vmatprep.mubr.bf16.mxu0 %v1560
    %4036 = vmatmul.mubr.bf16.gmra.mrb[0].mxu0 %v1559
    %v4037 = vpop.f32.mrb[0].mxu0
    %v4038 = vadd.f32 0.0, %v4037
    %v4039 = vpop.f32.mrb[0].mxu0
    %v4040 = vadd.f32 0.0, %v4039
    %v4041 = vpop.f32.mrb[0].mxu0
    %v4042 = vadd.f32 0.0, %v4041
    %v4043 = vpop.f32.mrb[0].mxu0
    %v4044 = vadd.f32 0.0, %v4043
    %4045 = vmatprep.mubr.bf16.mxu0 %v1564
    %4046 = vmatmul.mubr.bf16.gmra.mrb[0].mxu0 %v1563
    %v4047 = vpop.f32.mrb[0].mxu0
    %v4048 = vadd.f32 0.0, %v4047
    %v4049 = vpop.f32.mrb[0].mxu0
    %v4050 = vadd.f32 0.0, %v4049
    %v4051 = vpop.f32.mrb[0].mxu0
    %v4052 = vadd.f32 0.0, %v4051
    %v4053 = vpop.f32.mrb[0].mxu0
    %v4054 = vadd.f32 0.0, %v4053
    %4055 = vmatprep.mubr.bf16.mxu0 %v1568
    %4056 = vmatmul.mubr.bf16.gmra.mrb[0].mxu0 %v1567
    %v4057 = vpop.f32.mrb[0].mxu0
    %v4058 = vadd.f32 0.0, %v4057
    %v4059 = vpop.f32.mrb[0].mxu0
    %v4060 = vadd.f32 0.0, %v4059
    %v4061 = vpop.f32.mrb[0].mxu0
    %v4062 = vadd.f32 0.0, %v4061
    %v4063 = vpop.f32.mrb[0].mxu0
    %v4064 = vadd.f32 0.0, %v4063
    %4065 = vmatprep.mubr.bf16.mxu0 %v1572
    %4066 = vmatmul.mubr.bf16.gmra.mrb[0].mxu0 %v1571
    %v4067 = vpop.f32.mrb[0].mxu0
    %v4068 = vadd.f32 0.0, %v4067
    %v4069 = vpop.f32.mrb[0].mxu0
    %v4070 = vadd.f32 0.0, %v4069
    %v4071 = vpop.f32.mrb[0].mxu0
    %v4072 = vadd.f32 0.0, %v4071
    %v4073 = vpop.f32.mrb[0].mxu0
    %v4074 = vadd.f32 0.0, %v4073
    %4075 = vdwg.mxu0
    %4076 = vmatprep.subr.bf16.mxu0 %v2732
    %4077 = vmatpush1.bf16.msra.mxu0 %v2731
    %4078 = vmatprep.subr.bf16.mxu0 %v2740
    %4079 = vmatpush1.bf16.msra.mxu0 %v2739
    %4080 = vmatprep.subr.bf16.mxu0 %v2748
    %4081 = vmatpush1.bf16.msra.mxu0 %v2747
    %4082 = vmatprep.subr.bf16.mxu0 %v2756
    %4083 = vmatpush1.bf16.msra.mxu0 %v2755
    %4084 = vmatprep.subr.bf16.mxu0 %v2764
    %4085 = vmatpush1.bf16.msra.mxu0 %v2763
    %4086 = vmatprep.subr.bf16.mxu0 %v2772
    %4087 = vmatpush1.bf16.msra.mxu0 %v2771
    %4088 = vmatprep.subr.bf16.mxu0 %v2780
    %4089 = vmatpush1.bf16.msra.mxu0 %v2779
    %4090 = vmatprep.subr.bf16.mxu0 %v2788
    %4091 = vmatpush1.bf16.msra.mxu0 %v2787
    %4092 = vmatprep.subr.bf16.mxu0 %v2796
    %4093 = vmatpush1.bf16.msra.mxu0 %v2795
    %4094 = vmatprep.subr.bf16.mxu0 %v2804
    %4095 = vmatpush1.bf16.msra.mxu0 %v2803
    %4096 = vmatprep.subr.bf16.mxu0 %v2812
    %4097 = vmatpush1.bf16.msra.mxu0 %v2811
    %4098 = vmatprep.subr.bf16.mxu0 %v2820
    %4099 = vmatpush1.bf16.msra.mxu0 %v2819
    %4100 = vmatprep.subr.bf16.mxu0 %v2828
    %4101 = vmatpush1.bf16.msra.mxu0 %v2827
    %4102 = vmatprep.subr.bf16.mxu0 %v2836
    %4103 = vmatpush1.bf16.msra.mxu0 %v2835
    %4104 = vmatprep.subr.bf16.mxu0 %v2844
    %4105 = vmatpush1.bf16.msra.mxu0 %v2843
    %4106 = vmatprep.subr.bf16.mxu0 %v2852
    %4107 = vmatpush1.bf16.msra.mxu0 %v2851
    %4108 = vmatprep.mubr.bf16.mxu0 %v1514
    %4109 = vmatmul.mubr.bf16.gmra.mrb[0].mxu0 %v1513
    %v4110 = vpop.f32.mrb[0].mxu0
    %v4111 = vadd.f32 %v3918, %v4110
    %v4112 = vpop.f32.mrb[0].mxu0
    %v4113 = vadd.f32 %v3920, %v4112
    %v4114 = vpop.f32.mrb[0].mxu0
    %v4115 = vadd.f32 %v3922, %v4114
    %v4116 = vpop.f32.mrb[0].mxu0
    %v4117 = vadd.f32 %v3924, %v4116
    %4118 = vmatprep.mubr.bf16.mxu0 %v1518
    %4119 = vmatmul.mubr.bf16.gmra.mrb[0].mxu0 %v1517
    %v4120 = vpop.f32.mrb[0].mxu0
    %v4121 = vadd.f32 %v3928, %v4120
    %v4122 = vpop.f32.mrb[0].mxu0
    %v4123 = vadd.f32 %v3930, %v4122
    %v4124 = vpop.f32.mrb[0].mxu0
    %v4125 = vadd.f32 %v3932, %v4124
    %v4126 = vpop.f32.mrb[0].mxu0
    %v4127 = vadd.f32 %v3934, %v4126
    %4128 = vmatprep.mubr.bf16.mxu0 %v1522
    %4129 = vmatmul.mubr.bf16.gmra.mrb[0].mxu0 %v1521
    %v4130 = vpop.f32.mrb[0].mxu0
    %v4131 = vadd.f32 %v3938, %v4130
    %v4132 = vpop.f32.mrb[0].mxu0
    %v4133 = vadd.f32 %v3940, %v4132
    %v4134 = vpop.f32.mrb[0].mxu0
    %v4135 = vadd.f32 %v3942, %v4134
    %v4136 = vpop.f32.mrb[0].mxu0
    %v4137 = vadd.f32 %v3944, %v4136
    %4138 = vmatprep.mubr.bf16.mxu0 %v1526
    %4139 = vmatmul.mubr.bf16.gmra.mrb[0].mxu0 %v1525
    %v4140 = vpop.f32.mrb[0].mxu0
    %v4141 = vadd.f32 %v3948, %v4140
    %v4142 = vpop.f32.mrb[0].mxu0
    %v4143 = vadd.f32 %v3950, %v4142
    %v4144 = vpop.f32.mrb[0].mxu0
    %v4145 = vadd.f32 %v3952, %v4144
    %v4146 = vpop.f32.mrb[0].mxu0
    %v4147 = vadd.f32 %v3954, %v4146
    %4148 = vmatprep.mubr.bf16.mxu0 %v1530
    %4149 = vmatmul.mubr.bf16.gmra.mrb[0].mxu0 %v1529
    %v4150 = vpop.f32.mrb[0].mxu0
    %v4151 = vadd.f32 %v3958, %v4150
    %v4152 = vpop.f32.mrb[0].mxu0
    %v4153 = vadd.f32 %v3960, %v4152
    %v4154 = vpop.f32.mrb[0].mxu0
    %v4155 = vadd.f32 %v3962, %v4154
    %v4156 = vpop.f32.mrb[0].mxu0
    %v4157 = vadd.f32 %v3964, %v4156
    %4158 = vmatprep.mubr.bf16.mxu0 %v1534
    %4159 = vmatmul.mubr.bf16.gmra.mrb[0].mxu0 %v1533
    %v4160 = vpop.f32.mrb[0].mxu0
    %v4161 = vadd.f32 %v3968, %v4160
    %v4162 = vpop.f32.mrb[0].mxu0
    %v4163 = vadd.f32 %v3970, %v4162
    %v4164 = vpop.f32.mrb[0].mxu0
    %v4165 = vadd.f32 %v3972, %v4164
    %v4166 = vpop.f32.mrb[0].mxu0
    %v4167 = vadd.f32 %v3974, %v4166
    %4168 = vmatprep.mubr.bf16.mxu0 %v1538
    %4169 = vmatmul.mubr.bf16.gmra.mrb[0].mxu0 %v1537
    %v4170 = vpop.f32.mrb[0].mxu0
    %v4171 = vadd.f32 %v3978, %v4170
    %v4172 = vpop.f32.mrb[0].mxu0
    %v4173 = vadd.f32 %v3980, %v4172
    %v4174 = vpop.f32.mrb[0].mxu0
    %v4175 = vadd.f32 %v3982, %v4174
    %v4176 = vpop.f32.mrb[0].mxu0
    %v4177 = vadd.f32 %v3984, %v4176
    %4178 = vmatprep.mubr.bf16.mxu0 %v1542
    %4179 = vmatmul.mubr.bf16.gmra.mrb[0].mxu0 %v1541
    %v4180 = vpop.f32.mrb[0].mxu0
    %v4181 = vadd.f32 %v3988, %v4180
    %v4182 = vpop.f32.mrb[0].mxu0
    %v4183 = vadd.f32 %v3990, %v4182
    %v4184 = vpop.f32.mrb[0].mxu0
    %v4185 = vadd.f32 %v3992, %v4184
    %v4186 = vpop.f32.mrb[0].mxu0
    %v4187 = vadd.f32 %v3994, %v4186
    %4188 = vmatprep.mubr.bf16.mxu0 %v1546
    %4189 = vmatmul.mubr.bf16.gmra.mrb[0].mxu0 %v1545
    %v4190 = vpop.f32.mrb[0].mxu0
    %v4191 = vadd.f32 %v3998, %v4190
    %v4192 = vpop.f32.mrb[0].mxu0
    %v4193 = vadd.f32 %v4000, %v4192
    %v4194 = vpop.f32.mrb[0].mxu0
    %v4195 = vadd.f32 %v4002, %v4194
    %v4196 = vpop.f32.mrb[0].mxu0
    %v4197 = vadd.f32 %v4004, %v4196
    %4198 = vmatprep.mubr.bf16.mxu0 %v1550
    %4199 = vmatmul.mubr.bf16.gmra.mrb[0].mxu0 %v1549
    %v4200 = vpop.f32.mrb[0].mxu0
    %v4201 = vadd.f32 %v4008, %v4200
    %v4202 = vpop.f32.mrb[0].mxu0
    %v4203 = vadd.f32 %v4010, %v4202
    %v4204 = vpop.f32.mrb[0].mxu0
    %v4205 = vadd.f32 %v4012, %v4204
    %v4206 = vpop.f32.mrb[0].mxu0
    %v4207 = vadd.f32 %v4014, %v4206
    %4208 = vmatprep.mubr.bf16.mxu0 %v1554
    %4209 = vmatmul.mubr.bf16.gmra.mrb[0].mxu0 %v1553
    %v4210 = vpop.f32.mrb[0].mxu0
    %v4211 = vadd.f32 %v4018, %v4210
    %v4212 = vpop.f32.mrb[0].mxu0
    %v4213 = vadd.f32 %v4020, %v4212
    %v4214 = vpop.f32.mrb[0].mxu0
    %v4215 = vadd.f32 %v4022, %v4214
    %v4216 = vpop.f32.mrb[0].mxu0
    %v4217 = vadd.f32 %v4024, %v4216
    %4218 = vmatprep.mubr.bf16.mxu0 %v1558
    %4219 = vmatmul.mubr.bf16.gmra.mrb[0].mxu0 %v1557
    %v4220 = vpop.f32.mrb[0].mxu0
    %v4221 = vadd.f32 %v4028, %v4220
    %v4222 = vpop.f32.mrb[0].mxu0
    %v4223 = vadd.f32 %v4030, %v4222
    %v4224 = vpop.f32.mrb[0].mxu0
    %v4225 = vadd.f32 %v4032, %v4224
    %v4226 = vpop.f32.mrb[0].mxu0
    %v4227 = vadd.f32 %v4034, %v4226
    %4228 = vmatprep.mubr.bf16.mxu0 %v1562
    %4229 = vmatmul.mubr.bf16.gmra.mrb[0].mxu0 %v1561
    %v4230 = vpop.f32.mrb[0].mxu0
    %v4231 = vadd.f32 %v4038, %v4230
    %v4232 = vpop.f32.mrb[0].mxu0
    %v4233 = vadd.f32 %v4040, %v4232
    %v4234 = vpop.f32.mrb[0].mxu0
    %v4235 = vadd.f32 %v4042, %v4234
    %v4236 = vpop.f32.mrb[0].mxu0
    %v4237 = vadd.f32 %v4044, %v4236
    %4238 = vmatprep.mubr.bf16.mxu0 %v1566
    %4239 = vmatmul.mubr.bf16.gmra.mrb[0].mxu0 %v1565
    %v4240 = vpop.f32.mrb[0].mxu0
    %v4241 = vadd.f32 %v4048, %v4240
    %v4242 = vpop.f32.mrb[0].mxu0
    %v4243 = vadd.f32 %v4050, %v4242
    %v4244 = vpop.f32.mrb[0].mxu0
    %v4245 = vadd.f32 %v4052, %v4244
    %v4246 = vpop.f32.mrb[0].mxu0
    %v4247 = vadd.f32 %v4054, %v4246
    %4248 = vmatprep.mubr.bf16.mxu0 %v1570
    %4249 = vmatmul.mubr.bf16.gmra.mrb[0].mxu0 %v1569
    %v4250 = vpop.f32.mrb[0].mxu0
    %v4251 = vadd.f32 %v4058, %v4250
    %v4252 = vpop.f32.mrb[0].mxu0
    %v4253 = vadd.f32 %v4060, %v4252
    %v4254 = vpop.f32.mrb[0].mxu0
    %v4255 = vadd.f32 %v4062, %v4254
    %v4256 = vpop.f32.mrb[0].mxu0
    %v4257 = vadd.f32 %v4064, %v4256
    %4258 = vmatprep.mubr.bf16.mxu0 %v1574
    %4259 = vmatmul.mubr.bf16.gmra.mrb[0].mxu0 %v1573
    %v4260 = vpop.f32.mrb[0].mxu0
    %v4261 = vadd.f32 %v4068, %v4260
    %v4262 = vpop.f32.mrb[0].mxu0
    %v4263 = vadd.f32 %v4070, %v4262
    %v4264 = vpop.f32.mrb[0].mxu0
    %v4265 = vadd.f32 %v4072, %v4264
    %v4266 = vpop.f32.mrb[0].mxu0
    %v4267 = vadd.f32 %v4074, %v4266
    %4268 = vdwg.mxu0
    %4269 = vmatprep.subr.bf16.mxu0 %v2606
    %4270 = vmatpush1.bf16.msra.mxu0 %v2605
    %4271 = vmatprep.subr.bf16.mxu0 %v2614
    %4272 = vmatpush1.bf16.msra.mxu0 %v2613
    %4273 = vmatprep.subr.bf16.mxu0 %v2622
    %4274 = vmatpush1.bf16.msra.mxu0 %v2621
    %4275 = vmatprep.subr.bf16.mxu0 %v2630
    %4276 = vmatpush1.bf16.msra.mxu0 %v2629
    %4277 = vmatprep.subr.bf16.mxu0 %v2638
    %4278 = vmatpush1.bf16.msra.mxu0 %v2637
    %4279 = vmatprep.subr.bf16.mxu0 %v2646
    %4280 = vmatpush1.bf16.msra.mxu0 %v2645
    %4281 = vmatprep.subr.bf16.mxu0 %v2654
    %4282 = vmatpush1.bf16.msra.mxu0 %v2653
    %4283 = vmatprep.subr.bf16.mxu0 %v2662
    %4284 = vmatpush1.bf16.msra.mxu0 %v2661
    %4285 = vmatprep.subr.bf16.mxu0 %v2670
    %4286 = vmatpush1.bf16.msra.mxu0 %v2669
    %4287 = vmatprep.subr.bf16.mxu0 %v2678
    %4288 = vmatpush1.bf16.msra.mxu0 %v2677
    %4289 = vmatprep.subr.bf16.mxu0 %v2686
    %4290 = vmatpush1.bf16.msra.mxu0 %v2685
    %4291 = vmatprep.subr.bf16.mxu0 %v2694
    %4292 = vmatpush1.bf16.msra.mxu0 %v2693
    %4293 = vmatprep.subr.bf16.mxu0 %v2702
    %4294 = vmatpush1.bf16.msra.mxu0 %v2701
    %4295 = vmatprep.subr.bf16.mxu0 %v2710
    %4296 = vmatpush1.bf16.msra.mxu0 %v2709
    %4297 = vmatprep.subr.bf16.mxu0 %v2718
    %4298 = vmatpush1.bf16.msra.mxu0 %v2717
    %4299 = vmatprep.subr.bf16.mxu0 %v2726
    %4300 = vmatpush1.bf16.msra.mxu0 %v2725
    %4301 = vmatprep.mubr.bf16.mxu0 %v1512
    %4302 = vmatmul.mubr.bf16.gmra.mrb[0].mxu0 %v1511
    %v4303 = vpop.f32.mrb[0].mxu0
    %v4304 = vadd.f32 0.0, %v4303
    %v4305 = vpop.f32.mrb[0].mxu0
    %v4306 = vadd.f32 0.0, %v4305
    %v4307 = vpop.f32.mrb[0].mxu0
    %v4308 = vadd.f32 0.0, %v4307
    %v4309 = vpop.f32.mrb[0].mxu0
    %v4310 = vadd.f32 0.0, %v4309
    %4311 = vmatprep.mubr.bf16.mxu0 %v1516
    %4312 = vmatmul.mubr.bf16.gmra.mrb[0].mxu0 %v1515
    %v4313 = vpop.f32.mrb[0].mxu0
    %v4314 = vadd.f32 0.0, %v4313
    %v4315 = vpop.f32.mrb[0].mxu0
    %v4316 = vadd.f32 0.0, %v4315
    %v4317 = vpop.f32.mrb[0].mxu0
    %v4318 = vadd.f32 0.0, %v4317
    %v4319 = vpop.f32.mrb[0].mxu0
    %v4320 = vadd.f32 0.0, %v4319
    %4321 = vmatprep.mubr.bf16.mxu0 %v1520
    %4322 = vmatmul.mubr.bf16.gmra.mrb[0].mxu0 %v1519
    %v4323 = vpop.f32.mrb[0].mxu0
    %v4324 = vadd.f32 0.0, %v4323
    %v4325 = vpop.f32.mrb[0].mxu0
    %v4326 = vadd.f32 0.0, %v4325
    %v4327 = vpop.f32.mrb[0].mxu0
    %v4328 = vadd.f32 0.0, %v4327
    %v4329 = vpop.f32.mrb[0].mxu0
    %v4330 = vadd.f32 0.0, %v4329
    %4331 = vmatprep.mubr.bf16.mxu0 %v1524
    %4332 = vmatmul.mubr.bf16.gmra.mrb[0].mxu0 %v1523
    %v4333 = vpop.f32.mrb[0].mxu0
    %v4334 = vadd.f32 0.0, %v4333
    %v4335 = vpop.f32.mrb[0].mxu0
    %v4336 = vadd.f32 0.0, %v4335
    %v4337 = vpop.f32.mrb[0].mxu0
    %v4338 = vadd.f32 0.0, %v4337
    %v4339 = vpop.f32.mrb[0].mxu0
    %v4340 = vadd.f32 0.0, %v4339
    %4341 = vmatprep.mubr.bf16.mxu0 %v1528
    %4342 = vmatmul.mubr.bf16.gmra.mrb[0].mxu0 %v1527
    %v4343 = vpop.f32.mrb[0].mxu0
    %v4344 = vadd.f32 0.0, %v4343
    %v4345 = vpop.f32.mrb[0].mxu0
    %v4346 = vadd.f32 0.0, %v4345
    %v4347 = vpop.f32.mrb[0].mxu0
    %v4348 = vadd.f32 0.0, %v4347
    %v4349 = vpop.f32.mrb[0].mxu0
    %v4350 = vadd.f32 0.0, %v4349
    %4351 = vmatprep.mubr.bf16.mxu0 %v1532
    %4352 = vmatmul.mubr.bf16.gmra.mrb[0].mxu0 %v1531
    %v4353 = vpop.f32.mrb[0].mxu0
    %v4354 = vadd.f32 0.0, %v4353
    %v4355 = vpop.f32.mrb[0].mxu0
    %v4356 = vadd.f32 0.0, %v4355
    %v4357 = vpop.f32.mrb[0].mxu0
    %v4358 = vadd.f32 0.0, %v4357
    %v4359 = vpop.f32.mrb[0].mxu0
    %v4360 = vadd.f32 0.0, %v4359
    %4361 = vmatprep.mubr.bf16.mxu0 %v1536
    %4362 = vmatmul.mubr.bf16.gmra.mrb[0].mxu0 %v1535
    %v4363 = vpop.f32.mrb[0].mxu0
    %v4364 = vadd.f32 0.0, %v4363
    %v4365 = vpop.f32.mrb[0].mxu0
    %v4366 = vadd.f32 0.0, %v4365
    %v4367 = vpop.f32.mrb[0].mxu0
    %v4368 = vadd.f32 0.0, %v4367
    %v4369 = vpop.f32.mrb[0].mxu0
    %v4370 = vadd.f32 0.0, %v4369
    %4371 = vmatprep.mubr.bf16.mxu0 %v1540
    %4372 = vmatmul.mubr.bf16.gmra.mrb[0].mxu0 %v1539
    %v4373 = vpop.f32.mrb[0].mxu0
    %v4374 = vadd.f32 0.0, %v4373
    %v4375 = vpop.f32.mrb[0].mxu0
    %v4376 = vadd.f32 0.0, %v4375
    %v4377 = vpop.f32.mrb[0].mxu0
    %v4378 = vadd.f32 0.0, %v4377
    %v4379 = vpop.f32.mrb[0].mxu0
    %v4380 = vadd.f32 0.0, %v4379
    %4381 = vmatprep.mubr.bf16.mxu0 %v1544
    %4382 = vmatmul.mubr.bf16.gmra.mrb[0].mxu0 %v1543
    %v4383 = vpop.f32.mrb[0].mxu0
    %v4384 = vadd.f32 0.0, %v4383
    %v4385 = vpop.f32.mrb[0].mxu0
    %v4386 = vadd.f32 0.0, %v4385
    %v4387 = vpop.f32.mrb[0].mxu0
    %v4388 = vadd.f32 0.0, %v4387
    %v4389 = vpop.f32.mrb[0].mxu0
    %v4390 = vadd.f32 0.0, %v4389
    %4391 = vmatprep.mubr.bf16.mxu0 %v1548
    %4392 = vmatmul.mubr.bf16.gmra.mrb[0].mxu0 %v1547
    %v4393 = vpop.f32.mrb[0].mxu0
    %v4394 = vadd.f32 0.0, %v4393
    %v4395 = vpop.f32.mrb[0].mxu0
    %v4396 = vadd.f32 0.0, %v4395
    %v4397 = vpop.f32.mrb[0].mxu0
    %v4398 = vadd.f32 0.0, %v4397
    %v4399 = vpop.f32.mrb[0].mxu0
    %v4400 = vadd.f32 0.0, %v4399
    %4401 = vmatprep.mubr.bf16.mxu0 %v1552
    %4402 = vmatmul.mubr.bf16.gmra.mrb[0].mxu0 %v1551
    %v4403 = vpop.f32.mrb[0].mxu0
    %v4404 = vadd.f32 0.0, %v4403
    %v4405 = vpop.f32.mrb[0].mxu0
    %v4406 = vadd.f32 0.0, %v4405
    %v4407 = vpop.f32.mrb[0].mxu0
    %v4408 = vadd.f32 0.0, %v4407
    %v4409 = vpop.f32.mrb[0].mxu0
    %v4410 = vadd.f32 0.0, %v4409
    %4411 = vmatprep.mubr.bf16.mxu0 %v1556
    %4412 = vmatmul.mubr.bf16.gmra.mrb[0].mxu0 %v1555
    %v4413 = vpop.f32.mrb[0].mxu0
    %v4414 = vadd.f32 0.0, %v4413
    %v4415 = vpop.f32.mrb[0].mxu0
    %v4416 = vadd.f32 0.0, %v4415
    %v4417 = vpop.f32.mrb[0].mxu0
    %v4418 = vadd.f32 0.0, %v4417
    %v4419 = vpop.f32.mrb[0].mxu0
    %v4420 = vadd.f32 0.0, %v4419
    %4421 = vmatprep.mubr.bf16.mxu0 %v1560
    %4422 = vmatmul.mubr.bf16.gmra.mrb[0].mxu0 %v1559
    %v4423 = vpop.f32.mrb[0].mxu0
    %v4424 = vadd.f32 0.0, %v4423
    %v4425 = vpop.f32.mrb[0].mxu0
    %v4426 = vadd.f32 0.0, %v4425
    %v4427 = vpop.f32.mrb[0].mxu0
    %v4428 = vadd.f32 0.0, %v4427
    %v4429 = vpop.f32.mrb[0].mxu0
    %v4430 = vadd.f32 0.0, %v4429
    %4431 = vmatprep.mubr.bf16.mxu0 %v1564
    %4432 = vmatmul.mubr.bf16.gmra.mrb[0].mxu0 %v1563
    %v4433 = vpop.f32.mrb[0].mxu0
    %v4434 = vadd.f32 0.0, %v4433
    %v4435 = vpop.f32.mrb[0].mxu0
    %v4436 = vadd.f32 0.0, %v4435
    %v4437 = vpop.f32.mrb[0].mxu0
    %v4438 = vadd.f32 0.0, %v4437
    %v4439 = vpop.f32.mrb[0].mxu0
    %v4440 = vadd.f32 0.0, %v4439
    %4441 = vmatprep.mubr.bf16.mxu0 %v1568
    %4442 = vmatmul.mubr.bf16.gmra.mrb[0].mxu0 %v1567
    %v4443 = vpop.f32.mrb[0].mxu0
    %v4444 = vadd.f32 0.0, %v4443
    %v4445 = vpop.f32.mrb[0].mxu0
    %v4446 = vadd.f32 0.0, %v4445
    %v4447 = vpop.f32.mrb[0].mxu0
    %v4448 = vadd.f32 0.0, %v4447
    %v4449 = vpop.f32.mrb[0].mxu0
    %v4450 = vadd.f32 0.0, %v4449
    %4451 = vmatprep.mubr.bf16.mxu0 %v1572
    %4452 = vmatmul.mubr.bf16.gmra.mrb[0].mxu0 %v1571
    %v4453 = vpop.f32.mrb[0].mxu0
    %v4454 = vadd.f32 0.0, %v4453
    %v4455 = vpop.f32.mrb[0].mxu0
    %v4456 = vadd.f32 0.0, %v4455
    %v4457 = vpop.f32.mrb[0].mxu0
    %v4458 = vadd.f32 0.0, %v4457
    %v4459 = vpop.f32.mrb[0].mxu0
    %v4460 = vadd.f32 0.0, %v4459
    %4461 = vdwg.mxu0
    %4462 = vmatprep.subr.bf16.mxu0 %v2734
    %4463 = vmatpush1.bf16.msra.mxu0 %v2733
    %4464 = vmatprep.subr.bf16.mxu0 %v2742
    %4465 = vmatpush1.bf16.msra.mxu0 %v2741
    %4466 = vmatprep.subr.bf16.mxu0 %v2750
    %4467 = vmatpush1.bf16.msra.mxu0 %v2749
    %4468 = vmatprep.subr.bf16.mxu0 %v2758
    %4469 = vmatpush1.bf16.msra.mxu0 %v2757
    %4470 = vmatprep.subr.bf16.mxu0 %v2766
    %4471 = vmatpush1.bf16.msra.mxu0 %v2765
    %4472 = vmatprep.subr.bf16.mxu0 %v2774
    %4473 = vmatpush1.bf16.msra.mxu0 %v2773
    %4474 = vmatprep.subr.bf16.mxu0 %v2782
    %4475 = vmatpush1.bf16.msra.mxu0 %v2781
    %4476 = vmatprep.subr.bf16.mxu0 %v2790
    %4477 = vmatpush1.bf16.msra.mxu0 %v2789
    %4478 = vmatprep.subr.bf16.mxu0 %v2798
    %4479 = vmatpush1.bf16.msra.mxu0 %v2797
    %4480 = vmatprep.subr.bf16.mxu0 %v2806
    %4481 = vmatpush1.bf16.msra.mxu0 %v2805
    %4482 = vmatprep.subr.bf16.mxu0 %v2814
    %4483 = vmatpush1.bf16.msra.mxu0 %v2813
    %4484 = vmatprep.subr.bf16.mxu0 %v2822
    %4485 = vmatpush1.bf16.msra.mxu0 %v2821
    %4486 = vmatprep.subr.bf16.mxu0 %v2830
    %4487 = vmatpush1.bf16.msra.mxu0 %v2829
    %4488 = vmatprep.subr.bf16.mxu0 %v2838
    %4489 = vmatpush1.bf16.msra.mxu0 %v2837
    %4490 = vmatprep.subr.bf16.mxu0 %v2846
    %4491 = vmatpush1.bf16.msra.mxu0 %v2845
    %4492 = vmatprep.subr.bf16.mxu0 %v2854
    %4493 = vmatpush1.bf16.msra.mxu0 %v2853
    %4494 = vmatprep.mubr.bf16.mxu0 %v1514
    %4495 = vmatmul.mubr.bf16.gmra.mrb[0].mxu0 %v1513
    %v4496 = vpop.f32.mrb[0].mxu0
    %v4497 = vadd.f32 %v4304, %v4496
    %v4498 = vpop.f32.mrb[0].mxu0
    %v4499 = vadd.f32 %v4306, %v4498
    %v4500 = vpop.f32.mrb[0].mxu0
    %v4501 = vadd.f32 %v4308, %v4500
    %v4502 = vpop.f32.mrb[0].mxu0
    %v4503 = vadd.f32 %v4310, %v4502
    %4504 = vmatprep.mubr.bf16.mxu0 %v1518
    %4505 = vmatmul.mubr.bf16.gmra.mrb[0].mxu0 %v1517
    %v4506 = vpop.f32.mrb[0].mxu0
    %v4507 = vadd.f32 %v4314, %v4506
    %v4508 = vpop.f32.mrb[0].mxu0
    %v4509 = vadd.f32 %v4316, %v4508
    %v4510 = vpop.f32.mrb[0].mxu0
    %v4511 = vadd.f32 %v4318, %v4510
    %v4512 = vpop.f32.mrb[0].mxu0
    %v4513 = vadd.f32 %v4320, %v4512
    %4514 = vmatprep.mubr.bf16.mxu0 %v1522
    %4515 = vmatmul.mubr.bf16.gmra.mrb[0].mxu0 %v1521
    %v4516 = vpop.f32.mrb[0].mxu0
    %v4517 = vadd.f32 %v4324, %v4516
    %v4518 = vpop.f32.mrb[0].mxu0
    %v4519 = vadd.f32 %v4326, %v4518
    %v4520 = vpop.f32.mrb[0].mxu0
    %v4521 = vadd.f32 %v4328, %v4520
    %v4522 = vpop.f32.mrb[0].mxu0
    %v4523 = vadd.f32 %v4330, %v4522
    %4524 = vmatprep.mubr.bf16.mxu0 %v1526
    %4525 = vmatmul.mubr.bf16.gmra.mrb[0].mxu0 %v1525
    %v4526 = vpop.f32.mrb[0].mxu0
    %v4527 = vadd.f32 %v4334, %v4526
    %v4528 = vpop.f32.mrb[0].mxu0
    %v4529 = vadd.f32 %v4336, %v4528
    %v4530 = vpop.f32.mrb[0].mxu0
    %v4531 = vadd.f32 %v4338, %v4530
    %v4532 = vpop.f32.mrb[0].mxu0
    %v4533 = vadd.f32 %v4340, %v4532
    %4534 = vmatprep.mubr.bf16.mxu0 %v1530
    %4535 = vmatmul.mubr.bf16.gmra.mrb[0].mxu0 %v1529
    %v4536 = vpop.f32.mrb[0].mxu0
    %v4537 = vadd.f32 %v4344, %v4536
    %v4538 = vpop.f32.mrb[0].mxu0
    %v4539 = vadd.f32 %v4346, %v4538
    %v4540 = vpop.f32.mrb[0].mxu0
    %v4541 = vadd.f32 %v4348, %v4540
    %v4542 = vpop.f32.mrb[0].mxu0
    %v4543 = vadd.f32 %v4350, %v4542
    %4544 = vmatprep.mubr.bf16.mxu0 %v1534
    %4545 = vmatmul.mubr.bf16.gmra.mrb[0].mxu0 %v1533
    %v4546 = vpop.f32.mrb[0].mxu0
    %v4547 = vadd.f32 %v4354, %v4546
    %v4548 = vpop.f32.mrb[0].mxu0
    %v4549 = vadd.f32 %v4356, %v4548
    %v4550 = vpop.f32.mrb[0].mxu0
    %v4551 = vadd.f32 %v4358, %v4550
    %v4552 = vpop.f32.mrb[0].mxu0
    %v4553 = vadd.f32 %v4360, %v4552
    %4554 = vmatprep.mubr.bf16.mxu0 %v1538
    %4555 = vmatmul.mubr.bf16.gmra.mrb[0].mxu0 %v1537
    %v4556 = vpop.f32.mrb[0].mxu0
    %v4557 = vadd.f32 %v4364, %v4556
    %v4558 = vpop.f32.mrb[0].mxu0
    %v4559 = vadd.f32 %v4366, %v4558
    %v4560 = vpop.f32.mrb[0].mxu0
    %v4561 = vadd.f32 %v4368, %v4560
    %v4562 = vpop.f32.mrb[0].mxu0
    %v4563 = vadd.f32 %v4370, %v4562
    %4564 = vmatprep.mubr.bf16.mxu0 %v1542
    %4565 = vmatmul.mubr.bf16.gmra.mrb[0].mxu0 %v1541
    %v4566 = vpop.f32.mrb[0].mxu0
    %v4567 = vadd.f32 %v4374, %v4566
    %v4568 = vpop.f32.mrb[0].mxu0
    %v4569 = vadd.f32 %v4376, %v4568
    %v4570 = vpop.f32.mrb[0].mxu0
    %v4571 = vadd.f32 %v4378, %v4570
    %v4572 = vpop.f32.mrb[0].mxu0
    %v4573 = vadd.f32 %v4380, %v4572
    %4574 = vmatprep.mubr.bf16.mxu0 %v1546
    %4575 = vmatmul.mubr.bf16.gmra.mrb[0].mxu0 %v1545
    %v4576 = vpop.f32.mrb[0].mxu0
    %v4577 = vadd.f32 %v4384, %v4576
    %v4578 = vpop.f32.mrb[0].mxu0
    %v4579 = vadd.f32 %v4386, %v4578
    %v4580 = vpop.f32.mrb[0].mxu0
    %v4581 = vadd.f32 %v4388, %v4580
    %v4582 = vpop.f32.mrb[0].mxu0
    %v4583 = vadd.f32 %v4390, %v4582
    %4584 = vmatprep.mubr.bf16.mxu0 %v1550
    %4585 = vmatmul.mubr.bf16.gmra.mrb[0].mxu0 %v1549
    %v4586 = vpop.f32.mrb[0].mxu0
    %v4587 = vadd.f32 %v4394, %v4586
    %v4588 = vpop.f32.mrb[0].mxu0
    %v4589 = vadd.f32 %v4396, %v4588
    %v4590 = vpop.f32.mrb[0].mxu0
    %v4591 = vadd.f32 %v4398, %v4590
    %v4592 = vpop.f32.mrb[0].mxu0
    %v4593 = vadd.f32 %v4400, %v4592
    %4594 = vmatprep.mubr.bf16.mxu0 %v1554
    %4595 = vmatmul.mubr.bf16.gmra.mrb[0].mxu0 %v1553
    %v4596 = vpop.f32.mrb[0].mxu0
    %v4597 = vadd.f32 %v4404, %v4596
    %v4598 = vpop.f32.mrb[0].mxu0
    %v4599 = vadd.f32 %v4406, %v4598
    %v4600 = vpop.f32.mrb[0].mxu0
    %v4601 = vadd.f32 %v4408, %v4600
    %v4602 = vpop.f32.mrb[0].mxu0
    %v4603 = vadd.f32 %v4410, %v4602
    %4604 = vmatprep.mubr.bf16.mxu0 %v1558
    %4605 = vmatmul.mubr.bf16.gmra.mrb[0].mxu0 %v1557
    %v4606 = vpop.f32.mrb[0].mxu0
    %v4607 = vadd.f32 %v4414, %v4606
    %v4608 = vpop.f32.mrb[0].mxu0
    %v4609 = vadd.f32 %v4416, %v4608
    %v4610 = vpop.f32.mrb[0].mxu0
    %v4611 = vadd.f32 %v4418, %v4610
    %v4612 = vpop.f32.mrb[0].mxu0
    %v4613 = vadd.f32 %v4420, %v4612
    %4614 = vmatprep.mubr.bf16.mxu0 %v1562
    %4615 = vmatmul.mubr.bf16.gmra.mrb[0].mxu0 %v1561
    %v4616 = vpop.f32.mrb[0].mxu0
    %v4617 = vadd.f32 %v4424, %v4616
    %v4618 = vpop.f32.mrb[0].mxu0
    %v4619 = vadd.f32 %v4426, %v4618
    %v4620 = vpop.f32.mrb[0].mxu0
    %v4621 = vadd.f32 %v4428, %v4620
    %v4622 = vpop.f32.mrb[0].mxu0
    %v4623 = vadd.f32 %v4430, %v4622
    %4624 = vmatprep.mubr.bf16.mxu0 %v1566
    %4625 = vmatmul.mubr.bf16.gmra.mrb[0].mxu0 %v1565
    %v4626 = vpop.f32.mrb[0].mxu0
    %v4627 = vadd.f32 %v4434, %v4626
    %v4628 = vpop.f32.mrb[0].mxu0
    %v4629 = vadd.f32 %v4436, %v4628
    %v4630 = vpop.f32.mrb[0].mxu0
    %v4631 = vadd.f32 %v4438, %v4630
    %v4632 = vpop.f32.mrb[0].mxu0
    %v4633 = vadd.f32 %v4440, %v4632
    %4634 = vmatprep.mubr.bf16.mxu0 %v1570
    %4635 = vmatmul.mubr.bf16.gmra.mrb[0].mxu0 %v1569
    %v4636 = vpop.f32.mrb[0].mxu0
    %v4637 = vadd.f32 %v4444, %v4636
    %v4638 = vpop.f32.mrb[0].mxu0
    %v4639 = vadd.f32 %v4446, %v4638
    %v4640 = vpop.f32.mrb[0].mxu0
    %v4641 = vadd.f32 %v4448, %v4640
    %v4642 = vpop.f32.mrb[0].mxu0
    %v4643 = vadd.f32 %v4450, %v4642
    %4644 = vmatprep.mubr.bf16.mxu0 %v1574
    %4645 = vmatmul.mubr.bf16.gmra.mrb[0].mxu0 %v1573
    %v4646 = vpop.f32.mrb[0].mxu0
    %v4647 = vadd.f32 %v4454, %v4646
    %v4648 = vpop.f32.mrb[0].mxu0
    %v4649 = vadd.f32 %v4456, %v4648
    %v4650 = vpop.f32.mrb[0].mxu0
    %v4651 = vadd.f32 %v4458, %v4650
    %v4652 = vpop.f32.mrb[0].mxu0
    %v4653 = vadd.f32 %v4460, %v4652
    %4654 = vdwg.mxu0
    %v4655 = vmax.f32 %v3339, %v3343
    %v4656 = vmax.f32 %v4655, %v3349
    %v4657 = vmax.f32 %v4656, %v3353
    %v4658 = vmax.f32 %v4657, %v3359
    %v4659 = vmax.f32 %v4658, %v3363
    %v4660 = vmax.f32 %v4659, %v3369
    %v4661 = vmax.f32 %v4660, %v3373
    %v4662 = vmax.f32 %v4661, %v3379
    %v4663 = vmax.f32 %v4662, %v3383
    %v4664 = vmax.f32 %v4663, %v3389
    %v4665 = vmax.f32 %v4664, %v3393
    %v4666 = vmax.f32 %v4665, %v3399
    %v4667 = vmax.f32 %v4666, %v3403
    %v4668 = vmax.f32 %v4667, %v3409
    %v4669 = vmax.f32 %v4668, %v3413
    %v4670 = vrot.slane %v4669, 4
    %v4671 = vmax.f32 %v4669, %v4670
    %v4672 = vrot.slane %v4671, 2
    %v4673 = vmax.f32 %v4671, %v4672
    %v4674 = vrot.slane %v4673, 1
    %v4675 = vmax.f32 %v4673, %v4674
    %v4676 = vmax.f32 %v3341, %v3345
    %v4677 = vmax.f32 %v4676, %v3351
    %v4678 = vmax.f32 %v4677, %v3355
    %v4679 = vmax.f32 %v4678, %v3361
    %v4680 = vmax.f32 %v4679, %v3365
    %v4681 = vmax.f32 %v4680, %v3371
    %v4682 = vmax.f32 %v4681, %v3375
    %v4683 = vmax.f32 %v4682, %v3381
    %v4684 = vmax.f32 %v4683, %v3385
    %v4685 = vmax.f32 %v4684, %v3391
    %v4686 = vmax.f32 %v4685, %v3395
    %v4687 = vmax.f32 %v4686, %v3401
    %v4688 = vmax.f32 %v4687, %v3405
    %v4689 = vmax.f32 %v4688, %v3411
    %v4690 = vmax.f32 %v4689, %v3415
    %v4691 = vrot.slane %v4690, 4
    %v4692 = vmax.f32 %v4690, %v4691
    %v4693 = vrot.slane %v4692, 2
    %v4694 = vmax.f32 %v4692, %v4693
    %v4695 = vrot.slane %v4694, 1
    %v4696 = vmax.f32 %v4694, %v4695
    %v4697 = vmax.f32 %v3725, %v3729
    %v4698 = vmax.f32 %v4697, %v3735
    %v4699 = vmax.f32 %v4698, %v3739
    %v4700 = vmax.f32 %v4699, %v3745
    %v4701 = vmax.f32 %v4700, %v3749
    %v4702 = vmax.f32 %v4701, %v3755
    %v4703 = vmax.f32 %v4702, %v3759
    %v4704 = vmax.f32 %v4703, %v3765
    %v4705 = vmax.f32 %v4704, %v3769
    %v4706 = vmax.f32 %v4705, %v3775
    %v4707 = vmax.f32 %v4706, %v3779
    %v4708 = vmax.f32 %v4707, %v3785
    %v4709 = vmax.f32 %v4708, %v3789
    %v4710 = vmax.f32 %v4709, %v3795
    %v4711 = vmax.f32 %v4710, %v3799
    %v4712 = vrot.slane %v4711, 4
    %v4713 = vmax.f32 %v4711, %v4712
    %v4714 = vrot.slane %v4713, 2
    %v4715 = vmax.f32 %v4713, %v4714
    %v4716 = vrot.slane %v4715, 1
    %v4717 = vmax.f32 %v4715, %v4716
    %v4718 = vmax.f32 %v3727, %v3731
    %v4719 = vmax.f32 %v4718, %v3737
    %v4720 = vmax.f32 %v4719, %v3741
    %v4721 = vmax.f32 %v4720, %v3747
    %v4722 = vmax.f32 %v4721, %v3751
    %v4723 = vmax.f32 %v4722, %v3757
    %v4724 = vmax.f32 %v4723, %v3761
    %v4725 = vmax.f32 %v4724, %v3767
    %v4726 = vmax.f32 %v4725, %v3771
    %v4727 = vmax.f32 %v4726, %v3777
    %v4728 = vmax.f32 %v4727, %v3781
    %v4729 = vmax.f32 %v4728, %v3787
    %v4730 = vmax.f32 %v4729, %v3791
    %v4731 = vmax.f32 %v4730, %v3797
    %v4732 = vmax.f32 %v4731, %v3801
    %v4733 = vrot.slane %v4732, 4
    %v4734 = vmax.f32 %v4732, %v4733
    %v4735 = vrot.slane %v4734, 2
    %v4736 = vmax.f32 %v4734, %v4735
    %v4737 = vrot.slane %v4736, 1
    %v4738 = vmax.f32 %v4736, %v4737
    %v4739 = vmax.f32 %v4111, %v4115
    %v4740 = vmax.f32 %v4739, %v4121
    %v4741 = vmax.f32 %v4740, %v4125
    %v4742 = vmax.f32 %v4741, %v4131
    %v4743 = vmax.f32 %v4742, %v4135
    %v4744 = vmax.f32 %v4743, %v4141
    %v4745 = vmax.f32 %v4744, %v4145
    %v4746 = vmax.f32 %v4745, %v4151
    %v4747 = vmax.f32 %v4746, %v4155
    %v4748 = vmax.f32 %v4747, %v4161
    %v4749 = vmax.f32 %v4748, %v4165
    %v4750 = vmax.f32 %v4749, %v4171
    %v4751 = vmax.f32 %v4750, %v4175
    %v4752 = vmax.f32 %v4751, %v4181
    %v4753 = vmax.f32 %v4752, %v4185
    %v4754 = vrot.slane %v4753, 4
    %v4755 = vmax.f32 %v4753, %v4754
    %v4756 = vrot.slane %v4755, 2
    %v4757 = vmax.f32 %v4755, %v4756
    %v4758 = vrot.slane %v4757, 1
    %v4759 = vmax.f32 %v4757, %v4758
    %v4760 = vmax.f32 %v4113, %v4117
    %v4761 = vmax.f32 %v4760, %v4123
    %v4762 = vmax.f32 %v4761, %v4127
    %v4763 = vmax.f32 %v4762, %v4133
    %v4764 = vmax.f32 %v4763, %v4137
    %v4765 = vmax.f32 %v4764, %v4143
    %v4766 = vmax.f32 %v4765, %v4147
    %v4767 = vmax.f32 %v4766, %v4153
    %v4768 = vmax.f32 %v4767, %v4157
    %v4769 = vmax.f32 %v4768, %v4163
    %v4770 = vmax.f32 %v4769, %v4167
    %v4771 = vmax.f32 %v4770, %v4173
    %v4772 = vmax.f32 %v4771, %v4177
    %v4773 = vmax.f32 %v4772, %v4183
    %v4774 = vmax.f32 %v4773, %v4187
    %v4775 = vrot.slane %v4774, 4
    %v4776 = vmax.f32 %v4774, %v4775
    %v4777 = vrot.slane %v4776, 2
    %v4778 = vmax.f32 %v4776, %v4777
    %v4779 = vrot.slane %v4778, 1
    %v4780 = vmax.f32 %v4778, %v4779
    %v4781 = vmax.f32 %v4497, %v4501
    %v4782 = vmax.f32 %v4781, %v4507
    %v4783 = vmax.f32 %v4782, %v4511
    %v4784 = vmax.f32 %v4783, %v4517
    %v4785 = vmax.f32 %v4784, %v4521
    %v4786 = vmax.f32 %v4785, %v4527
    %v4787 = vmax.f32 %v4786, %v4531
    %v4788 = vmax.f32 %v4787, %v4537
    %v4789 = vmax.f32 %v4788, %v4541
    %v4790 = vmax.f32 %v4789, %v4547
    %v4791 = vmax.f32 %v4790, %v4551
    %v4792 = vmax.f32 %v4791, %v4557
    %v4793 = vmax.f32 %v4792, %v4561
    %v4794 = vmax.f32 %v4793, %v4567
    %v4795 = vmax.f32 %v4794, %v4571
    %v4796 = vrot.slane %v4795, 4
    %v4797 = vmax.f32 %v4795, %v4796
    %v4798 = vrot.slane %v4797, 2
    %v4799 = vmax.f32 %v4797, %v4798
    %v4800 = vrot.slane %v4799, 1
    %v4801 = vmax.f32 %v4799, %v4800
    %v4802 = vmax.f32 %v4499, %v4503
    %v4803 = vmax.f32 %v4802, %v4509
    %v4804 = vmax.f32 %v4803, %v4513
    %v4805 = vmax.f32 %v4804, %v4519
    %v4806 = vmax.f32 %v4805, %v4523
    %v4807 = vmax.f32 %v4806, %v4529
    %v4808 = vmax.f32 %v4807, %v4533
    %v4809 = vmax.f32 %v4808, %v4539
    %v4810 = vmax.f32 %v4809, %v4543
    %v4811 = vmax.f32 %v4810, %v4549
    %v4812 = vmax.f32 %v4811, %v4553
    %v4813 = vmax.f32 %v4812, %v4559
    %v4814 = vmax.f32 %v4813, %v4563
    %v4815 = vmax.f32 %v4814, %v4569
    %v4816 = vmax.f32 %v4815, %v4573
    %v4817 = vrot.slane %v4816, 4
    %v4818 = vmax.f32 %v4816, %v4817
    %v4819 = vrot.slane %v4818, 2
    %v4820 = vmax.f32 %v4818, %v4819
    %v4821 = vrot.slane %v4820, 1
    %v4822 = vmax.f32 %v4820, %v4821
    %v4823 = vmax.f32 %v3419, %v3423
    %v4824 = vmax.f32 %v4823, %v3429
    %v4825 = vmax.f32 %v4824, %v3433
    %v4826 = vmax.f32 %v4825, %v3439
    %v4827 = vmax.f32 %v4826, %v3443
    %v4828 = vmax.f32 %v4827, %v3449
    %v4829 = vmax.f32 %v4828, %v3453
    %v4830 = vmax.f32 %v4829, %v3459
    %v4831 = vmax.f32 %v4830, %v3463
    %v4832 = vmax.f32 %v4831, %v3469
    %v4833 = vmax.f32 %v4832, %v3473
    %v4834 = vmax.f32 %v4833, %v3479
    %v4835 = vmax.f32 %v4834, %v3483
    %v4836 = vmax.f32 %v4835, %v3489
    %v4837 = vmax.f32 %v4836, %v3493
    %v4838 = vrot.slane %v4837, 4
    %v4839 = vmax.f32 %v4837, %v4838
    %v4840 = vrot.slane %v4839, 2
    %v4841 = vmax.f32 %v4839, %v4840
    %v4842 = vrot.slane %v4841, 1
    %v4843 = vmax.f32 %v4841, %v4842
    %v4844 = vmax.f32 %v3421, %v3425
    %v4845 = vmax.f32 %v4844, %v3431
    %v4846 = vmax.f32 %v4845, %v3435
    %v4847 = vmax.f32 %v4846, %v3441
    %v4848 = vmax.f32 %v4847, %v3445
    %v4849 = vmax.f32 %v4848, %v3451
    %v4850 = vmax.f32 %v4849, %v3455
    %v4851 = vmax.f32 %v4850, %v3461
    %v4852 = vmax.f32 %v4851, %v3465
    %v4853 = vmax.f32 %v4852, %v3471
    %v4854 = vmax.f32 %v4853, %v3475
    %v4855 = vmax.f32 %v4854, %v3481
    %v4856 = vmax.f32 %v4855, %v3485
    %v4857 = vmax.f32 %v4856, %v3491
    %v4858 = vmax.f32 %v4857, %v3495
    %v4859 = vrot.slane %v4858, 4
    %v4860 = vmax.f32 %v4858, %v4859
    %v4861 = vrot.slane %v4860, 2
    %v4862 = vmax.f32 %v4860, %v4861
    %v4863 = vrot.slane %v4862, 1
    %v4864 = vmax.f32 %v4862, %v4863
    %v4865 = vmax.f32 %v3805, %v3809
    %v4866 = vmax.f32 %v4865, %v3815
    %v4867 = vmax.f32 %v4866, %v3819
    %v4868 = vmax.f32 %v4867, %v3825
    %v4869 = vmax.f32 %v4868, %v3829
    %v4870 = vmax.f32 %v4869, %v3835
    %v4871 = vmax.f32 %v4870, %v3839
    %v4872 = vmax.f32 %v4871, %v3845
    %v4873 = vmax.f32 %v4872, %v3849
    %v4874 = vmax.f32 %v4873, %v3855
    %v4875 = vmax.f32 %v4874, %v3859
    %v4876 = vmax.f32 %v4875, %v3865
    %v4877 = vmax.f32 %v4876, %v3869
    %v4878 = vmax.f32 %v4877, %v3875
    %v4879 = vmax.f32 %v4878, %v3879
    %v4880 = vrot.slane %v4879, 4
    %v4881 = vmax.f32 %v4879, %v4880
    %v4882 = vrot.slane %v4881, 2
    %v4883 = vmax.f32 %v4881, %v4882
    %v4884 = vrot.slane %v4883, 1
    %v4885 = vmax.f32 %v4883, %v4884
    %v4886 = vmax.f32 %v3807, %v3811
    %v4887 = vmax.f32 %v4886, %v3817
    %v4888 = vmax.f32 %v4887, %v3821
    %v4889 = vmax.f32 %v4888, %v3827
    %v4890 = vmax.f32 %v4889, %v3831
    %v4891 = vmax.f32 %v4890, %v3837
    %v4892 = vmax.f32 %v4891, %v3841
    %v4893 = vmax.f32 %v4892, %v3847
    %v4894 = vmax.f32 %v4893, %v3851
    %v4895 = vmax.f32 %v4894, %v3857
    %v4896 = vmax.f32 %v4895, %v3861
    %v4897 = vmax.f32 %v4896, %v3867
    %v4898 = vmax.f32 %v4897, %v3871
    %v4899 = vmax.f32 %v4898, %v3877
    %v4900 = vmax.f32 %v4899, %v3881
    %v4901 = vrot.slane %v4900, 4
    %v4902 = vmax.f32 %v4900, %v4901
    %v4903 = vrot.slane %v4902, 2
    %v4904 = vmax.f32 %v4902, %v4903
    %v4905 = vrot.slane %v4904, 1
    %v4906 = vmax.f32 %v4904, %v4905
    %v4907 = vmax.f32 %v4191, %v4195
    %v4908 = vmax.f32 %v4907, %v4201
    %v4909 = vmax.f32 %v4908, %v4205
    %v4910 = vmax.f32 %v4909, %v4211
    %v4911 = vmax.f32 %v4910, %v4215
    %v4912 = vmax.f32 %v4911, %v4221
    %v4913 = vmax.f32 %v4912, %v4225
    %v4914 = vmax.f32 %v4913, %v4231
    %v4915 = vmax.f32 %v4914, %v4235
    %v4916 = vmax.f32 %v4915, %v4241
    %v4917 = vmax.f32 %v4916, %v4245
    %v4918 = vmax.f32 %v4917, %v4251
    %v4919 = vmax.f32 %v4918, %v4255
    %v4920 = vmax.f32 %v4919, %v4261
    %v4921 = vmax.f32 %v4920, %v4265
    %v4922 = vrot.slane %v4921, 4
    %v4923 = vmax.f32 %v4921, %v4922
    %v4924 = vrot.slane %v4923, 2
    %v4925 = vmax.f32 %v4923, %v4924
    %v4926 = vrot.slane %v4925, 1
    %v4927 = vmax.f32 %v4925, %v4926
    %v4928 = vmax.f32 %v4193, %v4197
    %v4929 = vmax.f32 %v4928, %v4203
    %v4930 = vmax.f32 %v4929, %v4207
    %v4931 = vmax.f32 %v4930, %v4213
    %v4932 = vmax.f32 %v4931, %v4217
    %v4933 = vmax.f32 %v4932, %v4223
    %v4934 = vmax.f32 %v4933, %v4227
    %v4935 = vmax.f32 %v4934, %v4233
    %v4936 = vmax.f32 %v4935, %v4237
    %v4937 = vmax.f32 %v4936, %v4243
    %v4938 = vmax.f32 %v4937, %v4247
    %v4939 = vmax.f32 %v4938, %v4253
    %v4940 = vmax.f32 %v4939, %v4257
    %v4941 = vmax.f32 %v4940, %v4263
    %v4942 = vmax.f32 %v4941, %v4267
    %v4943 = vrot.slane %v4942, 4
    %v4944 = vmax.f32 %v4942, %v4943
    %v4945 = vrot.slane %v4944, 2
    %v4946 = vmax.f32 %v4944, %v4945
    %v4947 = vrot.slane %v4946, 1
    %v4948 = vmax.f32 %v4946, %v4947
    %v4949 = vmax.f32 %v4577, %v4581
    %v4950 = vmax.f32 %v4949, %v4587
    %v4951 = vmax.f32 %v4950, %v4591
    %v4952 = vmax.f32 %v4951, %v4597
    %v4953 = vmax.f32 %v4952, %v4601
    %v4954 = vmax.f32 %v4953, %v4607
    %v4955 = vmax.f32 %v4954, %v4611
    %v4956 = vmax.f32 %v4955, %v4617
    %v4957 = vmax.f32 %v4956, %v4621
    %v4958 = vmax.f32 %v4957, %v4627
    %v4959 = vmax.f32 %v4958, %v4631
    %v4960 = vmax.f32 %v4959, %v4637
    %v4961 = vmax.f32 %v4960, %v4641
    %v4962 = vmax.f32 %v4961, %v4647
    %v4963 = vmax.f32 %v4962, %v4651
    %v4964 = vrot.slane %v4963, 4
    %v4965 = vmax.f32 %v4963, %v4964
    %v4966 = vrot.slane %v4965, 2
    %v4967 = vmax.f32 %v4965, %v4966
    %v4968 = vrot.slane %v4967, 1
    %v4969 = vmax.f32 %v4967, %v4968
    %v4970 = vmax.f32 %v4579, %v4583
    %v4971 = vmax.f32 %v4970, %v4589
    %v4972 = vmax.f32 %v4971, %v4593
    %v4973 = vmax.f32 %v4972, %v4599
    %v4974 = vmax.f32 %v4973, %v4603
    %v4975 = vmax.f32 %v4974, %v4609
    %v4976 = vmax.f32 %v4975, %v4613
    %v4977 = vmax.f32 %v4976, %v4619
    %v4978 = vmax.f32 %v4977, %v4623
    %v4979 = vmax.f32 %v4978, %v4629
    %v4980 = vmax.f32 %v4979, %v4633
    %v4981 = vmax.f32 %v4980, %v4639
    %v4982 = vmax.f32 %v4981, %v4643
    %v4983 = vmax.f32 %v4982, %v4649
    %v4984 = vmax.f32 %v4983, %v4653
    %v4985 = vrot.slane %v4984, 4
    %v4986 = vmax.f32 %v4984, %v4985
    %v4987 = vrot.slane %v4986, 2
    %v4988 = vmax.f32 %v4986, %v4987
    %v4989 = vrot.slane %v4988, 1
    %v4990 = vmax.f32 %v4988, %v4989
    %v4991 = vld [vmem:[#allocation16] sm:$0xff]
    %v4992 = vld [vmem:[#allocation16 + $0x8] sm:$0xff]
    %v5009 = vcombine.low %v4675, %v4696
    %v5010 = vcombine.low %v4717, %v4738
    %v5012 = vunpack.c.l.s4 1983009808
    %v5013 = vunpack.c.0.s8 %v5012
    %v5014 = vlaneseq
    %v5015 = vshrl.u32 %v5014, 7
    %v5016 = vsub.s32 %v5013, %v5015
    %v5017 = vrot.slane %v5009, %v5016
    %v5019 = vunpack.c.l.s4 1983009808
    %v5020 = vunpack.c.0.s8 %v5019
    %v5021 = vlaneseq
    %v5022 = vshrl.u32 %v5021, 7
    %v5023 = vsub.s32 %v5020, %v5022
    %v5024 = vrot.slane %v5010, %v5023
    %v5025 = vcombine.low %v5017, %v5024
    %v5026 = vcombine.low %v4759, %v4780
    %v5027 = vcombine.low %v4801, %v4822
    %v5029 = vunpack.c.l.s4 1983009808
    %v5030 = vunpack.c.0.s8 %v5029
    %v5031 = vlaneseq
    %v5032 = vshrl.u32 %v5031, 7
    %v5033 = vsub.s32 %v5030, %v5032
    %v5034 = vrot.slane %v5026, %v5033
    %v5036 = vunpack.c.l.s4 1983009808
    %v5037 = vunpack.c.0.s8 %v5036
    %v5038 = vlaneseq
    %v5039 = vshrl.u32 %v5038, 7
    %v5040 = vsub.s32 %v5037, %v5039
    %v5041 = vrot.slane %v5027, %v5040
    %v5042 = vcombine.low %v5034, %v5041
    %v5043 = vcombine.low %v4843, %v4864
    %v5044 = vcombine.low %v4885, %v4906
    %v5046 = vunpack.c.l.s4 1983009808
    %v5047 = vunpack.c.0.s8 %v5046
    %v5048 = vlaneseq
    %v5049 = vshrl.u32 %v5048, 7
    %v5050 = vsub.s32 %v5047, %v5049
    %v5051 = vrot.slane %v5043, %v5050
    %v5053 = vunpack.c.l.s4 1983009808
    %v5054 = vunpack.c.0.s8 %v5053
    %v5055 = vlaneseq
    %v5056 = vshrl.u32 %v5055, 7
    %v5057 = vsub.s32 %v5054, %v5056
    %v5058 = vrot.slane %v5044, %v5057
    %v5059 = vcombine.low %v5051, %v5058
    %v5060 = vcombine.low %v4927, %v4948
    %v5061 = vcombine.low %v4969, %v4990
    %v5063 = vunpack.c.l.s4 1983009808
    %v5064 = vunpack.c.0.s8 %v5063
    %v5065 = vlaneseq
    %v5066 = vshrl.u32 %v5065, 7
    %v5067 = vsub.s32 %v5064, %v5066
    %v5068 = vrot.slane %v5060, %v5067
    %v5070 = vunpack.c.l.s4 1983009808
    %v5071 = vunpack.c.0.s8 %v5070
    %v5072 = vlaneseq
    %v5073 = vshrl.u32 %v5072, 7
    %v5074 = vsub.s32 %v5071, %v5073
    %v5075 = vrot.slane %v5061, %v5074
    %v5076 = vcombine.low %v5068, %v5075
    %vm5077 = vcmask 1044484
    %v5078 = vsel %vm5077, %v5025, %v5025
    %vm5079 = vcmask 1046534
    %v5080 = vsel %vm5079, %v5025, %v5078
    %v5081 = vrot.slane %v5059, 7
    %vm5082 = vcmask 1041409
    %v5083 = vsel %vm5082, %v5081, %v5080
    %vm5084 = vcmask 1043459
    %v5085 = vsel %vm5084, %v5081, %v5083
    %vm5086 = vcmask 1045509
    %v5087 = vsel %vm5086, %v5081, %v5085
    %vm5088 = vcmask 1047559
    %v5089 = vsel %vm5088, %v5081, %v5087
    %v5090 = vsel %vm5077, %v5042, %v5042
    %v5091 = vsel %vm5079, %v5042, %v5090
    %v5092 = vrot.slane %v5076, 7
    %v5093 = vsel %vm5082, %v5092, %v5091
    %v5094 = vsel %vm5084, %v5092, %v5093
    %v5095 = vsel %vm5086, %v5092, %v5094
    %v5096 = vsel %vm5088, %v5092, %v5095
    %v5099 = vmax.f32 %v4991, %v5089
    %v5100 = vmax.f32 %v4992, %v5096
    %5101 = vst [vmem:[#allocation16] sm:$0xff] %v5099
    %5102 = vst [vmem:[#allocation16 + $0x8] sm:$0xff] %v5100
    // Predicated region
    $region70: #{tpu_custom_call.1} parent=1 // pred_check
      _
    $region71: #{tpu_custom_call.1} parent=1 // pred_check_branch
      %5104 = sbr.rel (0) target = $region73
    $region72: #{tpu_custom_call.1} parent=1 // pred_region
      %s5106 = ssub.s32 256, 256
      %5107 = vsyncadd [#allocation4], %s5106
      %s5109 = sshll.u32 [#allocation16], 4
      %s5110 = int_to_ptr.vmem [resolvable:$true] %s5109
      %5112 = dma.vmem_to_hbm [thread:$0]  %s5110, 256, %s8, [#allocation4]
    $region73: #{tpu_custom_call.1} parent=1 // pred_fallthru
      _
    // Predicated region
    $region74: #{tpu_custom_call.1} parent=1 // pred_check
      _
    $region75: #{tpu_custom_call.1} parent=1 // pred_check_branch
      %5114 = sbr.rel (0) target = $region77
    $region76: #{tpu_custom_call.1} parent=1 // pred_region
      %5115 = dma.done [#allocation4], 256
    $region77: #{tpu_custom_call.1} parent=1 // pred_fallthru
      _
    %5116 = vsyncpa [#allocation3], 1
    %5117 = vsyncpa [#allocation6], 1
    %5118 = vsyncpa [#allocation9], 1
    %5119 = vsyncpa [#allocation12], 1
    %5120 = vsyncpa [#allocation15], 1
    %5121 = vsyncpa [#allocation4], 1

</llo_original>
